<compile_context>
chip_gen: v7x
topology: tpu7x:2x2x1
jax: 0.10.0
libtpu: 0.0.40
codegen_flags: <defaults>
</compile_context>

<pallas_src>
import jax
import jax.numpy as jnp
from jax.experimental import pallas as pl
from jax.experimental.pallas import tpu as pltpu

IMAGE_SIZE = 32          # scaled-down stand-in for 200
NEG_SLOPE = 0.01         # F.leaky_relu default
BN_EPS = 1e-5            # nn.BatchNorm2d default
UPSCALE = 8.0            # F.interpolate scale_factor


# ----------------------------- small helpers -----------------------------

def _pick_tile(n, target):
    """Largest divisor of n that is <= target and a multiple of 8 (or n itself)."""
    for cand in range(min(n, target), 0, -1):
        if n % cand == 0 and (cand % 8 == 0 or cand == n):
            return cand
    return n


def _vmem_limit(*nbytes):
    """Per-call VMEM budget from actual buffer sizes (double-buffered) + slack, v7x-safe cap."""
    need = 2 * sum(int(b) for b in nbytes) + (8 << 20)
    return int(min(max(need, 16 << 20), 48 << 20))


# ----------------------------- Pallas kernels -----------------------------

def conv_patches_stats_kernel(p_ref, w_ref, y_ref, st_ref):
    """conv1 tile: y = patches @ W (single full-depth matmul) + fused per-tile BN partials."""
    y = jnp.dot(p_ref[...], w_ref[...], preferred_element_type=jnp.float32)
    y_ref[...] = y.astype(y_ref.dtype)
    s = jnp.sum(y, axis=0, keepdims=True)
    ss = jnp.sum(y * y, axis=0, keepdims=True)
    st_ref[...] = jnp.concatenate([s, ss], axis=0)[None]


def make_conv_phase_stats_kernel(K, S, OH, OW, cin):
    """conv2/conv3: in-kernel patch-slab assembly from the phase-decomposed input
    (tap copies paid exactly once), ONE matmul with K = kh*kw*cin, fused BN partials."""
    M = OH * OW

    def kernel(x_ref, w_ref, y_ref, st_ref):
        # x_ref: (1, S*S, Hq, Wq, cin) bf16 with x[n, rh*S+rw, qh, qw, c] = xpad[n, qh*S+rh, qw*S+rw, c]
        cols = []
        for ki in range(K):
            qh = ki // S
            for kj in range(K):
                qw = kj // S
                p = (ki % S) * S + (kj % S)
                # static, contiguous window slice (stride handled by the phase layout)
                cols.append(x_ref[0, p, qh:qh + OH, qw:qw + OW, :])      # (OH, OW, cin)
        slab = jnp.concatenate(cols, axis=-1).reshape(M, K * K * cin)    # single reshape
        y = jnp.dot(slab, w_ref[...], preferred_element_type=jnp.float32)   # (M, cout) f32
        y_ref[...] = y[None].astype(y_ref.dtype)
        s = jnp.sum(y, axis=0, keepdims=True)
        ss = jnp.sum(y * y, axis=0, keepdims=True)
        st_ref[...] = jnp.concatenate([s, ss], axis=0)[None]

    return kernel


def bn_lrelu_kernel(y_ref, sc_ref, sh_ref, o_ref):
    """Elementwise BN affine + leaky_relu on a lane-dense (rows, 128) view."""
    z = y_ref[...].astype(jnp.float32) * sc_ref[...] + sh_ref[...]
    z = jnp.where(z >= 0.0, z, NEG_SLOPE * z)
    o_ref[...] = z.astype(o_ref.dtype)


def make_head_kernel(K, IH, IW, OH, OW, cin):
    """conv4 (Cout=1, bias=False) + leaky_relu + bilinear x8 + softmax, per batch element."""

    def kernel(x_ref, w4_ref, wh_ref, wwT_ref, o_ref):
        # x: (1, IH+2, IW+2, cin) bf16; w4: (1, 1, K*K*cin) f32; wh: (OH, IH); wwT: (IW, OW)
        cols = [x_ref[0, ki:ki + IH, kj:kj + IW, :]
                for ki in range(K) for kj in range(K)]
        slab = jnp.concatenate(cols, axis=-1).astype(jnp.float32)        # (IH, IW, K*K*cin)
        y4 = jnp.sum(slab * w4_ref[...], axis=-1)                        # single contraction
        y4 = jnp.where(y4 >= 0.0, y4, NEG_SLOPE * y4)                    # leaky_relu(conv4)
        # bilinear x8: lane-dense (IH, OW) intermediate, then (OH, OW)
        t = jnp.dot(y4, wwT_ref[...], preferred_element_type=jnp.float32)    # (IH, OW)
        z = jnp.dot(wh_ref[...], t, preferred_element_type=jnp.float32)      # (OH, OW)
        # softmax over the whole (OH, OW) map, exact normalization
        zmax = jnp.max(z, keepdims=True)
        e = jnp.exp(z - zmax)
        s = jnp.sum(e, keepdims=True)
        o_ref[...] = (e * pl.reciprocal(s, approx=False))[None]

    return kernel


# ----------------------------- Pallas wrappers -----------------------------

def _bn_lrelu_apply(y_flat, stats, gamma, beta, count):
    """Cross-tile BN reduction (tiny, wrapper-side) + lane-dense normalize/lrelu kernel."""
    cout = y_flat.shape[1]
    s = jnp.sum(stats[:, 0, :], axis=0)
    ss = jnp.sum(stats[:, 1, :], axis=0)
    mean = s / count
    var = jnp.maximum(ss / count - mean * mean, 0.0)          # E[x^2] - E[x]^2
    scale = gamma.reshape(-1) * jax.lax.rsqrt(var + BN_EPS)
    shift = beta.reshape(-1) - mean * scale

    M = y_flat.shape[0]
    pack = 2 if M % 2 == 0 else 1
    R, L = M // pack, cout * pack                             # lane-dense (rows, 128) view
    y2 = y_flat.reshape(R, L)
    sc = jnp.tile(scale, pack).reshape(1, L).astype(jnp.float32)
    sh = jnp.tile(shift, pack).reshape(1, L).astype(jnp.float32)
    tr = _pick_tile(R, 512)
    out = pl.pallas_call(
        bn_lrelu_kernel,
        out_shape=jax.ShapeDtypeStruct((R, L), jnp.bfloat16),
        grid=(R // tr,),
        in_specs=[pl.BlockSpec((tr, L), lambda r: (r, 0)),
                  pl.BlockSpec((1, L), lambda r: (0, 0)),
                  pl.BlockSpec((1, L), lambda r: (0, 0))],
        out_specs=pl.BlockSpec((tr, L), lambda r: (r, 0)),
        compiler_params=pltpu.CompilerParams(
            dimension_semantics=("parallel",),
            vmem_limit_bytes=_vmem_limit(tr * L * 2, L * 4, L * 4, tr * L * 2)),
    )(y2, sc, sh)
    return out.reshape(M, cout)


def conv1_bn_lrelu(x, w1, gamma, beta):
    # Cin=6: wrapper-side im2col is ~1.6x duplication (stride 4) and yields a lane-dense
    # K=150 contraction; the matmul+BN-partials kernel is gridded over M row tiles.
    N = x.shape[0]
    patches, OH, OW = im2col(x, 5, 5, 4, 2)                   # (M, 150) bf16
    M, Kdim = patches.shape
    cout = w1.shape[1]
    tm = _pick_tile(M, 512)
    G = M // tm
    y, stats = pl.pallas_call(
        conv_patches_stats_kernel,
        out_shape=(jax.ShapeDtypeStruct((M, cout), jnp.bfloat16),
                   jax.ShapeDtypeStruct((G, 2, cout), jnp.float32)),
        grid=(G,),
        in_specs=[pl.BlockSpec((tm, Kdim), lambda g: (g, 0)),
                  pl.BlockSpec((Kdim, cout), lambda g: (0, 0))],
        out_specs=(pl.BlockSpec((tm, cout), lambda g: (g, 0)),
                   pl.BlockSpec((1, 2, cout), lambda g: (g, 0, 0))),
        compiler_params=pltpu.CompilerParams(
            dimension_semantics=("parallel",),
            vmem_limit_bytes=_vmem_limit(tm * Kdim * 2, Kdim * cout * 2,
                                         tm * cout * 2 + tm * cout * 4, 2 * cout * 4)),
    )(patches, w1)
    yn = _bn_lrelu_apply(y, stats, gamma, beta, float(M))
    return yn.reshape(N, OH, OW, cout)


def conv_phase_bn_lrelu(x, w_kk, gamma, beta, K, S, pad):
    # Zero-duplication in-kernel im2col: the padded activation is phase-decomposed in the
    # wrapper (layout only).  Stride-1 convs skip the transpose entirely.
    N, H, W, C = x.shape
    OH = (H + 2 * pad - K) // S + 1
    OW = (W + 2 * pad - K) // S + 1
    Hp, Wp = H + 2 * pad, W + 2 * pad
    Hq, Wq = -(-Hp // S), -(-Wp // S)
    xp = jnp.pad(x, ((0, 0), (pad, pad + Hq * S - Hp), (pad, pad + Wq * S - Wp), (0, 0)))
    if S == 1:
        xph = xp[:, None]                                     # (N, 1, Hp, Wp, C) — no relayout
    else:
        xph = (xp.reshape(N, Hq, S, Wq, S, C)
                 .transpose(0, 2, 4, 1, 3, 5)
                 .reshape(N, S * S, Hq, Wq, C))
    cout = w_kk.shape[-1]
    wf = w_kk.reshape(K * K * C, cout)                        # matches slab column order
    Mn = OH * OW
    kernel = make_conv_phase_stats_kernel(K, S, OH, OW, C)
    # Grid over batch ('parallel' -> dual TensorCore on v7x).  At IMAGE_SIZE=200 with large
    # batch the per-sample block is still only ~0.4 MB, so batch gridding suffices; output-row
    # tiling would be added the same way if activations grew beyond VMEM.
    y, stats = pl.pallas_call(
        kernel,
        out_shape=(jax.ShapeDtypeStruct((N, Mn, cout), jnp.bfloat16),
                   jax.ShapeDtypeStruct((N, 2, cout), jnp.float32)),
        grid=(N,),
        in_specs=[pl.BlockSpec((1, S * S, Hq, Wq, C), lambda n: (n, 0, 0, 0, 0)),
                  pl.BlockSpec((K * K * C, cout), lambda n: (0, 0))],
        out_specs=(pl.BlockSpec((1, Mn, cout), lambda n: (n, 0, 0)),
                   pl.BlockSpec((1, 2, cout), lambda n: (n, 0, 0))),
        compiler_params=pltpu.CompilerParams(
            dimension_semantics=("parallel",),
            vmem_limit_bytes=_vmem_limit(S * S * Hq * Wq * C * 2, K * K * C * cout * 2,
                                         Mn * cout * 2 + Mn * cout * 4, 2 * cout * 4,
                                         2 * Mn * K * K * C * 2)),
    )(xph, wf)
    yn = _bn_lrelu_apply(y.reshape(N * Mn, cout), stats, gamma, beta, float(N * Mn))
    return yn.reshape(N, OH, OW, cout)


def conv4_interp_softmax(x, w4, wh, wwT):
    # x: (N, IH, IW, C) bf16 (post bn3+lrelu), w4: (3*3, C) f32, wh: (OH, IH), wwT: (IW, OW)
    N, IH, IW, C = x.shape
    OH, OW = wh.shape[0], wwT.shape[1]
    K = 3
    xp = jnp.pad(x, ((0, 0), (1, 1), (1, 1), (0, 0)))         # zero-pad the post-activation map
    w4b = w4.reshape(1, 1, K * K * C).astype(jnp.float32)
    kernel = make_head_kernel(K, IH, IW, OH, OW, C)
    return pl.pallas_call(
        kernel,
        out_shape=jax.ShapeDtypeStruct((N, OH, OW), jnp.float32),
        grid=(N,),
        in_specs=[
            pl.BlockSpec((1, IH + 2, IW + 2, C), lambda b: (b, 0, 0, 0)),
            pl.BlockSpec((1, 1, K * K * C), lambda b: (0, 0, 0)),
            pl.BlockSpec((OH, IH), lambda b: (0, 0)),
            pl.BlockSpec((IW, OW), lambda b: (0, 0)),
        ],
        out_specs=pl.BlockSpec((1, OH, OW), lambda b: (b, 0, 0)),
        compiler_params=pltpu.CompilerParams(
            dimension_semantics=("parallel",),      # batch across v7x's 2 TensorCores
            vmem_limit_bytes=_vmem_limit((IH + 2) * (IW + 2) * C * 2, K * K * C * 4,
                                         OH * IH * 4, IW * OW * 4, OH * OW * 4,
                                         IH * IW * K * K * C * 4)),
    )(xp, w4b, wh, wwT)


# ----------------------------- plain-JAX glue -----------------------------

def im2col(x_nhwc, kh, kw, stride, pad):
    """Extract conv patches; column order (kh, kw, cin) matches the weight layout."""
    N, H, W, C = x_nhwc.shape
    xp = jnp.pad(x_nhwc, ((0, 0), (pad, pad), (pad, pad), (0, 0)))
    OH = (H + 2 * pad - kh) // stride + 1
    OW = (W + 2 * pad - kw) // stride + 1
    cols = [xp[:, i:i + stride * OH:stride, j:j + stride * OW:stride, :]
            for i in range(kh) for j in range(kw)]
    patches = jnp.concatenate(cols, axis=-1)                  # (N, OH, OW, kh*kw*C)
    return patches.reshape(N * OH * OW, kh * kw * C), OH, OW


def bilinear_matrix(in_size, scale):
    """Dense (out, in) matrix equal to F.interpolate(mode='bilinear', align_corners=False)."""
    out_size = int(in_size * scale)
    dst = jnp.arange(out_size, dtype=jnp.float32)
    src = jnp.maximum((dst + 0.5) / scale - 0.5, 0.0)
    i0 = jnp.minimum(jnp.floor(src).astype(jnp.int32), in_size - 1)
    i1 = jnp.minimum(i0 + 1, in_size - 1)
    w1 = src - i0.astype(jnp.float32)
    w0 = 1.0 - w1
    W = jnp.zeros((out_size, in_size), jnp.float32)
    W = W.at[jnp.arange(out_size), i0].add(w0)
    W = W.at[jnp.arange(out_size), i1].add(w1)
    return W


def init_params(key):
    """Deterministic synthetic parameters (f32 master copies, cast to bf16 at use)."""
    ks = jax.random.split(key, 10)

    def bn_p(k, c):
        kg, kb = jax.random.split(k)
        g = (1.0 + 0.1 * jax.random.normal(kg, (1, c))).astype(jnp.float32)
        b = (0.1 * jax.random.normal(kb, (1, c))).astype(jnp.float32)
        return g, b

    g1, b1 = bn_p(ks[4], 64)
    g2, b2 = bn_p(ks[5], 64)
    g3, b3 = bn_p(ks[6], 64)
    return dict(
        w1=(0.1 * jax.random.normal(ks[0], (5 * 5 * 6, 64))).astype(jnp.float32),
        w2=(0.1 * jax.random.normal(ks[1], (5 * 5, 64, 64))).astype(jnp.float32),
        w3=(0.1 * jax.random.normal(ks[2], (3 * 3, 64, 64))).astype(jnp.float32),
        w4=(0.1 * jax.random.normal(ks[3], (3 * 3, 64))).astype(jnp.float32),
        g1=g1, b1=b1, g2=g2, b2=b2, g3=g3, b3=b3,
    )


# ----------------------------- forward -----------------------------

def basic_block_forward(x_nchw, params):
    # I/O is NCHW (PyTorch); internal compute is NHWC with bf16 activations, f32 accumulation.
    x = jnp.transpose(x_nchw, (0, 2, 3, 1)).astype(jnp.bfloat16)
    N = x.shape[0]
    bf = lambda a: a.astype(jnp.bfloat16)

    out = conv1_bn_lrelu(x, bf(params["w1"]), params["g1"], params["b1"])
    out = conv_phase_bn_lrelu(out, bf(params["w2"]), params["g2"], params["b2"], K=5, S=2, pad=2)
    out = conv_phase_bn_lrelu(out, bf(params["w3"]), params["g3"], params["b3"], K=3, S=1, pad=1)

    wh = bilinear_matrix(out.shape[1], UPSCALE)               # (OH, IH)
    ww = bilinear_matrix(out.shape[2], UPSCALE)               # (OW, IW)
    out = conv4_interp_softmax(out, params["w4"], wh, ww.T)   # (N, OH, OW), softmax per map

    d = out.shape[1]
    return out.reshape(N, 1, d, d)


if __name__ == "__main__":
    key = jax.random.PRNGKey(0)
    kx, kp = jax.random.split(key)
    x = jax.random.normal(kx, (2, 6, IMAGE_SIZE, IMAGE_SIZE), dtype=jnp.float32)
    params = init_params(kp)

    out = jax.jit(basic_block_forward)(x, params)
    out = jax.block_until_ready(out)

    assert out.shape == (2, 1, IMAGE_SIZE, IMAGE_SIZE), out.shape
    # softmax over the d*d map must sum to 1 per batch element
    sums = jnp.sum(out.reshape(2, -1), axis=-1)
    assert bool(jnp.all(jnp.abs(sums - 1.0) < 1e-3)), sums
    print("KERNEL_OK")
</pallas_src>

<mosaic_0001>
module attributes {stable_mosaic.version = 11 : i64} {
  func.func private @main(%arg0: i32) attributes {dimension_semantics = [#tpu.dimension_semantics<core_parallel>], iteration_bounds = array<i64: 2>, tpu.core_type = #tpu.core_type<sc_scalar_subcore>, window_params = []} {
    return
  }
}

module attributes {stable_mosaic.version = 11 : i64} {
  func.func private @main(%arg0: i32) attributes {dimension_semantics = [#tpu.dimension_semantics<core_parallel>], iteration_bounds = array<i64: 2>, tpu.core_type = #tpu.core_type<sc_scalar_subcore>, window_params = []} {
    return
  }
}

module attributes {stable_mosaic.version = 11 : i64} {
  func.func @conv_patches_stats_kernel(%arg0: i32, %arg1: memref<128x150xbf16, #tpu.memory_space<vmem>>, %arg2: memref<150x64xbf16, #tpu.memory_space<vmem>>, %arg3: memref<128x64xbf16, #tpu.memory_space<vmem>>, %arg4: memref<1x2x64xf32, #tpu.memory_space<vmem>>) attributes {dimension_semantics = [#tpu.dimension_semantics<parallel>], iteration_bounds = array<i64: 1>, scalar_prefetch = 0 : i64, scratch_operands = 0 : i64, tpu.core_type = #tpu.core_type<tc>, window_params = [{transform_indices = @transform_0, window_bounds = array<i64: 128, 150>}, {pipeline_mode = #tpu.pipeline_mode<synchronous>, transform_indices = @transform_1, window_bounds = array<i64: 150, 64>}, {transform_indices = @transform_2, window_bounds = array<i64: 128, 64>}, {transform_indices = @transform_3, window_bounds = array<i64: 1, 2, 64>}]} {
    %c0 = arith.constant 0 : index
    %c0_0 = arith.constant 0 : index
    %0 = vector.load %arg1[%c0, %c0_0] : memref<128x150xbf16, #tpu.memory_space<vmem>>, vector<128x150xbf16>
    %c0_1 = arith.constant 0 : index
    %c0_2 = arith.constant 0 : index
    %1 = vector.load %arg2[%c0_1, %c0_2] : memref<150x64xbf16, #tpu.memory_space<vmem>>, vector<150x64xbf16>
    %cst = arith.constant dense<0.000000e+00> : vector<128x64xf32>
    %2 = tpu.matmul %0, %1, %cst {dimension_numbers = #tpu.dot_dimension_numbers<[1], [0], [0], [1], [0, 0, 1, 1], [], []>} : vector<128x150xbf16>, vector<150x64xbf16>, vector<128x64xf32> -> vector<128x64xf32>
    %3 = arith.truncf %2 : vector<128x64xf32> to vector<128x64xbf16>
    %c0_3 = arith.constant 0 : index
    %c0_4 = arith.constant 0 : index
    %4 = vector.load %arg3[%c0_3, %c0_4] : memref<128x64xbf16, #tpu.memory_space<vmem>>, vector<128x64xbf16>
    tpu.vector_store %arg3[%c0_3, %c0_4], %3 {strides = array<i32>} : memref<128x64xbf16, #tpu.memory_space<vmem>>, vector<128x64xbf16>,
    %cst_5 = arith.constant dense<0.000000e+00> : vector<64xf32>
    %5 = vector.multi_reduction <add>, %2, %cst_5 [0] : vector<128x64xf32> to vector<64xf32>
    %6 = vector.shape_cast %5 : vector<64xf32> to vector<1x64xf32>
    %7 = arith.mulf %2, %2 : vector<128x64xf32>
    %cst_6 = arith.constant dense<0.000000e+00> : vector<64xf32>
    %8 = vector.multi_reduction <add>, %7, %cst_6 [0] : vector<128x64xf32> to vector<64xf32>
    %9 = vector.shape_cast %8 : vector<64xf32> to vector<1x64xf32>
    %10 = tpu.concatenate %6, %9 in 0 : vector<1x64xf32>, vector<1x64xf32> -> vector<2x64xf32>
    %11 = vector.shape_cast %10 : vector<2x64xf32> to vector<1x2x64xf32>
    %c0_7 = arith.constant 0 : index
    %c0_8 = arith.constant 0 : index
    %c0_9 = arith.constant 0 : index
    %12 = vector.load %arg4[%c0_7, %c0_8, %c0_9] : memref<1x2x64xf32, #tpu.memory_space<vmem>>, vector<1x2x64xf32>
    tpu.vector_store %arg4[%c0_7, %c0_8, %c0_9], %11 {strides = array<i32>} : memref<1x2x64xf32, #tpu.memory_space<vmem>>, vector<1x2x64xf32>,
    return
  }
  func.func @transform_0(%arg0: i32) -> (i32, i32) {
    %c0_i32 = arith.constant 0 : i32
    %c0_i32_0 = arith.constant 0 : i32
    return %arg0, %c0_i32 : i32, i32
  }
  func.func @transform_1(%arg0: i32) -> (i32, i32) {
    %c0_i32 = arith.constant 0 : i32
    %c0_i32_0 = arith.constant 0 : i32
    %c0_i32_1 = arith.constant 0 : i32
    return %c0_i32, %c0_i32_0 : i32, i32
  }
  func.func @transform_2(%arg0: i32) -> (i32, i32) {
    %c0_i32 = arith.constant 0 : i32
    %c0_i32_0 = arith.constant 0 : i32
    return %arg0, %c0_i32 : i32, i32
  }
  func.func @transform_3(%arg0: i32) -> (i32, i32, i32) {
    %c0_i32 = arith.constant 0 : i32
    %c0_i32_0 = arith.constant 0 : i32
    %c0_i32_1 = arith.constant 0 : i32
    return %arg0, %c0_i32, %c0_i32_0 : i32, i32, i32
  }
}

module attributes {stable_mosaic.version = 11 : i64} {
  func.func @bn_lrelu_kernel(%arg0: i32, %arg1: memref<64x128xbf16, #tpu.memory_space<vmem>>, %arg2: memref<1x128xf32, #tpu.memory_space<vmem>>, %arg3: memref<1x128xf32, #tpu.memory_space<vmem>>, %arg4: memref<64x128xbf16, #tpu.memory_space<vmem>>) attributes {dimension_semantics = [#tpu.dimension_semantics<parallel>], iteration_bounds = array<i64: 1>, scalar_prefetch = 0 : i64, scratch_operands = 0 : i64, tpu.core_type = #tpu.core_type<tc>, window_params = [{transform_indices = @transform_0, window_bounds = array<i64: 64, 128>}, {pipeline_mode = #tpu.pipeline_mode<synchronous>, transform_indices = @transform_1, window_bounds = array<i64: 1, 128>}, {pipeline_mode = #tpu.pipeline_mode<synchronous>, transform_indices = @transform_2, window_bounds = array<i64: 1, 128>}, {transform_indices = @transform_3, window_bounds = array<i64: 64, 128>}]} {
    %c0 = arith.constant 0 : index
    %c0_0 = arith.constant 0 : index
    %0 = vector.load %arg1[%c0, %c0_0] : memref<64x128xbf16, #tpu.memory_space<vmem>>, vector<64x128xbf16>
    %1 = arith.extf %0 : vector<64x128xbf16> to vector<64x128xf32>
    %c0_1 = arith.constant 0 : index
    %c0_2 = arith.constant 0 : index
    %2 = vector.load %arg2[%c0_1, %c0_2] : memref<1x128xf32, #tpu.memory_space<vmem>>, vector<1x128xf32>
    %3 = vector.broadcast %2 : vector<1x128xf32> to vector<64x128xf32>
    %4 = arith.mulf %1, %3 : vector<64x128xf32>
    %c0_3 = arith.constant 0 : index
    %c0_4 = arith.constant 0 : index
    %5 = vector.load %arg3[%c0_3, %c0_4] : memref<1x128xf32, #tpu.memory_space<vmem>>, vector<1x128xf32>
    %6 = vector.broadcast %5 : vector<1x128xf32> to vector<64x128xf32>
    %7 = arith.addf %4, %6 : vector<64x128xf32>
    %cst = arith.constant 0.000000e+00 : f32
    %8 = vector.broadcast %cst : f32 to vector<64x128xf32>
    %9 = arith.cmpf oge, %7, %8 : vector<64x128xf32>
    %cst_5 = arith.constant 0.00999999977 : f32
    %10 = vector.broadcast %cst_5 : f32 to vector<64x128xf32>
    %11 = arith.mulf %10, %7 : vector<64x128xf32>
    %12 = arith.select %9, %7, %11 : vector<64x128xi1>, vector<64x128xf32>
    %13 = arith.truncf %12 : vector<64x128xf32> to vector<64x128xbf16>
    %c0_6 = arith.constant 0 : index
    %c0_7 = arith.constant 0 : index
    %14 = vector.load %arg4[%c0_6, %c0_7] : memref<64x128xbf16, #tpu.memory_space<vmem>>, vector<64x128xbf16>
    tpu.vector_store %arg4[%c0_6, %c0_7], %13 {strides = array<i32>} : memref<64x128xbf16, #tpu.memory_space<vmem>>, vector<64x128xbf16>,
    return
  }
  func.func @transform_0(%arg0: i32) -> (i32, i32) {
    %c0_i32 = arith.constant 0 : i32
    %c0_i32_0 = arith.constant 0 : i32
    return %arg0, %c0_i32 : i32, i32
  }
  func.func @transform_1(%arg0: i32) -> (i32, i32) {
    %c0_i32 = arith.constant 0 : i32
    %c0_i32_0 = arith.constant 0 : i32
    %c0_i32_1 = arith.constant 0 : i32
    return %c0_i32, %c0_i32_0 : i32, i32
  }
  func.func @transform_2(%arg0: i32) -> (i32, i32) {
    %c0_i32 = arith.constant 0 : i32
    %c0_i32_0 = arith.constant 0 : i32
    %c0_i32_1 = arith.constant 0 : i32
    return %c0_i32, %c0_i32_0 : i32, i32
  }
  func.func @transform_3(%arg0: i32) -> (i32, i32) {
    %c0_i32 = arith.constant 0 : i32
    %c0_i32_0 = arith.constant 0 : i32
    return %arg0, %c0_i32 : i32, i32
  }
}

module attributes {stable_mosaic.version = 11 : i64} {
  func.func @kernel(%arg0: i32, %arg1: memref<1x4x6x6x64xbf16, #tpu.memory_space<vmem>>, %arg2: memref<1600x64xbf16, #tpu.memory_space<vmem>>, %arg3: memref<1x16x64xbf16, #tpu.memory_space<vmem>>, %arg4: memref<1x2x64xf32, #tpu.memory_space<vmem>>) attributes {dimension_semantics = [#tpu.dimension_semantics<parallel>], iteration_bounds = array<i64: 2>, scalar_prefetch = 0 : i64, scratch_operands = 0 : i64, tpu.core_type = #tpu.core_type<tc>, window_params = [{transform_indices = @transform_0, window_bounds = array<i64: 1, 4, 6, 6, 64>}, {pipeline_mode = #tpu.pipeline_mode<synchronous>, transform_indices = @transform_1, window_bounds = array<i64: 1600, 64>}, {transform_indices = @transform_2, window_bounds = array<i64: 1, 16, 64>}, {transform_indices = @transform_3, window_bounds = array<i64: 1, 2, 64>}]} {
    %c0 = arith.constant 0 : index
    %c0_0 = arith.constant 0 : index
    %c0_1 = arith.constant 0 : index
    %c0_2 = arith.constant 0 : index
    %c0_3 = arith.constant 0 : index
    %0 = vector.load %arg1[%c0, %c0_0, %c0_1, %c0_2, %c0_3] : memref<1x4x6x6x64xbf16, #tpu.memory_space<vmem>>, vector<1x1x4x4x64xbf16>
    %1 = vector.shape_cast %0 : vector<1x1x4x4x64xbf16> to vector<4x4x64xbf16>
    %c0_4 = arith.constant 0 : index
    %c1 = arith.constant 1 : index
    %c0_5 = arith.constant 0 : index
    %c0_6 = arith.constant 0 : index
    %c0_7 = arith.constant 0 : index
    %2 = vector.load %arg1[%c0_4, %c1, %c0_5, %c0_6, %c0_7] : memref<1x4x6x6x64xbf16, #tpu.memory_space<vmem>>, vector<1x1x4x4x64xbf16>
    %3 = vector.shape_cast %2 : vector<1x1x4x4x64xbf16> to vector<4x4x64xbf16>
    %c0_8 = arith.constant 0 : index
    %c0_9 = arith.constant 0 : index
    %c0_10 = arith.constant 0 : index
    %c1_11 = arith.constant 1 : index
    %c0_12 = arith.constant 0 : index
    %4 = vector.load %arg1[%c0_8, %c0_9, %c0_10, %c1_11, %c0_12] : memref<1x4x6x6x64xbf16, #tpu.memory_space<vmem>>, vector<1x1x4x4x64xbf16>
    %5 = vector.shape_cast %4 : vector<1x1x4x4x64xbf16> to vector<4x4x64xbf16>
    %c0_13 = arith.constant 0 : index
    %c1_14 = arith.constant 1 : index
    %c0_15 = arith.constant 0 : index
    %c1_16 = arith.constant 1 : index
    %c0_17 = arith.constant 0 : index
    %6 = vector.load %arg1[%c0_13, %c1_14, %c0_15, %c1_16, %c0_17] : memref<1x4x6x6x64xbf16, #tpu.memory_space<vmem>>, vector<1x1x4x4x64xbf16>
    %7 = vector.shape_cast %6 : vector<1x1x4x4x64xbf16> to vector<4x4x64xbf16>
    %c0_18 = arith.constant 0 : index
    %c0_19 = arith.constant 0 : index
    %c0_20 = arith.constant 0 : index
    %c2 = arith.constant 2 : index
    %c0_21 = arith.constant 0 : index
    %8 = vector.load %arg1[%c0_18, %c0_19, %c0_20, %c2, %c0_21] : memref<1x4x6x6x64xbf16, #tpu.memory_space<vmem>>, vector<1x1x4x4x64xbf16>
    %9 = vector.shape_cast %8 : vector<1x1x4x4x64xbf16> to vector<4x4x64xbf16>
    %c0_22 = arith.constant 0 : index
    %c2_23 = arith.constant 2 : index
    %c0_24 = arith.constant 0 : index
    %c0_25 = arith.constant 0 : index
    %c0_26 = arith.constant 0 : index
    %10 = vector.load %arg1[%c0_22, %c2_23, %c0_24, %c0_25, %c0_26] : memref<1x4x6x6x64xbf16, #tpu.memory_space<vmem>>, vector<1x1x4x4x64xbf16>
    %11 = vector.shape_cast %10 : vector<1x1x4x4x64xbf16> to vector<4x4x64xbf16>
    %c0_27 = arith.constant 0 : index
    %c3 = arith.constant 3 : index
    %c0_28 = arith.constant 0 : index
    %c0_29 = arith.constant 0 : index
    %c0_30 = arith.constant 0 : index
    %12 = vector.load %arg1[%c0_27, %c3, %c0_28, %c0_29, %c0_30] : memref<1x4x6x6x64xbf16, #tpu.memory_space<vmem>>, vector<1x1x4x4x64xbf16>
    %13 = vector.shape_cast %12 : vector<1x1x4x4x64xbf16> to vector<4x4x64xbf16>
    %c0_31 = arith.constant 0 : index
    %c2_32 = arith.constant 2 : index
    %c0_33 = arith.constant 0 : index
    %c1_34 = arith.constant 1 : index
    %c0_35 = arith.constant 0 : index
    %14 = vector.load %arg1[%c0_31, %c2_32, %c0_33, %c1_34, %c0_35] : memref<1x4x6x6x64xbf16, #tpu.memory_space<vmem>>, vector<1x1x4x4x64xbf16>
    %15 = vector.shape_cast %14 : vector<1x1x4x4x64xbf16> to vector<4x4x64xbf16>
    %c0_36 = arith.constant 0 : index
    %c3_37 = arith.constant 3 : index
    %c0_38 = arith.constant 0 : index
    %c1_39 = arith.constant 1 : index
    %c0_40 = arith.constant 0 : index
    %16 = vector.load %arg1[%c0_36, %c3_37, %c0_38, %c1_39, %c0_40] : memref<1x4x6x6x64xbf16, #tpu.memory_space<vmem>>, vector<1x1x4x4x64xbf16>
    %17 = vector.shape_cast %16 : vector<1x1x4x4x64xbf16> to vector<4x4x64xbf16>
    %c0_41 = arith.constant 0 : index
    %c2_42 = arith.constant 2 : index
    %c0_43 = arith.constant 0 : index
    %c2_44 = arith.constant 2 : index
    %c0_45 = arith.constant 0 : index
    %18 = vector.load %arg1[%c0_41, %c2_42, %c0_43, %c2_44, %c0_45] : memref<1x4x6x6x64xbf16, #tpu.memory_space<vmem>>, vector<1x1x4x4x64xbf16>
    %19 = vector.shape_cast %18 : vector<1x1x4x4x64xbf16> to vector<4x4x64xbf16>
    %c0_46 = arith.constant 0 : index
    %c0_47 = arith.constant 0 : index
    %c1_48 = arith.constant 1 : index
    %c0_49 = arith.constant 0 : index
    %c0_50 = arith.constant 0 : index
    %20 = vector.load %arg1[%c0_46, %c0_47, %c1_48, %c0_49, %c0_50] : memref<1x4x6x6x64xbf16, #tpu.memory_space<vmem>>, vector<1x1x4x4x64xbf16>
    %21 = vector.shape_cast %20 : vector<1x1x4x4x64xbf16> to vector<4x4x64xbf16>
    %c0_51 = arith.constant 0 : index
    %c1_52 = arith.constant 1 : index
    %c1_53 = arith.constant 1 : index
    %c0_54 = arith.constant 0 : index
    %c0_55 = arith.constant 0 : index
    %22 = vector.load %arg1[%c0_51, %c1_52, %c1_53, %c0_54, %c0_55] : memref<1x4x6x6x64xbf16, #tpu.memory_space<vmem>>, vector<1x1x4x4x64xbf16>
    %23 = vector.shape_cast %22 : vector<1x1x4x4x64xbf16> to vector<4x4x64xbf16>
    %c0_56 = arith.constant 0 : index
    %c0_57 = arith.constant 0 : index
    %c1_58 = arith.constant 1 : index
    %c1_59 = arith.constant 1 : index
    %c0_60 = arith.constant 0 : index
    %24 = vector.load %arg1[%c0_56, %c0_57, %c1_58, %c1_59, %c0_60] : memref<1x4x6x6x64xbf16, #tpu.memory_space<vmem>>, vector<1x1x4x4x64xbf16>
    %25 = vector.shape_cast %24 : vector<1x1x4x4x64xbf16> to vector<4x4x64xbf16>
    %c0_61 = arith.constant 0 : index
    %c1_62 = arith.constant 1 : index
    %c1_63 = arith.constant 1 : index
    %c1_64 = arith.constant 1 : index
    %c0_65 = arith.constant 0 : index
    %26 = vector.load %arg1[%c0_61, %c1_62, %c1_63, %c1_64, %c0_65] : memref<1x4x6x6x64xbf16, #tpu.memory_space<vmem>>, vector<1x1x4x4x64xbf16>
    %27 = vector.shape_cast %26 : vector<1x1x4x4x64xbf16> to vector<4x4x64xbf16>
    %c0_66 = arith.constant 0 : index
    %c0_67 = arith.constant 0 : index
    %c1_68 = arith.constant 1 : index
    %c2_69 = arith.constant 2 : index
    %c0_70 = arith.constant 0 : index
    %28 = vector.load %arg1[%c0_66, %c0_67, %c1_68, %c2_69, %c0_70] : memref<1x4x6x6x64xbf16, #tpu.memory_space<vmem>>, vector<1x1x4x4x64xbf16>
    %29 = vector.shape_cast %28 : vector<1x1x4x4x64xbf16> to vector<4x4x64xbf16>
    %c0_71 = arith.constant 0 : index
    %c2_72 = arith.constant 2 : index
    %c1_73 = arith.constant 1 : index
    %c0_74 = arith.constant 0 : index
    %c0_75 = arith.constant 0 : index
    %30 = vector.load %arg1[%c0_71, %c2_72, %c1_73, %c0_74, %c0_75] : memref<1x4x6x6x64xbf16, #tpu.memory_space<vmem>>, vector<1x1x4x4x64xbf16>
    %31 = vector.shape_cast %30 : vector<1x1x4x4x64xbf16> to vector<4x4x64xbf16>
    %c0_76 = arith.constant 0 : index
    %c3_77 = arith.constant 3 : index
    %c1_78 = arith.constant 1 : index
    %c0_79 = arith.constant 0 : index
    %c0_80 = arith.constant 0 : index
    %32 = vector.load %arg1[%c0_76, %c3_77, %c1_78, %c0_79, %c0_80] : memref<1x4x6x6x64xbf16, #tpu.memory_space<vmem>>, vector<1x1x4x4x64xbf16>
    %33 = vector.shape_cast %32 : vector<1x1x4x4x64xbf16> to vector<4x4x64xbf16>
    %c0_81 = arith.constant 0 : index
    %c2_82 = arith.constant 2 : index
    %c1_83 = arith.constant 1 : index
    %c1_84 = arith.constant 1 : index
    %c0_85 = arith.constant 0 : index
    %34 = vector.load %arg1[%c0_81, %c2_82, %c1_83, %c1_84, %c0_85] : memref<1x4x6x6x64xbf16, #tpu.memory_space<vmem>>, vector<1x1x4x4x64xbf16>
    %35 = vector.shape_cast %34 : vector<1x1x4x4x64xbf16> to vector<4x4x64xbf16>
    %c0_86 = arith.constant 0 : index
    %c3_87 = arith.constant 3 : index
    %c1_88 = arith.constant 1 : index
    %c1_89 = arith.constant 1 : index
    %c0_90 = arith.constant 0 : index
    %36 = vector.load %arg1[%c0_86, %c3_87, %c1_88, %c1_89, %c0_90] : memref<1x4x6x6x64xbf16, #tpu.memory_space<vmem>>, vector<1x1x4x4x64xbf16>
    %37 = vector.shape_cast %36 : vector<1x1x4x4x64xbf16> to vector<4x4x64xbf16>
    %c0_91 = arith.constant 0 : index
    %c2_92 = arith.constant 2 : index
    %c1_93 = arith.constant 1 : index
    %c2_94 = arith.constant 2 : index
    %c0_95 = arith.constant 0 : index
    %38 = vector.load %arg1[%c0_91, %c2_92, %c1_93, %c2_94, %c0_95] : memref<1x4x6x6x64xbf16, #tpu.memory_space<vmem>>, vector<1x1x4x4x64xbf16>
    %39 = vector.shape_cast %38 : vector<1x1x4x4x64xbf16> to vector<4x4x64xbf16>
    %c0_96 = arith.constant 0 : index
    %c0_97 = arith.constant 0 : index
    %c2_98 = arith.constant 2 : index
    %c0_99 = arith.constant 0 : index
    %c0_100 = arith.constant 0 : index
    %40 = vector.load %arg1[%c0_96, %c0_97, %c2_98, %c0_99, %c0_100] : memref<1x4x6x6x64xbf16, #tpu.memory_space<vmem>>, vector<1x1x4x4x64xbf16>
    %41 = vector.shape_cast %40 : vector<1x1x4x4x64xbf16> to vector<4x4x64xbf16>
    %c0_101 = arith.constant 0 : index
    %c1_102 = arith.constant 1 : index
    %c2_103 = arith.constant 2 : index
    %c0_104 = arith.constant 0 : index
    %c0_105 = arith.constant 0 : index
    %42 = vector.load %arg1[%c0_101, %c1_102, %c2_103, %c0_104, %c0_105] : memref<1x4x6x6x64xbf16, #tpu.memory_space<vmem>>, vector<1x1x4x4x64xbf16>
    %43 = vector.shape_cast %42 : vector<1x1x4x4x64xbf16> to vector<4x4x64xbf16>
    %c0_106 = arith.constant 0 : index
    %c0_107 = arith.constant 0 : index
    %c2_108 = arith.constant 2 : index
    %c1_109 = arith.constant 1 : index
    %c0_110 = arith.constant 0 : index
    %44 = vector.load %arg1[%c0_106, %c0_107, %c2_108, %c1_109, %c0_110] : memref<1x4x6x6x64xbf16, #tpu.memory_space<vmem>>, vector<1x1x4x4x64xbf16>
    %45 = vector.shape_cast %44 : vector<1x1x4x4x64xbf16> to vector<4x4x64xbf16>
    %c0_111 = arith.constant 0 : index
    %c1_112 = arith.constant 1 : index
    %c2_113 = arith.constant 2 : index
    %c1_114 = arith.constant 1 : index
    %c0_115 = arith.constant 0 : index
    %46 = vector.load %arg1[%c0_111, %c1_112, %c2_113, %c1_114, %c0_115] : memref<1x4x6x6x64xbf16, #tpu.memory_space<vmem>>, vector<1x1x4x4x64xbf16>
    %47 = vector.shape_cast %46 : vector<1x1x4x4x64xbf16> to vector<4x4x64xbf16>
    %c0_116 = arith.constant 0 : index
    %c0_117 = arith.constant 0 : index
    %c2_118 = arith.constant 2 : index
    %c2_119 = arith.constant 2 : index
    %c0_120 = arith.constant 0 : index
    %48 = vector.load %arg1[%c0_116, %c0_117, %c2_118, %c2_119, %c0_120] : memref<1x4x6x6x64xbf16, #tpu.memory_space<vmem>>, vector<1x1x4x4x64xbf16>
    %49 = vector.shape_cast %48 : vector<1x1x4x4x64xbf16> to vector<4x4x64xbf16>
    %50 = tpu.concatenate %1, %3, %5, %7, %9, %11, %13, %15, %17, %19, %21, %23, %25, %27, %29, %31 in 2 : vector<4x4x64xbf16>, vector<4x4x64xbf16>, vector<4x4x64xbf16>, vector<4x4x64xbf16>, vector<4x4x64xbf16>, vector<4x4x64xbf16>, vector<4x4x64xbf16>, vector<4x4x64xbf16>, vector<4x4x64xbf16>, vector<4x4x64xbf16>, vector<4x4x64xbf16>, vector<4x4x64xbf16>, vector<4x4x64xbf16>, vector<4x4x64xbf16>, vector<4x4x64xbf16>, vector<4x4x64xbf16> -> vector<4x4x1024xbf16>
    %51 = tpu.concatenate %33, %35, %37, %39, %41, %43, %45, %47, %49 in 2 : vector<4x4x64xbf16>, vector<4x4x64xbf16>, vector<4x4x64xbf16>, vector<4x4x64xbf16>, vector<4x4x64xbf16>, vector<4x4x64xbf16>, vector<4x4x64xbf16>, vector<4x4x64xbf16>, vector<4x4x64xbf16> -> vector<4x4x576xbf16>
    %52 = tpu.concatenate %50, %51 in 2 : vector<4x4x1024xbf16>, vector<4x4x576xbf16> -> vector<4x4x1600xbf16>
    %53 = vector.shape_cast %52 : vector<4x4x1600xbf16> to vector<16x1600xbf16>
    %c0_121 = arith.constant 0 : index
    %c0_122 = arith.constant 0 : index
    %54 = vector.load %arg2[%c0_121, %c0_122] : memref<1600x64xbf16, #tpu.memory_space<vmem>>, vector<1600x64xbf16>
    %cst = arith.constant dense<0.000000e+00> : vector<16x64xf32>
    %55 = tpu.matmul %53, %54, %cst {dimension_numbers = #tpu.dot_dimension_numbers<[1], [0], [0], [1], [0, 0, 1, 1], [], []>} : vector<16x1600xbf16>, vector<1600x64xbf16>, vector<16x64xf32> -> vector<16x64xf32>
    %56 = vector.shape_cast %55 : vector<16x64xf32> to vector<1x16x64xf32>
    %57 = arith.truncf %56 : vector<1x16x64xf32> to vector<1x16x64xbf16>
    %c0_123 = arith.constant 0 : index
    %c0_124 = arith.constant 0 : index
    %c0_125 = arith.constant 0 : index
    %58 = vector.load %arg3[%c0_123, %c0_124, %c0_125] : memref<1x16x64xbf16, #tpu.memory_space<vmem>>, vector<1x16x64xbf16>
    tpu.vector_store %arg3[%c0_123, %c0_124, %c0_125], %57 {strides = array<i32>} : memref<1x16x64xbf16, #tpu.memory_space<vmem>>, vector<1x16x64xbf16>,
    %cst_126 = arith.constant dense<0.000000e+00> : vector<64xf32>
    %59 = vector.multi_reduction <add>, %55, %cst_126 [0] : vector<16x64xf32> to vector<64xf32>
    %60 = vector.shape_cast %59 : vector<64xf32> to vector<1x64xf32>
    %61 = arith.mulf %55, %55 : vector<16x64xf32>
    %cst_127 = arith.constant dense<0.000000e+00> : vector<64xf32>
    %62 = vector.multi_reduction <add>, %61, %cst_127 [0] : vector<16x64xf32> to vector<64xf32>
    %63 = vector.shape_cast %62 : vector<64xf32> to vector<1x64xf32>
    %64 = tpu.concatenate %60, %63 in 0 : vector<1x64xf32>, vector<1x64xf32> -> vector<2x64xf32>
    %65 = vector.shape_cast %64 : vector<2x64xf32> to vector<1x2x64xf32>
    %c0_128 = arith.constant 0 : index
    %c0_129 = arith.constant 0 : index
    %c0_130 = arith.constant 0 : index
    %66 = vector.load %arg4[%c0_128, %c0_129, %c0_130] : memref<1x2x64xf32, #tpu.memory_space<vmem>>, vector<1x2x64xf32>
    tpu.vector_store %arg4[%c0_128, %c0_129, %c0_130], %65 {strides = array<i32>} : memref<1x2x64xf32, #tpu.memory_space<vmem>>, vector<1x2x64xf32>,
    return
  }
  func.func @transform_0(%arg0: i32) -> (i32, i32, i32, i32, i32) {
    %c0_i32 = arith.constant 0 : i32
    %c0_i32_0 = arith.constant 0 : i32
    %c0_i32_1 = arith.constant 0 : i32
    %c0_i32_2 = arith.constant 0 : i32
    %c0_i32_3 = arith.constant 0 : i32
    return %arg0, %c0_i32, %c0_i32_0, %c0_i32_1, %c0_i32_2 : i32, i32, i32, i32, i32
  }
  func.func @transform_1(%arg0: i32) -> (i32, i32) {
    %c0_i32 = arith.constant 0 : i32
    %c0_i32_0 = arith.constant 0 : i32
    %c0_i32_1 = arith.constant 0 : i32
    return %c0_i32, %c0_i32_0 : i32, i32
  }
  func.func @transform_2(%arg0: i32) -> (i32, i32, i32) {
    %c0_i32 = arith.constant 0 : i32
    %c0_i32_0 = arith.constant 0 : i32
    %c0_i32_1 = arith.constant 0 : i32
    return %arg0, %c0_i32, %c0_i32_0 : i32, i32, i32
  }
  func.func @transform_3(%arg0: i32) -> (i32, i32, i32) {
    %c0_i32 = arith.constant 0 : i32
    %c0_i32_0 = arith.constant 0 : i32
    %c0_i32_1 = arith.constant 0 : i32
    return %arg0, %c0_i32, %c0_i32_0 : i32, i32, i32
  }
}

module attributes {stable_mosaic.version = 11 : i64} {
  func.func @bn_lrelu_kernel(%arg0: i32, %arg1: memref<16x128xbf16, #tpu.memory_space<vmem>>, %arg2: memref<1x128xf32, #tpu.memory_space<vmem>>, %arg3: memref<1x128xf32, #tpu.memory_space<vmem>>, %arg4: memref<16x128xbf16, #tpu.memory_space<vmem>>) attributes {dimension_semantics = [#tpu.dimension_semantics<parallel>], iteration_bounds = array<i64: 1>, scalar_prefetch = 0 : i64, scratch_operands = 0 : i64, tpu.core_type = #tpu.core_type<tc>, window_params = [{transform_indices = @transform_0, window_bounds = array<i64: 16, 128>}, {pipeline_mode = #tpu.pipeline_mode<synchronous>, transform_indices = @transform_1, window_bounds = array<i64: 1, 128>}, {pipeline_mode = #tpu.pipeline_mode<synchronous>, transform_indices = @transform_2, window_bounds = array<i64: 1, 128>}, {transform_indices = @transform_3, window_bounds = array<i64: 16, 128>}]} {
    %c0 = arith.constant 0 : index
    %c0_0 = arith.constant 0 : index
    %0 = vector.load %arg1[%c0, %c0_0] : memref<16x128xbf16, #tpu.memory_space<vmem>>, vector<16x128xbf16>
    %1 = arith.extf %0 : vector<16x128xbf16> to vector<16x128xf32>
    %c0_1 = arith.constant 0 : index
    %c0_2 = arith.constant 0 : index
    %2 = vector.load %arg2[%c0_1, %c0_2] : memref<1x128xf32, #tpu.memory_space<vmem>>, vector<1x128xf32>
    %3 = vector.broadcast %2 : vector<1x128xf32> to vector<16x128xf32>
    %4 = arith.mulf %1, %3 : vector<16x128xf32>
    %c0_3 = arith.constant 0 : index
    %c0_4 = arith.constant 0 : index
    %5 = vector.load %arg3[%c0_3, %c0_4] : memref<1x128xf32, #tpu.memory_space<vmem>>, vector<1x128xf32>
    %6 = vector.broadcast %5 : vector<1x128xf32> to vector<16x128xf32>
    %7 = arith.addf %4, %6 : vector<16x128xf32>
    %cst = arith.constant 0.000000e+00 : f32
    %8 = vector.broadcast %cst : f32 to vector<16x128xf32>
    %9 = arith.cmpf oge, %7, %8 : vector<16x128xf32>
    %cst_5 = arith.constant 0.00999999977 : f32
    %10 = vector.broadcast %cst_5 : f32 to vector<16x128xf32>
    %11 = arith.mulf %10, %7 : vector<16x128xf32>
    %12 = arith.select %9, %7, %11 : vector<16x128xi1>, vector<16x128xf32>
    %13 = arith.truncf %12 : vector<16x128xf32> to vector<16x128xbf16>
    %c0_6 = arith.constant 0 : index
    %c0_7 = arith.constant 0 : index
    %14 = vector.load %arg4[%c0_6, %c0_7] : memref<16x128xbf16, #tpu.memory_space<vmem>>, vector<16x128xbf16>
    tpu.vector_store %arg4[%c0_6, %c0_7], %13 {strides = array<i32>} : memref<16x128xbf16, #tpu.memory_space<vmem>>, vector<16x128xbf16>,
    return
  }
  func.func @transform_0(%arg0: i32) -> (i32, i32) {
    %c0_i32 = arith.constant 0 : i32
    %c0_i32_0 = arith.constant 0 : i32
    return %arg0, %c0_i32 : i32, i32
  }
  func.func @transform_1(%arg0: i32) -> (i32, i32) {
    %c0_i32 = arith.constant 0 : i32
    %c0_i32_0 = arith.constant 0 : i32
    %c0_i32_1 = arith.constant 0 : i32
    return %c0_i32, %c0_i32_0 : i32, i32
  }
  func.func @transform_2(%arg0: i32) -> (i32, i32) {
    %c0_i32 = arith.constant 0 : i32
    %c0_i32_0 = arith.constant 0 : i32
    %c0_i32_1 = arith.constant 0 : i32
    return %c0_i32, %c0_i32_0 : i32, i32
  }
  func.func @transform_3(%arg0: i32) -> (i32, i32) {
    %c0_i32 = arith.constant 0 : i32
    %c0_i32_0 = arith.constant 0 : i32
    return %arg0, %c0_i32 : i32, i32
  }
}

module attributes {stable_mosaic.version = 11 : i64} {
  func.func @kernel(%arg0: i32, %arg1: memref<1x1x6x6x64xbf16, #tpu.memory_space<vmem>>, %arg2: memref<576x64xbf16, #tpu.memory_space<vmem>>, %arg3: memref<1x16x64xbf16, #tpu.memory_space<vmem>>, %arg4: memref<1x2x64xf32, #tpu.memory_space<vmem>>) attributes {dimension_semantics = [#tpu.dimension_semantics<parallel>], iteration_bounds = array<i64: 2>, scalar_prefetch = 0 : i64, scratch_operands = 0 : i64, tpu.core_type = #tpu.core_type<tc>, window_params = [{transform_indices = @transform_0, window_bounds = array<i64: 1, 1, 6, 6, 64>}, {pipeline_mode = #tpu.pipeline_mode<synchronous>, transform_indices = @transform_1, window_bounds = array<i64: 576, 64>}, {transform_indices = @transform_2, window_bounds = array<i64: 1, 16, 64>}, {transform_indices = @transform_3, window_bounds = array<i64: 1, 2, 64>}]} {
    %c0 = arith.constant 0 : index
    %c0_0 = arith.constant 0 : index
    %c0_1 = arith.constant 0 : index
    %c0_2 = arith.constant 0 : index
    %c0_3 = arith.constant 0 : index
    %0 = vector.load %arg1[%c0, %c0_0, %c0_1, %c0_2, %c0_3] : memref<1x1x6x6x64xbf16, #tpu.memory_space<vmem>>, vector<1x1x4x4x64xbf16>
    %1 = vector.shape_cast %0 : vector<1x1x4x4x64xbf16> to vector<4x4x64xbf16>
    %c0_4 = arith.constant 0 : index
    %c0_5 = arith.constant 0 : index
    %c0_6 = arith.constant 0 : index
    %c1 = arith.constant 1 : index
    %c0_7 = arith.constant 0 : index
    %2 = vector.load %arg1[%c0_4, %c0_5, %c0_6, %c1, %c0_7] : memref<1x1x6x6x64xbf16, #tpu.memory_space<vmem>>, vector<1x1x4x4x64xbf16>
    %3 = vector.shape_cast %2 : vector<1x1x4x4x64xbf16> to vector<4x4x64xbf16>
    %c0_8 = arith.constant 0 : index
    %c0_9 = arith.constant 0 : index
    %c0_10 = arith.constant 0 : index
    %c2 = arith.constant 2 : index
    %c0_11 = arith.constant 0 : index
    %4 = vector.load %arg1[%c0_8, %c0_9, %c0_10, %c2, %c0_11] : memref<1x1x6x6x64xbf16, #tpu.memory_space<vmem>>, vector<1x1x4x4x64xbf16>
    %5 = vector.shape_cast %4 : vector<1x1x4x4x64xbf16> to vector<4x4x64xbf16>
    %c0_12 = arith.constant 0 : index
    %c0_13 = arith.constant 0 : index
    %c1_14 = arith.constant 1 : index
    %c0_15 = arith.constant 0 : index
    %c0_16 = arith.constant 0 : index
    %6 = vector.load %arg1[%c0_12, %c0_13, %c1_14, %c0_15, %c0_16] : memref<1x1x6x6x64xbf16, #tpu.memory_space<vmem>>, vector<1x1x4x4x64xbf16>
    %7 = vector.shape_cast %6 : vector<1x1x4x4x64xbf16> to vector<4x4x64xbf16>
    %c0_17 = arith.constant 0 : index
    %c0_18 = arith.constant 0 : index
    %c1_19 = arith.constant 1 : index
    %c1_20 = arith.constant 1 : index
    %c0_21 = arith.constant 0 : index
    %8 = vector.load %arg1[%c0_17, %c0_18, %c1_19, %c1_20, %c0_21] : memref<1x1x6x6x64xbf16, #tpu.memory_space<vmem>>, vector<1x1x4x4x64xbf16>
    %9 = vector.shape_cast %8 : vector<1x1x4x4x64xbf16> to vector<4x4x64xbf16>
    %c0_22 = arith.constant 0 : index
    %c0_23 = arith.constant 0 : index
    %c1_24 = arith.constant 1 : index
    %c2_25 = arith.constant 2 : index
    %c0_26 = arith.constant 0 : index
    %10 = vector.load %arg1[%c0_22, %c0_23, %c1_24, %c2_25, %c0_26] : memref<1x1x6x6x64xbf16, #tpu.memory_space<vmem>>, vector<1x1x4x4x64xbf16>
    %11 = vector.shape_cast %10 : vector<1x1x4x4x64xbf16> to vector<4x4x64xbf16>
    %c0_27 = arith.constant 0 : index
    %c0_28 = arith.constant 0 : index
    %c2_29 = arith.constant 2 : index
    %c0_30 = arith.constant 0 : index
    %c0_31 = arith.constant 0 : index
    %12 = vector.load %arg1[%c0_27, %c0_28, %c2_29, %c0_30, %c0_31] : memref<1x1x6x6x64xbf16, #tpu.memory_space<vmem>>, vector<1x1x4x4x64xbf16>
    %13 = vector.shape_cast %12 : vector<1x1x4x4x64xbf16> to vector<4x4x64xbf16>
    %c0_32 = arith.constant 0 : index
    %c0_33 = arith.constant 0 : index
    %c2_34 = arith.constant 2 : index
    %c1_35 = arith.constant 1 : index
    %c0_36 = arith.constant 0 : index
    %14 = vector.load %arg1[%c0_32, %c0_33, %c2_34, %c1_35, %c0_36] : memref<1x1x6x6x64xbf16, #tpu.memory_space<vmem>>, vector<1x1x4x4x64xbf16>
    %15 = vector.shape_cast %14 : vector<1x1x4x4x64xbf16> to vector<4x4x64xbf16>
    %c0_37 = arith.constant 0 : index
    %c0_38 = arith.constant 0 : index
    %c2_39 = arith.constant 2 : index
    %c2_40 = arith.constant 2 : index
    %c0_41 = arith.constant 0 : index
    %16 = vector.load %arg1[%c0_37, %c0_38, %c2_39, %c2_40, %c0_41] : memref<1x1x6x6x64xbf16, #tpu.memory_space<vmem>>, vector<1x1x4x4x64xbf16>
    %17 = vector.shape_cast %16 : vector<1x1x4x4x64xbf16> to vector<4x4x64xbf16>
    %18 = tpu.concatenate %1, %3, %5, %7, %9, %11, %13, %15, %17 in 2 : vector<4x4x64xbf16>, vector<4x4x64xbf16>, vector<4x4x64xbf16>, vector<4x4x64xbf16>, vector<4x4x64xbf16>, vector<4x4x64xbf16>, vector<4x4x64xbf16>, vector<4x4x64xbf16>, vector<4x4x64xbf16> -> vector<4x4x576xbf16>
    %19 = vector.shape_cast %18 : vector<4x4x576xbf16> to vector<16x576xbf16>
    %c0_42 = arith.constant 0 : index
    %c0_43 = arith.constant 0 : index
    %20 = vector.load %arg2[%c0_42, %c0_43] : memref<576x64xbf16, #tpu.memory_space<vmem>>, vector<576x64xbf16>
    %cst = arith.constant dense<0.000000e+00> : vector<16x64xf32>
    %21 = tpu.matmul %19, %20, %cst {dimension_numbers = #tpu.dot_dimension_numbers<[1], [0], [0], [1], [0, 0, 1, 1], [], []>} : vector<16x576xbf16>, vector<576x64xbf16>, vector<16x64xf32> -> vector<16x64xf32>
    %22 = vector.shape_cast %21 : vector<16x64xf32> to vector<1x16x64xf32>
    %23 = arith.truncf %22 : vector<1x16x64xf32> to vector<1x16x64xbf16>
    %c0_44 = arith.constant 0 : index
    %c0_45 = arith.constant 0 : index
    %c0_46 = arith.constant 0 : index
    %24 = vector.load %arg3[%c0_44, %c0_45, %c0_46] : memref<1x16x64xbf16, #tpu.memory_space<vmem>>, vector<1x16x64xbf16>
    tpu.vector_store %arg3[%c0_44, %c0_45, %c0_46], %23 {strides = array<i32>} : memref<1x16x64xbf16, #tpu.memory_space<vmem>>, vector<1x16x64xbf16>,
    %cst_47 = arith.constant dense<0.000000e+00> : vector<64xf32>
    %25 = vector.multi_reduction <add>, %21, %cst_47 [0] : vector<16x64xf32> to vector<64xf32>
    %26 = vector.shape_cast %25 : vector<64xf32> to vector<1x64xf32>
    %27 = arith.mulf %21, %21 : vector<16x64xf32>
    %cst_48 = arith.constant dense<0.000000e+00> : vector<64xf32>
    %28 = vector.multi_reduction <add>, %27, %cst_48 [0] : vector<16x64xf32> to vector<64xf32>
    %29 = vector.shape_cast %28 : vector<64xf32> to vector<1x64xf32>
    %30 = tpu.concatenate %26, %29 in 0 : vector<1x64xf32>, vector<1x64xf32> -> vector<2x64xf32>
    %31 = vector.shape_cast %30 : vector<2x64xf32> to vector<1x2x64xf32>
    %c0_49 = arith.constant 0 : index
    %c0_50 = arith.constant 0 : index
    %c0_51 = arith.constant 0 : index
    %32 = vector.load %arg4[%c0_49, %c0_50, %c0_51] : memref<1x2x64xf32, #tpu.memory_space<vmem>>, vector<1x2x64xf32>
    tpu.vector_store %arg4[%c0_49, %c0_50, %c0_51], %31 {strides = array<i32>} : memref<1x2x64xf32, #tpu.memory_space<vmem>>, vector<1x2x64xf32>,
    return
  }
  func.func @transform_0(%arg0: i32) -> (i32, i32, i32, i32, i32) {
    %c0_i32 = arith.constant 0 : i32
    %c0_i32_0 = arith.constant 0 : i32
    %c0_i32_1 = arith.constant 0 : i32
    %c0_i32_2 = arith.constant 0 : i32
    %c0_i32_3 = arith.constant 0 : i32
    return %arg0, %c0_i32, %c0_i32_0, %c0_i32_1, %c0_i32_2 : i32, i32, i32, i32, i32
  }
  func.func @transform_1(%arg0: i32) -> (i32, i32) {
    %c0_i32 = arith.constant 0 : i32
    %c0_i32_0 = arith.constant 0 : i32
    %c0_i32_1 = arith.constant 0 : i32
    return %c0_i32, %c0_i32_0 : i32, i32
  }
  func.func @transform_2(%arg0: i32) -> (i32, i32, i32) {
    %c0_i32 = arith.constant 0 : i32
    %c0_i32_0 = arith.constant 0 : i32
    %c0_i32_1 = arith.constant 0 : i32
    return %arg0, %c0_i32, %c0_i32_0 : i32, i32, i32
  }
  func.func @transform_3(%arg0: i32) -> (i32, i32, i32) {
    %c0_i32 = arith.constant 0 : i32
    %c0_i32_0 = arith.constant 0 : i32
    %c0_i32_1 = arith.constant 0 : i32
    return %arg0, %c0_i32, %c0_i32_0 : i32, i32, i32
  }
}

module attributes {stable_mosaic.version = 11 : i64} {
  func.func @kernel(%arg0: i32, %arg1: memref<1x6x6x64xbf16, #tpu.memory_space<vmem>>, %arg2: memref<1x1x576xf32, #tpu.memory_space<vmem>>, %arg3: memref<32x4xf32, #tpu.memory_space<vmem>>, %arg4: memref<4x32xf32, #tpu.memory_space<vmem>>, %arg5: memref<1x32x32xf32, #tpu.memory_space<vmem>>) attributes {dimension_semantics = [#tpu.dimension_semantics<parallel>], iteration_bounds = array<i64: 2>, scalar_prefetch = 0 : i64, scratch_operands = 0 : i64, tpu.core_type = #tpu.core_type<tc>, window_params = [{transform_indices = @transform_0, window_bounds = array<i64: 1, 6, 6, 64>}, {pipeline_mode = #tpu.pipeline_mode<synchronous>, transform_indices = @transform_1, window_bounds = array<i64: 1, 1, 576>}, {pipeline_mode = #tpu.pipeline_mode<synchronous>, transform_indices = @transform_2, window_bounds = array<i64: 32, 4>}, {pipeline_mode = #tpu.pipeline_mode<synchronous>, transform_indices = @transform_3, window_bounds = array<i64: 4, 32>}, {transform_indices = @transform_4, window_bounds = array<i64: 1, 32, 32>}]} {
    %c0 = arith.constant 0 : index
    %c0_0 = arith.constant 0 : index
    %c0_1 = arith.constant 0 : index
    %c0_2 = arith.constant 0 : index
    %0 = vector.load %arg1[%c0, %c0_0, %c0_1, %c0_2] : memref<1x6x6x64xbf16, #tpu.memory_space<vmem>>, vector<1x4x4x64xbf16>
    %1 = vector.shape_cast %0 : vector<1x4x4x64xbf16> to vector<4x4x64xbf16>
    %c0_3 = arith.constant 0 : index
    %c0_4 = arith.constant 0 : index
    %c1 = arith.constant 1 : index
    %c0_5 = arith.constant 0 : index
    %2 = vector.load %arg1[%c0_3, %c0_4, %c1, %c0_5] : memref<1x6x6x64xbf16, #tpu.memory_space<vmem>>, vector<1x4x4x64xbf16>
    %3 = vector.shape_cast %2 : vector<1x4x4x64xbf16> to vector<4x4x64xbf16>
    %c0_6 = arith.constant 0 : index
    %c0_7 = arith.constant 0 : index
    %c2 = arith.constant 2 : index
    %c0_8 = arith.constant 0 : index
    %4 = vector.load %arg1[%c0_6, %c0_7, %c2, %c0_8] : memref<1x6x6x64xbf16, #tpu.memory_space<vmem>>, vector<1x4x4x64xbf16>
    %5 = vector.shape_cast %4 : vector<1x4x4x64xbf16> to vector<4x4x64xbf16>
    %c0_9 = arith.constant 0 : index
    %c1_10 = arith.constant 1 : index
    %c0_11 = arith.constant 0 : index
    %c0_12 = arith.constant 0 : index
    %6 = vector.load %arg1[%c0_9, %c1_10, %c0_11, %c0_12] : memref<1x6x6x64xbf16, #tpu.memory_space<vmem>>, vector<1x4x4x64xbf16>
    %7 = vector.shape_cast %6 : vector<1x4x4x64xbf16> to vector<4x4x64xbf16>
    %c0_13 = arith.constant 0 : index
    %c1_14 = arith.constant 1 : index
    %c1_15 = arith.constant 1 : index
    %c0_16 = arith.constant 0 : index
    %8 = vector.load %arg1[%c0_13, %c1_14, %c1_15, %c0_16] : memref<1x6x6x64xbf16, #tpu.memory_space<vmem>>, vector<1x4x4x64xbf16>
    %9 = vector.shape_cast %8 : vector<1x4x4x64xbf16> to vector<4x4x64xbf16>
    %c0_17 = arith.constant 0 : index
    %c1_18 = arith.constant 1 : index
    %c2_19 = arith.constant 2 : index
    %c0_20 = arith.constant 0 : index
    %10 = vector.load %arg1[%c0_17, %c1_18, %c2_19, %c0_20] : memref<1x6x6x64xbf16, #tpu.memory_space<vmem>>, vector<1x4x4x64xbf16>
    %11 = vector.shape_cast %10 : vector<1x4x4x64xbf16> to vector<4x4x64xbf16>
    %c0_21 = arith.constant 0 : index
    %c2_22 = arith.constant 2 : index
    %c0_23 = arith.constant 0 : index
    %c0_24 = arith.constant 0 : index
    %12 = vector.load %arg1[%c0_21, %c2_22, %c0_23, %c0_24] : memref<1x6x6x64xbf16, #tpu.memory_space<vmem>>, vector<1x4x4x64xbf16>
    %13 = vector.shape_cast %12 : vector<1x4x4x64xbf16> to vector<4x4x64xbf16>
    %c0_25 = arith.constant 0 : index
    %c2_26 = arith.constant 2 : index
    %c1_27 = arith.constant 1 : index
    %c0_28 = arith.constant 0 : index
    %14 = vector.load %arg1[%c0_25, %c2_26, %c1_27, %c0_28] : memref<1x6x6x64xbf16, #tpu.memory_space<vmem>>, vector<1x4x4x64xbf16>
    %15 = vector.shape_cast %14 : vector<1x4x4x64xbf16> to vector<4x4x64xbf16>
    %c0_29 = arith.constant 0 : index
    %c2_30 = arith.constant 2 : index
    %c2_31 = arith.constant 2 : index
    %c0_32 = arith.constant 0 : index
    %16 = vector.load %arg1[%c0_29, %c2_30, %c2_31, %c0_32] : memref<1x6x6x64xbf16, #tpu.memory_space<vmem>>, vector<1x4x4x64xbf16>
    %17 = vector.shape_cast %16 : vector<1x4x4x64xbf16> to vector<4x4x64xbf16>
    %18 = tpu.concatenate %1, %3, %5, %7, %9, %11, %13, %15, %17 in 2 : vector<4x4x64xbf16>, vector<4x4x64xbf16>, vector<4x4x64xbf16>, vector<4x4x64xbf16>, vector<4x4x64xbf16>, vector<4x4x64xbf16>, vector<4x4x64xbf16>, vector<4x4x64xbf16>, vector<4x4x64xbf16> -> vector<4x4x576xbf16>
    %19 = arith.extf %18 : vector<4x4x576xbf16> to vector<4x4x576xf32>
    %c0_33 = arith.constant 0 : index
    %c0_34 = arith.constant 0 : index
    %c0_35 = arith.constant 0 : index
    %20 = vector.load %arg2[%c0_33, %c0_34, %c0_35] : memref<1x1x576xf32, #tpu.memory_space<vmem>>, vector<1x1x576xf32>
    %21 = vector.broadcast %20 : vector<1x1x576xf32> to vector<4x4x576xf32>
    %22 = arith.mulf %19, %21 : vector<4x4x576xf32>
    %cst = arith.constant dense<0.000000e+00> : vector<4x4xf32>
    %23 = vector.multi_reduction <add>, %22, %cst [2] : vector<4x4x576xf32> to vector<4x4xf32>
    %cst_36 = arith.constant 0.000000e+00 : f32
    %24 = vector.broadcast %cst_36 : f32 to vector<4x4xf32>
    %25 = arith.cmpf oge, %23, %24 : vector<4x4xf32>
    %cst_37 = arith.constant 0.00999999977 : f32
    %26 = vector.broadcast %cst_37 : f32 to vector<4x4xf32>
    %27 = arith.mulf %26, %23 : vector<4x4xf32>
    %28 = arith.select %25, %23, %27 : vector<4x4xi1>, vector<4x4xf32>
    %c0_38 = arith.constant 0 : index
    %c0_39 = arith.constant 0 : index
    %29 = vector.load %arg4[%c0_38, %c0_39] : memref<4x32xf32, #tpu.memory_space<vmem>>, vector<4x32xf32>
    %cst_40 = arith.constant dense<0.000000e+00> : vector<4x32xf32>
    %30 = tpu.matmul %28, %29, %cst_40 {dimension_numbers = #tpu.dot_dimension_numbers<[1], [0], [0], [1], [0, 0, 1, 1], [], []>} : vector<4x4xf32>, vector<4x32xf32>, vector<4x32xf32> -> vector<4x32xf32>
    %c0_41 = arith.constant 0 : index
    %c0_42 = arith.constant 0 : index
    %31 = vector.load %arg3[%c0_41, %c0_42] : memref<32x4xf32, #tpu.memory_space<vmem>>, vector<32x4xf32>
    %cst_43 = arith.constant dense<0.000000e+00> : vector<32x32xf32>
    %32 = tpu.matmul %31, %30, %cst_43 {dimension_numbers = #tpu.dot_dimension_numbers<[1], [0], [0], [1], [0, 0, 1, 1], [], []>} : vector<32x4xf32>, vector<4x32xf32>, vector<32x32xf32> -> vector<32x32xf32>
    %33 = vector.shape_cast %32 : vector<32x32xf32> to vector<1x32x32xf32>
    %cst_44 = arith.constant dense<0xFF800000> : vector<1xf32>
    %34 = vector.multi_reduction <maximumf>, %33, %cst_44 [1, 2] : vector<1x32x32xf32> to vector<1xf32>
    %35 = vector.shape_cast %34 : vector<1xf32> to vector<1x1x1xf32>
    %36 = vector.extract %35[0, 0, 0] : f32 from vector<1x1x1xf32>
    %37 = vector.broadcast %36 : f32 to vector<1x1xf32>
    %38 = vector.broadcast %37 : vector<1x1xf32> to vector<32x32xf32>
    %39 = arith.subf %32, %38 : vector<32x32xf32>
    %40 = math.exp %39 : vector<32x32xf32>
    %41 = vector.shape_cast %40 : vector<32x32xf32> to vector<1x32x32xf32>
    %cst_45 = arith.constant dense<0.000000e+00> : vector<1xf32>
    %42 = vector.multi_reduction <add>, %41, %cst_45 [1, 2] : vector<1x32x32xf32> to vector<1xf32>
    %43 = vector.shape_cast %42 : vector<1xf32> to vector<1x1x1xf32>
    %44 = vector.extract %43[0, 0, 0] : f32 from vector<1x1x1xf32>
    %45 = vector.broadcast %44 : f32 to vector<1x1xf32>
    %46 = tpu.reciprocal %45 : vector<1x1xf32> -> vector<1x1xf32>
    %47 = vector.broadcast %46 : vector<1x1xf32> to vector<32x32xf32>
    %48 = arith.mulf %40, %47 : vector<32x32xf32>
    %49 = vector.shape_cast %48 : vector<32x32xf32> to vector<1x32x32xf32>
    %c0_46 = arith.constant 0 : index
    %c0_47 = arith.constant 0 : index
    %c0_48 = arith.constant 0 : index
    %50 = vector.load %arg5[%c0_46, %c0_47, %c0_48] : memref<1x32x32xf32, #tpu.memory_space<vmem>>, vector<1x32x32xf32>
    tpu.vector_store %arg5[%c0_46, %c0_47, %c0_48], %49 {strides = array<i32>} : memref<1x32x32xf32, #tpu.memory_space<vmem>>, vector<1x32x32xf32>,
    return
  }
  func.func @transform_0(%arg0: i32) -> (i32, i32, i32, i32) {
    %c0_i32 = arith.constant 0 : i32
    %c0_i32_0 = arith.constant 0 : i32
    %c0_i32_1 = arith.constant 0 : i32
    %c0_i32_2 = arith.constant 0 : i32
    return %arg0, %c0_i32, %c0_i32_0, %c0_i32_1 : i32, i32, i32, i32
  }
  func.func @transform_1(%arg0: i32) -> (i32, i32, i32) {
    %c0_i32 = arith.constant 0 : i32
    %c0_i32_0 = arith.constant 0 : i32
    %c0_i32_1 = arith.constant 0 : i32
    %c0_i32_2 = arith.constant 0 : i32
    return %c0_i32, %c0_i32_0, %c0_i32_1 : i32, i32, i32
  }
  func.func @transform_2(%arg0: i32) -> (i32, i32) {
    %c0_i32 = arith.constant 0 : i32
    %c0_i32_0 = arith.constant 0 : i32
    %c0_i32_1 = arith.constant 0 : i32
    return %c0_i32, %c0_i32_0 : i32, i32
  }
  func.func @transform_3(%arg0: i32) -> (i32, i32) {
    %c0_i32 = arith.constant 0 : i32
    %c0_i32_0 = arith.constant 0 : i32
    %c0_i32_1 = arith.constant 0 : i32
    return %c0_i32, %c0_i32_0 : i32, i32
  }
  func.func @transform_4(%arg0: i32) -> (i32, i32, i32) {
    %c0_i32 = arith.constant 0 : i32
    %c0_i32_0 = arith.constant 0 : i32
    %c0_i32_1 = arith.constant 0 : i32
    return %arg0, %c0_i32, %c0_i32_0 : i32, i32, i32
  }
}

</mosaic_0001>

<llo_original>
// kernel: tile.34
$region0: #{tile.34}
  %s0 = inlined_call_operand.vmem [shape: f32[2,64], index: 0, kind: input, shape index: {}]
  %s1 = inlined_call_operand.vmem [shape: f32[1,128], index: 1, kind: output, shape index: {}]
  $region1: #{tile.34} parent=0
    #allocation0 [shape = 'u8[4096]{0}', space=vmem, size = 0x1000, scoped, tag = 'scoped mem for output reshape']
    #allocation1 [shape = 'u8[4096]{0}', space=vmem, size = 0x1000, scoped, tag = 'scoped mem for input reshape']
    %s3 = sshllo.u32 0, 2
    %v4 = vld [vmem:[%s0] sm:%s3]
    %5 = vst [vmem:[#allocation1] sm:%s3] %v4
    %v6 = vld [vmem:[#allocation1] sm:$0x1]
    %vm7 = vcmask 523264
    %8 = vst.msk [vmem:[#allocation0] sm:$0x1] %vm7, %v6
    %s9 = scalar_lea.vmem [#allocation1], 1
    %v10 = vld [vmem:[%s9] sm:$0x1]
    %11 = vrot.lane.b32.xlu0 %v10, 64
    %v12 = vpop.permute.xlu0 %11
    %vm13 = vcmask 1048064
    %14 = vst.msk [vmem:[#allocation0] sm:$0x1] %vm13, %v12
    %s16 = sshllo.u32 0, 1
    %v18 = vld [vmem:[#allocation0] sm:%s16]
    %s19 = sshllo.u32 0, 1
    %20 = vst [vmem:[%s1] sm:%s19] %v18

// kernel: tile.33
$region0: #{tile.33}
  #allocation0 [shape = 's32[1]{0}', space=sflag, size = 0x4, scoped, tag = 'scoped memory for tile.33']
  %s0 = inlined_call_operand.vmem [shape: f32[64], index: 0, kind: input, shape index: {}]
  %s1 = inlined_call_operand.vmem [shape: f32[2,64], index: 1, kind: output, shape index: {}]
  // Predicated region
  $region2: #{tile.33} parent=0 // pred_check
    _
  $region3: #{tile.33} parent=0 // pred_check_branch
    %3 = sbr.rel (0) target = $region5
  $region4: #{tile.33} parent=0 // pred_region
    _
  $region5: #{tile.33} parent=0 // pred_fallthru
    _
  %v4 = vld [vmem:[%s0] ss:$0 sm:$0xff]
  %5 = vst [vmem:[%s1] sm:$0x3] %v4

// kernel: basic_block_forward.8
$region0: #{basic_block_forward.8}
  #allocation0 [shape = 'u32[]', space=smem, size = 0x4, offset = 0x4, fixed_abs, tag = 'smem constant byte address 0x4 - core index']
  #allocation1 [shape = 'u32[144,128]{1,0:T(1,128)}', space=vmem, size = 0x12000, scoped, tag = 'internal scratch']
  %s0 = inlined_call_operand.vmem [shape: bf16[64,128], index: 0, kind: input, shape index: {}]
  %s1 = inlined_call_operand.vmem [shape: f32[1,128], index: 1, kind: input, shape index: {}]
  %s2 = inlined_call_operand.vmem [shape: f32[1,128], index: 2, kind: input, shape index: {}]
  %s3 = inlined_call_operand.vmem [shape: bf16[64,128], index: 3, kind: output, shape index: {}]
  %s4 = sld [smem:[#allocation0]]
  $region22: #{basic_block_forward.8} parent=0
    _
  %s6 = ssub.s32 1, %s4
  %s7 = scalar_select 0, %s6, %s4
  // Predicated region
  $region2: #{basic_block_forward.8} parent=0 // pred_check
    _
  $region3: #{basic_block_forward.8} parent=0 // pred_check_branch
    %9 = sbr.rel (0) target = $region5
  $region4: #{basic_block_forward.8} parent=0 // pred_region
    _
  $region5: #{basic_block_forward.8} parent=0 // pred_fallthru
    _
  // Predicated region
  $region6: #{basic_block_forward.8} parent=0 // pred_check
    _
  $region7: #{basic_block_forward.8} parent=0 // pred_check_branch
    %11 = sbr.rel (0) target = $region9
  $region8: #{basic_block_forward.8} parent=0 // pred_region
    _
  $region9: #{basic_block_forward.8} parent=0 // pred_fallthru
    _
  // Predicated region
  $region10: #{basic_block_forward.8} parent=0 // pred_check
    _
  $region11: #{basic_block_forward.8} parent=0 // pred_check_branch
    %13 = sbr.rel (0) target = $region13
  $region12: #{basic_block_forward.8} parent=0 // pred_region
    _
  $region13: #{basic_block_forward.8} parent=0 // pred_fallthru
    _
  %v14 = vld [vmem:[%s0] sm:$0xf]
  %v15 = vld [vmem:[%s0 + $0x4] sm:$0xf]
  %v16 = vld [vmem:[%s0 + $0x8] sm:$0xf]
  %v17 = vld [vmem:[%s0 + $0xc] sm:$0xf]
  %v18 = vld [vmem:[%s0 + $0x10] sm:$0xf]
  %v19 = vld [vmem:[%s0 + $0x14] sm:$0xf]
  %v20 = vld [vmem:[%s0 + $0x18] sm:$0xf]
  %v21 = vld [vmem:[%s0 + $0x1c] sm:$0xf]
  %v22 = vunpack.c.l.bf16 %v14
  %v23 = vunpack.c.l.bf16 %v15
  %v24 = vunpack.c.l.bf16 %v16
  %v25 = vunpack.c.l.bf16 %v17
  %v26 = vunpack.c.l.bf16 %v18
  %v27 = vunpack.c.l.bf16 %v19
  %v28 = vunpack.c.l.bf16 %v20
  %v29 = vunpack.c.l.bf16 %v21
  %v30 = vld [vmem:[%s1] sm:$0x1]
  %v32 = vlaneseq
  %v33 = vshrl.u32 %v32, 7
  %v34 = vsub.s32 0, %v33
  %v35 = vrot.slane %v30, %v34
  %v37 = vmul.f32 %v22, %v35
  %v38 = vmul.f32 %v23, %v35
  %v39 = vmul.f32 %v24, %v35
  %v40 = vmul.f32 %v25, %v35
  %v41 = vmul.f32 %v26, %v35
  %v42 = vmul.f32 %v27, %v35
  %v43 = vmul.f32 %v28, %v35
  %v44 = vmul.f32 %v29, %v35
  %v45 = vld [vmem:[%s2] sm:$0x1]
  %v47 = vlaneseq
  %v48 = vshrl.u32 %v47, 7
  %v49 = vsub.s32 0, %v48
  %v50 = vrot.slane %v45, %v49
  %v52 = vadd.f32 %v37, %v50
  %v53 = vadd.f32 %v38, %v50
  %v54 = vadd.f32 %v39, %v50
  %v55 = vadd.f32 %v40, %v50
  %v56 = vadd.f32 %v41, %v50
  %v57 = vadd.f32 %v42, %v50
  %v58 = vadd.f32 %v43, %v50
  %v59 = vadd.f32 %v44, %v50
  %vm60 = vcmp.ge.f32.partialorder %v52, 0.0
  %vm61 = vcmp.ge.f32.partialorder %v53, 0.0
  %vm62 = vcmp.ge.f32.partialorder %v54, 0.0
  %vm63 = vcmp.ge.f32.partialorder %v55, 0.0
  %vm64 = vcmp.ge.f32.partialorder %v56, 0.0
  %vm65 = vcmp.ge.f32.partialorder %v57, 0.0
  %vm66 = vcmp.ge.f32.partialorder %v58, 0.0
  %vm67 = vcmp.ge.f32.partialorder %v59, 0.0
  %v68 = vmul.f32 %v52, 0.01
  %v69 = vmul.f32 %v53, 0.01
  %v70 = vmul.f32 %v54, 0.01
  %v71 = vmul.f32 %v55, 0.01
  %v72 = vmul.f32 %v56, 0.01
  %v73 = vmul.f32 %v57, 0.01
  %v74 = vmul.f32 %v58, 0.01
  %v75 = vmul.f32 %v59, 0.01
  %v76 = vsel %vm60, %v52, %v68
  %v77 = vsel %vm61, %v53, %v69
  %v78 = vsel %vm62, %v54, %v70
  %v79 = vsel %vm63, %v55, %v71
  %v80 = vsel %vm64, %v56, %v72
  %v81 = vsel %vm65, %v57, %v73
  %v82 = vsel %vm66, %v58, %v74
  %v83 = vsel %vm67, %v59, %v75
  %v84 = vpack.c.bf16 %v77, %v76
  %v85 = vpack.c.bf16 %v79, %v78
  %v86 = vpack.c.bf16 %v81, %v80
  %v87 = vpack.c.bf16 %v83, %v82
  %v92 = vunpack.c.l.b16 %v84
  %v93 = vunpack.c.h.b16 %v84
  %v94 = vunpack.c.l.b16 %v85
  %v95 = vunpack.c.h.b16 %v85
  %v96 = vunpack.c.l.b16 %v86
  %v97 = vunpack.c.h.b16 %v86
  %v98 = vunpack.c.l.b16 %v87
  %v99 = vunpack.c.h.b16 %v87
  %v100 = vpack.c.b16 %v92, %v92
  %v101 = vpack.c.b16 %v93, %v93
  %v102 = vpack.c.b16 %v94, %v94
  %v103 = vpack.c.b16 %v95, %v95
  %v104 = vpack.c.b16 %v96, %v96
  %v105 = vpack.c.b16 %v97, %v97
  %v106 = vpack.c.b16 %v98, %v98
  %v107 = vpack.c.b16 %v99, %v99
  %116 = vst [vmem:[%s3] sm:$0xf] %v100
  %117 = vst [vmem:[%s3 + $0x4] sm:$0xf] %v101
  %118 = vst [vmem:[%s3 + $0x8] sm:$0xf] %v102
  %119 = vst [vmem:[%s3 + $0xc] sm:$0xf] %v103
  %120 = vst [vmem:[%s3 + $0x10] sm:$0xf] %v104
  %121 = vst [vmem:[%s3 + $0x14] sm:$0xf] %v105
  %122 = vst [vmem:[%s3 + $0x18] sm:$0xf] %v106
  %123 = vst [vmem:[%s3 + $0x1c] sm:$0xf] %v107
  // Predicated region
  $region14: #{basic_block_forward.8} parent=0 // pred_check
    _
  $region15: #{basic_block_forward.8} parent=0 // pred_check_branch
    %125 = sbr.rel (0) target = $region17
  $region16: #{basic_block_forward.8} parent=0 // pred_region
    _
  $region17: #{basic_block_forward.8} parent=0 // pred_fallthru
    _
  // Predicated region
  $region18: #{basic_block_forward.8} parent=0 // pred_check
    _
  $region19: #{basic_block_forward.8} parent=0 // pred_check_branch
    %127 = sbr.rel (0) target = $region21
  $region20: #{basic_block_forward.8} parent=0 // pred_region
    _
  $region21: #{basic_block_forward.8} parent=0 // pred_fallthru
    _

// kernel: basic_block_forward.7
$region0: #{basic_block_forward.7}
  #allocation0 [shape = 'u32[]', space=smem, size = 0x4, offset = 0x4, fixed_abs, tag = 'smem constant byte address 0x4 - core index']
  #allocation1 [shape = 'u32[144,128]{1,0:T(1,128)}', space=vmem, size = 0x12000, scoped, tag = 'internal scratch']
  %s0 = inlined_call_operand.vmem [shape: bf16[128,150], index: 0, kind: input, shape index: {}]
  %s1 = inlined_call_operand.vmem [shape: bf16[150,64], index: 1, kind: input, shape index: {}]
  %s2 = inlined_call_operand.vmem [shape: bf16[128,64], index: 2, kind: output, shape index: {0}]
  %s3 = inlined_call_operand.vmem [shape: f32[1,2,64], index: 3, kind: output, shape index: {1}]
  %4 = xla_tuple %s2, %s3
  %s5 = sld [smem:[#allocation0]]
  $region26: #{basic_block_forward.7} parent=0
    _
  %s7 = ssub.s32 1, %s5
  %s8 = scalar_select 0, %s7, %s5
  // Predicated region
  $region2: #{basic_block_forward.7} parent=0 // pred_check
    _
  $region3: #{basic_block_forward.7} parent=0 // pred_check_branch
    %10 = sbr.rel (0) target = $region5
  $region4: #{basic_block_forward.7} parent=0 // pred_region
    _
  $region5: #{basic_block_forward.7} parent=0 // pred_fallthru
    _
  // Predicated region
  $region6: #{basic_block_forward.7} parent=0 // pred_check
    _
  $region7: #{basic_block_forward.7} parent=0 // pred_check_branch
    %12 = sbr.rel (0) target = $region9
  $region8: #{basic_block_forward.7} parent=0 // pred_region
    _
  $region9: #{basic_block_forward.7} parent=0 // pred_fallthru
    _
  %v14 = vld [vmem:[%s0] sm:$0xff]
  %v15 = vld [vmem:[%s0 + $0x8] sm:$0xff]
  %v16 = vld [vmem:[%s0 + $0x10] sm:$0xff]
  %v17 = vld [vmem:[%s0 + $0x18] sm:$0xff]
  %v18 = vld [vmem:[%s0 + $0x20] sm:$0xff]
  %v19 = vld [vmem:[%s0 + $0x28] sm:$0xff]
  %v20 = vld [vmem:[%s0 + $0x30] sm:$0xff]
  %v21 = vld [vmem:[%s0 + $0x38] sm:$0xff]
  %v22 = vld [vmem:[%s0 + $0x40] sm:$0xff]
  %v23 = vld [vmem:[%s0 + $0x48] sm:$0xff]
  %v24 = vld [vmem:[%s0 + $0x50] sm:$0xff]
  %v25 = vld [vmem:[%s0 + $0x58] sm:$0xff]
  %v26 = vld [vmem:[%s0 + $0x60] sm:$0xff]
  %v27 = vld [vmem:[%s0 + $0x68] sm:$0xff]
  %v28 = vld [vmem:[%s0 + $0x70] sm:$0xff]
  %v29 = vld [vmem:[%s0 + $0x78] sm:$0xff]
  %v30 = vld [vmem:[%s1] sm:$0xf]
  %v31 = vld [vmem:[%s1 + $0x4] sm:$0xf]
  %v32 = vld [vmem:[%s1 + $0x8] sm:$0xf]
  %v33 = vld [vmem:[%s1 + $0xc] sm:$0xf]
  %v34 = vld [vmem:[%s1 + $0x10] sm:$0xf]
  %v35 = vld [vmem:[%s1 + $0x14] sm:$0xf]
  %v36 = vld [vmem:[%s1 + $0x18] sm:$0xf]
  %v37 = vld [vmem:[%s1 + $0x1c] sm:$0xf]
  %v38 = vld [vmem:[%s1 + $0x20] sm:$0xf]
  %v39 = vld [vmem:[%s1 + $0x24] sm:$0xf]
  %v40 = vld [vmem:[%s1 + $0x28] sm:$0xf]
  %v41 = vld [vmem:[%s1 + $0x2c] sm:$0xf]
  %v42 = vld [vmem:[%s1 + $0x30] sm:$0xf]
  %v43 = vld [vmem:[%s1 + $0x34] sm:$0xf]
  %v44 = vld [vmem:[%s1 + $0x38] sm:$0xf]
  %v45 = vld [vmem:[%s1 + $0x3c] sm:$0xf]
  %v46 = vld [vmem:[%s1 + $0x40] sm:$0xf]
  %v47 = vld [vmem:[%s1 + $0x44] sm:$0xf]
  %v48 = vld [vmem:[%s1 + $0x48] sm:$0x7]
  %v65 = vunpack.c.l.b16 %v14
  %v66 = vunpack.c.h.b16 %v14
  %v67 = vunpack.c.l.b16 %v15
  %v68 = vunpack.c.h.b16 %v15
  %v69 = vunpack.c.l.b16 %v16
  %v70 = vunpack.c.h.b16 %v16
  %v71 = vunpack.c.l.b16 %v17
  %v72 = vunpack.c.h.b16 %v17
  %v73 = vunpack.c.l.b16 %v18
  %v74 = vunpack.c.h.b16 %v18
  %v75 = vunpack.c.l.b16 %v19
  %v76 = vunpack.c.h.b16 %v19
  %v77 = vunpack.c.l.b16 %v20
  %v78 = vunpack.c.h.b16 %v20
  %v79 = vunpack.c.l.b16 %v21
  %v80 = vunpack.c.h.b16 %v21
  %v81 = vunpack.c.l.b16 %v22
  %v82 = vunpack.c.h.b16 %v22
  %v83 = vunpack.c.l.b16 %v23
  %v84 = vunpack.c.h.b16 %v23
  %v85 = vunpack.c.l.b16 %v24
  %v86 = vunpack.c.h.b16 %v24
  %v87 = vunpack.c.l.b16 %v25
  %v88 = vunpack.c.h.b16 %v25
  %v89 = vunpack.c.l.b16 %v26
  %v90 = vunpack.c.h.b16 %v26
  %v91 = vunpack.c.l.b16 %v27
  %v92 = vunpack.c.h.b16 %v27
  %v93 = vunpack.c.l.b16 %v28
  %v94 = vunpack.c.h.b16 %v28
  %v95 = vunpack.c.l.b16 %v29
  %v96 = vunpack.c.h.b16 %v29
  %v97 = vpack.c.b16 %v67, %v65
  %v98 = vpack.c.b16 %v68, %v66
  %v99 = vpack.c.b16 %v71, %v69
  %v100 = vpack.c.b16 %v72, %v70
  %v101 = vpack.c.b16 %v75, %v73
  %v102 = vpack.c.b16 %v76, %v74
  %v103 = vpack.c.b16 %v79, %v77
  %v104 = vpack.c.b16 %v80, %v78
  %v105 = vpack.c.b16 %v83, %v81
  %v106 = vpack.c.b16 %v84, %v82
  %v107 = vpack.c.b16 %v87, %v85
  %v108 = vpack.c.b16 %v88, %v86
  %v109 = vpack.c.b16 %v91, %v89
  %v110 = vpack.c.b16 %v92, %v90
  %v111 = vpack.c.b16 %v95, %v93
  %v112 = vpack.c.b16 %v96, %v94
  %v140 = vunpack.c.l.b16 %v30
  %v141 = vunpack.c.l.b16 %v31
  %v142 = vunpack.c.l.b16 %v32
  %v143 = vunpack.c.l.b16 %v33
  %v144 = vunpack.c.l.b16 %v34
  %v145 = vunpack.c.l.b16 %v35
  %v146 = vunpack.c.l.b16 %v36
  %v147 = vunpack.c.l.b16 %v37
  %v148 = vunpack.c.l.b16 %v38
  %v149 = vunpack.c.l.b16 %v39
  %v150 = vunpack.c.l.b16 %v40
  %v151 = vunpack.c.l.b16 %v41
  %v152 = vunpack.c.l.b16 %v42
  %v153 = vunpack.c.l.b16 %v43
  %v154 = vunpack.c.l.b16 %v44
  %v155 = vunpack.c.l.b16 %v45
  %v156 = vunpack.c.l.b16 %v46
  %v157 = vunpack.c.l.b16 %v47
  %v158 = vunpack.c.l.b16 %v48
  %v159 = vpack.c.b16 %v141, %v140
  %v160 = vpack.c.b16 %v143, %v142
  %v161 = vpack.c.b16 %v145, %v144
  %v162 = vpack.c.b16 %v147, %v146
  %v163 = vpack.c.b16 %v149, %v148
  %v164 = vpack.c.b16 %v151, %v150
  %v165 = vpack.c.b16 %v153, %v152
  %v166 = vpack.c.b16 %v155, %v154
  %v167 = vpack.c.b16 %v157, %v156
  %v168 = vpack.c.b16 %v158, %v158
  %vm178 = vcmask 179200
  %v180 = vsel %vm178, %v98, 0
  %v183 = vsel %vm178, %v100, 0
  %v186 = vsel %vm178, %v102, 0
  %v189 = vsel %vm178, %v104, 0
  %v192 = vsel %vm178, %v106, 0
  %v195 = vsel %vm178, %v108, 0
  %v198 = vsel %vm178, %v110, 0
  %v201 = vsel %vm178, %v112, 0
  %vm203 = vcmask 1042432
  %v205 = vsel %vm203, %v168, 0
  %207 = vmatprep.subr.bf16.mxu0 0
  %208 = vmatpush1.bf16.msra.mxu0 %v159
  %209 = vmatprep.subr.bf16.mxu0 0
  %210 = vmatpush1.bf16.msra.mxu0 %v160
  %211 = vmatprep.subr.bf16.mxu0 0
  %212 = vmatpush1.bf16.msra.mxu0 %v161
  %213 = vmatprep.subr.bf16.mxu0 0
  %214 = vmatpush1.bf16.msra.mxu0 %v162
  %215 = vmatprep.subr.bf16.mxu0 0
  %216 = vmatpush1.bf16.msra.mxu0 %v163
  %217 = vmatprep.subr.bf16.mxu0 0
  %218 = vmatpush1.bf16.msra.mxu0 %v164
  %219 = vmatprep.subr.bf16.mxu0 0
  %220 = vmatpush1.bf16.msra.mxu0 %v165
  %221 = vmatprep.subr.bf16.mxu0 0
  %222 = vmatpush1.bf16.msra.mxu0 %v166
  %223 = vmatprep.subr.bf16.mxu0 0
  %224 = vmatpush1.bf16.msra.mxu0 %v167
  %225 = vmatprep.subr.bf16.mxu0 0
  %226 = vmatpush1.bf16.msra.mxu0 %v205
  %227 = vmatprep.subr.bf16.mxu0 0
  %228 = vmatpush1.bf16.msra.mxu0 0
  %229 = vmatprep.subr.bf16.mxu0 0
  %230 = vmatpush1.bf16.msra.mxu0 0
  %231 = vmatprep.subr.bf16.mxu0 0
  %232 = vmatpush1.bf16.msra.mxu0 0
  %233 = vmatprep.subr.bf16.mxu0 0
  %234 = vmatpush1.bf16.msra.mxu0 0
  %235 = vmatprep.subr.bf16.mxu0 0
  %236 = vmatpush1.bf16.msra.mxu0 0
  %237 = vmatprep.subr.bf16.mxu0 0
  %238 = vmatpush1.bf16.msra.mxu0 0
  %239 = vmatprep.mubr.bf16.mxu0 %v180
  %240 = vmatmul.mubr.bf16.gmra.mrb[0].mxu0 %v97
  %v241 = vpop.f32.mrb[0].mxu0
  %v242 = vadd.f32 0.0, %v241
  %v243 = vpop.f32.mrb[0].mxu0
  %v244 = vpop.f32.mrb[0].mxu0
  %v245 = vadd.f32 0.0, %v244
  %v246 = vpop.f32.mrb[0].mxu0
  %247 = vmatprep.mubr.bf16.mxu0 %v183
  %248 = vmatmul.mubr.bf16.gmra.mrb[0].mxu0 %v99
  %v249 = vpop.f32.mrb[0].mxu0
  %v250 = vadd.f32 0.0, %v249
  %v251 = vpop.f32.mrb[0].mxu0
  %v252 = vpop.f32.mrb[0].mxu0
  %v253 = vadd.f32 0.0, %v252
  %v254 = vpop.f32.mrb[0].mxu0
  %255 = vmatprep.mubr.bf16.mxu0 %v186
  %256 = vmatmul.mubr.bf16.gmra.mrb[0].mxu0 %v101
  %v257 = vpop.f32.mrb[0].mxu0
  %v258 = vadd.f32 0.0, %v257
  %v259 = vpop.f32.mrb[0].mxu0
  %v260 = vpop.f32.mrb[0].mxu0
  %v261 = vadd.f32 0.0, %v260
  %v262 = vpop.f32.mrb[0].mxu0
  %263 = vmatprep.mubr.bf16.mxu0 %v189
  %264 = vmatmul.mubr.bf16.gmra.mrb[0].mxu0 %v103
  %v265 = vpop.f32.mrb[0].mxu0
  %v266 = vadd.f32 0.0, %v265
  %v267 = vpop.f32.mrb[0].mxu0
  %v268 = vpop.f32.mrb[0].mxu0
  %v269 = vadd.f32 0.0, %v268
  %v270 = vpop.f32.mrb[0].mxu0
  %271 = vmatprep.mubr.bf16.mxu0 %v192
  %272 = vmatmul.mubr.bf16.gmra.mrb[0].mxu0 %v105
  %v273 = vpop.f32.mrb[0].mxu0
  %v274 = vadd.f32 0.0, %v273
  %v275 = vpop.f32.mrb[0].mxu0
  %v276 = vpop.f32.mrb[0].mxu0
  %v277 = vadd.f32 0.0, %v276
  %v278 = vpop.f32.mrb[0].mxu0
  %279 = vmatprep.mubr.bf16.mxu0 %v195
  %280 = vmatmul.mubr.bf16.gmra.mrb[0].mxu0 %v107
  %v281 = vpop.f32.mrb[0].mxu0
  %v282 = vadd.f32 0.0, %v281
  %v283 = vpop.f32.mrb[0].mxu0
  %v284 = vpop.f32.mrb[0].mxu0
  %v285 = vadd.f32 0.0, %v284
  %v286 = vpop.f32.mrb[0].mxu0
  %287 = vmatprep.mubr.bf16.mxu0 %v198
  %288 = vmatmul.mubr.bf16.gmra.mrb[0].mxu0 %v109
  %v289 = vpop.f32.mrb[0].mxu0
  %v290 = vadd.f32 0.0, %v289
  %v291 = vpop.f32.mrb[0].mxu0
  %v292 = vpop.f32.mrb[0].mxu0
  %v293 = vadd.f32 0.0, %v292
  %v294 = vpop.f32.mrb[0].mxu0
  %295 = vmatprep.mubr.bf16.mxu0 %v201
  %296 = vmatmul.mubr.bf16.gmra.mrb[0].mxu0 %v111
  %v297 = vpop.f32.mrb[0].mxu0
  %v298 = vadd.f32 0.0, %v297
  %v299 = vpop.f32.mrb[0].mxu0
  %v300 = vpop.f32.mrb[0].mxu0
  %v301 = vadd.f32 0.0, %v300
  %v302 = vpop.f32.mrb[0].mxu0
  %303 = vdwg.mxu0
  %v304 = vpack.c.bf16 %v245, %v242
  %v305 = vpack.c.bf16 %v253, %v250
  %v306 = vpack.c.bf16 %v261, %v258
  %v307 = vpack.c.bf16 %v269, %v266
  %v308 = vpack.c.bf16 %v277, %v274
  %v309 = vpack.c.bf16 %v285, %v282
  %v310 = vpack.c.bf16 %v293, %v290
  %v311 = vpack.c.bf16 %v301, %v298
  %v320 = vunpack.c.l.b16 %v304
  %v321 = vunpack.c.h.b16 %v304
  %v322 = vunpack.c.l.b16 %v305
  %v323 = vunpack.c.h.b16 %v305
  %v324 = vunpack.c.l.b16 %v306
  %v325 = vunpack.c.h.b16 %v306
  %v326 = vunpack.c.l.b16 %v307
  %v327 = vunpack.c.h.b16 %v307
  %v328 = vunpack.c.l.b16 %v308
  %v329 = vunpack.c.h.b16 %v308
  %v330 = vunpack.c.l.b16 %v309
  %v331 = vunpack.c.h.b16 %v309
  %v332 = vunpack.c.l.b16 %v310
  %v333 = vunpack.c.h.b16 %v310
  %v334 = vunpack.c.l.b16 %v311
  %v335 = vunpack.c.h.b16 %v311
  %v336 = vpack.c.b16 %v320, %v320
  %v337 = vpack.c.b16 %v321, %v321
  %v338 = vpack.c.b16 %v322, %v322
  %v339 = vpack.c.b16 %v323, %v323
  %v340 = vpack.c.b16 %v324, %v324
  %v341 = vpack.c.b16 %v325, %v325
  %v342 = vpack.c.b16 %v326, %v326
  %v343 = vpack.c.b16 %v327, %v327
  %v344 = vpack.c.b16 %v328, %v328
  %v345 = vpack.c.b16 %v329, %v329
  %v346 = vpack.c.b16 %v330, %v330
  %v347 = vpack.c.b16 %v331, %v331
  %v348 = vpack.c.b16 %v332, %v332
  %v349 = vpack.c.b16 %v333, %v333
  %v350 = vpack.c.b16 %v334, %v334
  %v351 = vpack.c.b16 %v335, %v335
  %vm368 = vcmask 519168
  %369 = vst.msk [vmem:[%s2] sm:$0xf] %vm368, %v336
  %370 = vst.msk [vmem:[%s2 + $0x4] sm:$0xf] %vm368, %v337
  %371 = vst.msk [vmem:[%s2 + $0x8] sm:$0xf] %vm368, %v338
  %372 = vst.msk [vmem:[%s2 + $0xc] sm:$0xf] %vm368, %v339
  %373 = vst.msk [vmem:[%s2 + $0x10] sm:$0xf] %vm368, %v340
  %374 = vst.msk [vmem:[%s2 + $0x14] sm:$0xf] %vm368, %v341
  %375 = vst.msk [vmem:[%s2 + $0x18] sm:$0xf] %vm368, %v342
  %376 = vst.msk [vmem:[%s2 + $0x1c] sm:$0xf] %vm368, %v343
  %377 = vst.msk [vmem:[%s2 + $0x20] sm:$0xf] %vm368, %v344
  %378 = vst.msk [vmem:[%s2 + $0x24] sm:$0xf] %vm368, %v345
  %379 = vst.msk [vmem:[%s2 + $0x28] sm:$0xf] %vm368, %v346
  %380 = vst.msk [vmem:[%s2 + $0x2c] sm:$0xf] %vm368, %v347
  %381 = vst.msk [vmem:[%s2 + $0x30] sm:$0xf] %vm368, %v348
  %382 = vst.msk [vmem:[%s2 + $0x34] sm:$0xf] %vm368, %v349
  %383 = vst.msk [vmem:[%s2 + $0x38] sm:$0xf] %vm368, %v350
  %384 = vst.msk [vmem:[%s2 + $0x3c] sm:$0xf] %vm368, %v351
  %vm385 = vcmask 523264
  %v386 = vsel %vm385, %v242, 0.0
  %v387 = vsel %vm385, %v245, 0.0
  %v388 = vadd.f32 %v386, %v387
  %v389 = vsel %vm385, %v250, 0.0
  %v390 = vadd.f32 %v388, %v389
  %v391 = vsel %vm385, %v253, 0.0
  %v392 = vadd.f32 %v390, %v391
  %v393 = vsel %vm385, %v258, 0.0
  %v394 = vadd.f32 %v392, %v393
  %v395 = vsel %vm385, %v261, 0.0
  %v396 = vadd.f32 %v394, %v395
  %v397 = vsel %vm385, %v266, 0.0
  %v398 = vadd.f32 %v396, %v397
  %v399 = vsel %vm385, %v269, 0.0
  %v400 = vadd.f32 %v398, %v399
  %v401 = vsel %vm385, %v274, 0.0
  %v402 = vadd.f32 %v400, %v401
  %v403 = vsel %vm385, %v277, 0.0
  %v404 = vadd.f32 %v402, %v403
  %v405 = vsel %vm385, %v282, 0.0
  %v406 = vadd.f32 %v404, %v405
  %v407 = vsel %vm385, %v285, 0.0
  %v408 = vadd.f32 %v406, %v407
  %v409 = vsel %vm385, %v290, 0.0
  %v410 = vadd.f32 %v408, %v409
  %v411 = vsel %vm385, %v293, 0.0
  %v412 = vadd.f32 %v410, %v411
  %v413 = vsel %vm385, %v298, 0.0
  %v414 = vadd.f32 %v412, %v413
  %v415 = vsel %vm385, %v301, 0.0
  %v416 = vadd.f32 %v414, %v415
  %v417 = vrot.slane %v416, 4
  %v418 = vadd.f32 %v416, %v417
  %v419 = vrot.slane %v418, 2
  %v420 = vadd.f32 %v418, %v419
  %v421 = vrot.slane %v420, 1
  %v422 = vadd.f32 %v420, %v421
  %v423 = vmul.f32 %v242, %v242
  %v424 = vmul.f32 %v245, %v245
  %v425 = vmul.f32 %v250, %v250
  %v426 = vmul.f32 %v253, %v253
  %v427 = vmul.f32 %v258, %v258
  %v428 = vmul.f32 %v261, %v261
  %v429 = vmul.f32 %v266, %v266
  %v430 = vmul.f32 %v269, %v269
  %v431 = vmul.f32 %v274, %v274
  %v432 = vmul.f32 %v277, %v277
  %v433 = vmul.f32 %v282, %v282
  %v434 = vmul.f32 %v285, %v285
  %v435 = vmul.f32 %v290, %v290
  %v436 = vmul.f32 %v293, %v293
  %v437 = vmul.f32 %v298, %v298
  %v438 = vmul.f32 %v301, %v301
  %v439 = vsel %vm385, %v423, 0.0
  %v440 = vsel %vm385, %v424, 0.0
  %v441 = vadd.f32 %v439, %v440
  %v442 = vsel %vm385, %v425, 0.0
  %v443 = vadd.f32 %v441, %v442
  %v444 = vsel %vm385, %v426, 0.0
  %v445 = vadd.f32 %v443, %v444
  %v446 = vsel %vm385, %v427, 0.0
  %v447 = vadd.f32 %v445, %v446
  %v448 = vsel %vm385, %v428, 0.0
  %v449 = vadd.f32 %v447, %v448
  %v450 = vsel %vm385, %v429, 0.0
  %v451 = vadd.f32 %v449, %v450
  %v452 = vsel %vm385, %v430, 0.0
  %v453 = vadd.f32 %v451, %v452
  %v454 = vsel %vm385, %v431, 0.0
  %v455 = vadd.f32 %v453, %v454
  %v456 = vsel %vm385, %v432, 0.0
  %v457 = vadd.f32 %v455, %v456
  %v458 = vsel %vm385, %v433, 0.0
  %v459 = vadd.f32 %v457, %v458
  %v460 = vsel %vm385, %v434, 0.0
  %v461 = vadd.f32 %v459, %v460
  %v462 = vsel %vm385, %v435, 0.0
  %v463 = vadd.f32 %v461, %v462
  %v464 = vsel %vm385, %v436, 0.0
  %v465 = vadd.f32 %v463, %v464
  %v466 = vsel %vm385, %v437, 0.0
  %v467 = vadd.f32 %v465, %v466
  %v468 = vsel %vm385, %v438, 0.0
  %v469 = vadd.f32 %v467, %v468
  %v470 = vrot.slane %v469, 4
  %v471 = vadd.f32 %v469, %v470
  %v472 = vrot.slane %v471, 2
  %v473 = vadd.f32 %v471, %v472
  %v474 = vrot.slane %v473, 1
  %v475 = vadd.f32 %v473, %v474
  %vm476 = vcmask 1040384
  %v477 = vsel %vm476, %v422, %v475
  %vm478 = vcmask 517120
  %479 = vst.msk [vmem:[%s3] sm:$0x3] %vm478, %v477
  // Predicated region
  $region10: #{basic_block_forward.7} parent=0 // pred_check
    _
  $region11: #{basic_block_forward.7} parent=0 // pred_check_branch
    %481 = sbr.rel (0) target = $region13
  $region12: #{basic_block_forward.7} parent=0 // pred_region
    _
  $region13: #{basic_block_forward.7} parent=0 // pred_fallthru
    _
  // Predicated region
  $region14: #{basic_block_forward.7} parent=0 // pred_check
    _
  $region15: #{basic_block_forward.7} parent=0 // pred_check_branch
    %483 = sbr.rel (0) target = $region17
  $region16: #{basic_block_forward.7} parent=0 // pred_region
    _
  $region17: #{basic_block_forward.7} parent=0 // pred_fallthru
    _
  // Predicated region
  $region18: #{basic_block_forward.7} parent=0 // pred_check
    _
  $region19: #{basic_block_forward.7} parent=0 // pred_check_branch
    %485 = sbr.rel (0) target = $region21
  $region20: #{basic_block_forward.7} parent=0 // pred_region
    _
  $region21: #{basic_block_forward.7} parent=0 // pred_fallthru
    _
  // Predicated region
  $region22: #{basic_block_forward.7} parent=0 // pred_check
    _
  $region23: #{basic_block_forward.7} parent=0 // pred_check_branch
    %487 = sbr.rel (0) target = $region25
  $region24: #{basic_block_forward.7} parent=0 // pred_region
    _
  $region25: #{basic_block_forward.7} parent=0 // pred_fallthru
    _

// kernel: basic_block_forward.10
$region0: #{basic_block_forward.10}
  #allocation0 [shape = 'u32[]', space=smem, size = 0x4, offset = 0x4, fixed_abs, tag = 'smem constant byte address 0x4 - core index']
  #allocation1 [shape = 'u32[144,128]{1,0:T(1,128)}', space=vmem, size = 0x12000, scoped, tag = 'internal scratch']
  %s0 = inlined_call_operand.vmem [shape: bf16[16,128], index: 0, kind: input, shape index: {}]
  %s1 = inlined_call_operand.vmem [shape: f32[1,128], index: 1, kind: input, shape index: {}]
  %s2 = inlined_call_operand.vmem [shape: f32[1,128], index: 2, kind: input, shape index: {}]
  %s3 = inlined_call_operand.vmem [shape: bf16[16,128], index: 3, kind: output, shape index: {}]
  %s4 = sld [smem:[#allocation0]]
  $region22: #{basic_block_forward.10} parent=0
    _
  %s6 = ssub.s32 1, %s4
  %s7 = scalar_select 0, %s6, %s4
  // Predicated region
  $region2: #{basic_block_forward.10} parent=0 // pred_check
    _
  $region3: #{basic_block_forward.10} parent=0 // pred_check_branch
    %9 = sbr.rel (0) target = $region5
  $region4: #{basic_block_forward.10} parent=0 // pred_region
    _
  $region5: #{basic_block_forward.10} parent=0 // pred_fallthru
    _
  // Predicated region
  $region6: #{basic_block_forward.10} parent=0 // pred_check
    _
  $region7: #{basic_block_forward.10} parent=0 // pred_check_branch
    %11 = sbr.rel (0) target = $region9
  $region8: #{basic_block_forward.10} parent=0 // pred_region
    _
  $region9: #{basic_block_forward.10} parent=0 // pred_fallthru
    _
  // Predicated region
  $region10: #{basic_block_forward.10} parent=0 // pred_check
    _
  $region11: #{basic_block_forward.10} parent=0 // pred_check_branch
    %13 = sbr.rel (0) target = $region13
  $region12: #{basic_block_forward.10} parent=0 // pred_region
    _
  $region13: #{basic_block_forward.10} parent=0 // pred_fallthru
    _
  %v14 = vld [vmem:[%s0] sm:$0xf]
  %v15 = vld [vmem:[%s0 + $0x4] sm:$0xf]
  %v16 = vunpack.c.l.bf16 %v14
  %v17 = vunpack.c.l.bf16 %v15
  %v18 = vld [vmem:[%s1] sm:$0x1]
  %v20 = vlaneseq
  %v21 = vshrl.u32 %v20, 7
  %v22 = vsub.s32 0, %v21
  %v23 = vrot.slane %v18, %v22
  %v25 = vmul.f32 %v16, %v23
  %v26 = vmul.f32 %v17, %v23
  %v27 = vld [vmem:[%s2] sm:$0x1]
  %v29 = vlaneseq
  %v30 = vshrl.u32 %v29, 7
  %v31 = vsub.s32 0, %v30
  %v32 = vrot.slane %v27, %v31
  %v34 = vadd.f32 %v25, %v32
  %v35 = vadd.f32 %v26, %v32
  %vm36 = vcmp.ge.f32.partialorder %v34, 0.0
  %vm37 = vcmp.ge.f32.partialorder %v35, 0.0
  %v38 = vmul.f32 %v34, 0.01
  %v39 = vmul.f32 %v35, 0.01
  %v40 = vsel %vm36, %v34, %v38
  %v41 = vsel %vm37, %v35, %v39
  %v42 = vpack.c.bf16 %v41, %v40
  %v44 = vunpack.c.l.b16 %v42
  %v45 = vunpack.c.h.b16 %v42
  %v46 = vpack.c.b16 %v44, %v44
  %v47 = vpack.c.b16 %v45, %v45
  %50 = vst [vmem:[%s3] sm:$0xf] %v46
  %51 = vst [vmem:[%s3 + $0x4] sm:$0xf] %v47
  // Predicated region
  $region14: #{basic_block_forward.10} parent=0 // pred_check
    _
  $region15: #{basic_block_forward.10} parent=0 // pred_check_branch
    %53 = sbr.rel (0) target = $region17
  $region16: #{basic_block_forward.10} parent=0 // pred_region
    _
  $region17: #{basic_block_forward.10} parent=0 // pred_fallthru
    _
  // Predicated region
  $region18: #{basic_block_forward.10} parent=0 // pred_check
    _
  $region19: #{basic_block_forward.10} parent=0 // pred_check_branch
    %55 = sbr.rel (0) target = $region21
  $region20: #{basic_block_forward.10} parent=0 // pred_region
    _
  $region21: #{basic_block_forward.10} parent=0 // pred_fallthru
    _

// kernel: basic_block_forward.11
$region0: #{basic_block_forward.11}
  #allocation0 [shape = 'u32[]', space=smem, size = 0x4, offset = 0x4, fixed_abs, tag = 'smem constant byte address 0x4 - core index']
  #allocation1 [shape = 'u32[144,128]{1,0:T(1,128)}', space=vmem, size = 0x12000, scoped, tag = 'internal scratch']
  %s0 = inlined_call_operand.vmem [shape: bf16[2,1,6,6,64], index: 0, kind: input, shape index: {}]
  %s1 = inlined_call_operand.vmem [shape: bf16[576,64], index: 1, kind: input, shape index: {}]
  %s2 = inlined_call_operand.vmem [shape: bf16[2,16,64], index: 2, kind: output, shape index: {0}]
  %s3 = inlined_call_operand.vmem [shape: f32[2,2,64], index: 3, kind: output, shape index: {1}]
  %4 = xla_tuple %s2, %s3
  %s5 = sld [smem:[#allocation0]]
  $region49: #{basic_block_forward.11} parent=0
    _
  %s7 = ssub.s32 1, %s5
  %s8 = scalar_select 0, %s7, %s5
  loop: start=0, step=1, limit=4
  $region2: #{basic_block_forward.11} parent=0 // loop_pre_header
    _
  $region3: #{basic_block_forward.11} parent=0 // loop_header
    %s10 = sphi 0, %s14
    %p11 = scmp.ge.s32.totalorder %s10, 4
    %s20 = sphi 0, %s22
    %s23 = sphi 0, %s20
    %s24 = sphi 0, %s23
    %s40 = sphi 0, %s24
    %s44 = sphi 0, %s44
    %s46 = sphi 0, %s44
    %s47 = sphi 0, %s46
    %s61 = sphi 0, %s47
    %s67 = sphi 0, %s69
    %s70 = sphi 0, %s67
    %s71 = sphi 0, %s70
    %s87 = sphi 0, %s71
    %s93 = sphi 0, %s95
    %s96 = sphi 0, %s93
    %s97 = sphi 0, %s96
    %s113 = sphi 0, %s97
  $region4: #{basic_block_forward.11} parent=0 // loop_header_branch
    %13 = sbr.rel (%p11) target = $region8
  $region5: #{basic_block_forward.11} parent=0 // loop_body
    %s15 = ssub.s32 %s10, 1
    %s16 = ssub.s32 %s10, 2
    %s17 = sadd.s32 %s10, 1
    %s18 = ssub.s32 %s10, %s17
    %p19 = scmp.eq.s32.totalorder %s18, 0
    %s21 = sadd.s32 %s20, 1
    %s22 = scalar_select %p19, %s20, %s21
    %p25 = pneg %p19
    %p26 = scmp.eq.s32.totalorder %s10, 1
    %p27 = por %p25, %p26
    %p28 = scmp.ne.s32.totalorder %s20, %s23
    %p29 = scmp.eq.s32.totalorder %s10, 0
    %p30 = por %p28, %p29
    %p31 = scmp.ne.s32.totalorder %s20, %s23
    %p32 = scmp.eq.s32.totalorder %s15, 1
    %p33 = por %p31, %p32
    %p34 = scmp.ne.s32.totalorder %s23, %s24
    %p35 = scmp.eq.s32.totalorder %s15, 0
    %p36 = por %p34, %p35
    %p37 = scmp.ne.s32.totalorder %s23, %s24
    %p38 = scmp.eq.s32.totalorder %s16, 1
    %p39 = por %p37, %p38
    %p41 = scmp.ne.s32.totalorder %s24, %s40
    %p42 = scmp.eq.s32.totalorder %s16, 0
    %p43 = por %p41, %p42
    %s45 = sadd.s32 %s44, 1
    %p48 = scmp.eq.s32.totalorder %s10, 1
    %p49 = scmp.ne.s32.totalorder %s44, %s46
    %p50 = scmp.eq.s32.totalorder %s10, 0
    %p51 = por %p49, %p50
    %p52 = scmp.ne.s32.totalorder %s44, %s46
    %p53 = scmp.eq.s32.totalorder %s15, 1
    %p54 = por %p52, %p53
    %p55 = scmp.ne.s32.totalorder %s46, %s47
    %p56 = scmp.eq.s32.totalorder %s15, 0
    %p57 = por %p55, %p56
    %p58 = scmp.ne.s32.totalorder %s46, %s47
    %p59 = scmp.eq.s32.totalorder %s16, 1
    %p60 = por %p58, %p59
    %p62 = scmp.ne.s32.totalorder %s47, %s61
    %p63 = scmp.eq.s32.totalorder %s16, 0
    %p64 = por %p62, %p63
    %s65 = ssub.s32 %s10, %s17
    %p66 = scmp.eq.s32.totalorder %s65, 0
    %s68 = sadd.s32 %s67, 1
    %s69 = scalar_select %p66, %s67, %s68
    %p72 = pneg %p66
    %p73 = scmp.eq.s32.totalorder %s10, 1
    %p74 = por %p72, %p73
    %p75 = scmp.ne.s32.totalorder %s67, %s70
    %p76 = scmp.eq.s32.totalorder %s10, 0
    %p77 = por %p75, %p76
    %p78 = scmp.ne.s32.totalorder %s67, %s70
    %p79 = scmp.eq.s32.totalorder %s15, 1
    %p80 = por %p78, %p79
    %p81 = scmp.ne.s32.totalorder %s70, %s71
    %p82 = scmp.eq.s32.totalorder %s15, 0
    %p83 = por %p81, %p82
    %p84 = scmp.ne.s32.totalorder %s70, %s71
    %p85 = scmp.eq.s32.totalorder %s16, 1
    %p86 = por %p84, %p85
    %p88 = scmp.ne.s32.totalorder %s71, %s87
    %p89 = scmp.eq.s32.totalorder %s16, 0
    %p90 = por %p88, %p89
    %s91 = ssub.s32 %s10, %s17
    %p92 = scmp.eq.s32.totalorder %s91, 0
    %s94 = sadd.s32 %s93, 1
    %s95 = scalar_select %p92, %s93, %s94
    %p98 = pneg %p92
    %p99 = scmp.eq.s32.totalorder %s10, 1
    %p100 = por %p98, %p99
    %p101 = scmp.ne.s32.totalorder %s93, %s96
    %p102 = scmp.eq.s32.totalorder %s10, 0
    %p103 = por %p101, %p102
    %p104 = scmp.ne.s32.totalorder %s93, %s96
    %p105 = scmp.eq.s32.totalorder %s15, 1
    %p106 = por %p104, %p105
    %p107 = scmp.ne.s32.totalorder %s96, %s97
    %p108 = scmp.eq.s32.totalorder %s15, 0
    %p109 = por %p107, %p108
    %p110 = scmp.ne.s32.totalorder %s96, %s97
    %p111 = scmp.eq.s32.totalorder %s16, 1
    %p112 = por %p110, %p111
    %p114 = scmp.ne.s32.totalorder %s97, %s113
    %p115 = scmp.eq.s32.totalorder %s16, 0
    %p116 = por %p114, %p115
    %p117 = scmp.le.s32.totalorder 1, %s10
    %p118 = scmp.lt.s32.totalorder %s10, 3
    %p119 = pnand %p117, %p118
    %p120 = pneg %p119
    // Predicated region
    $region9: #{basic_block_forward.11} parent=5 // pred_check
      _
    $region10: #{basic_block_forward.11} parent=5 // pred_check_branch
      %122 = sbr.rel (%p119) target = $region12
    $region11: #{basic_block_forward.11} parent=5 // pred_region
      %s123 = ssub.s32 %s10, 1
      // Predicated region
      $region13: #{basic_block_forward.11} parent=11 // pred_check
        %p124 = pneg %p57
      $region14: #{basic_block_forward.11} parent=11 // pred_check_branch
        %126 = sbr.rel (%p124) target = $region16
      $region15: #{basic_block_forward.11} parent=11 // pred_region
        _
      $region16: #{basic_block_forward.11} parent=11 // pred_fallthru
        _
    $region12: #{basic_block_forward.11} parent=5 // pred_fallthru
      _
    %p127 = scmp.lt.s32.totalorder %s10, 2
    // Predicated region
    $region17: #{basic_block_forward.11} parent=5 // pred_check
      %p128 = pneg %p127
    $region18: #{basic_block_forward.11} parent=5 // pred_check_branch
      %130 = sbr.rel (%p128) target = $region20
    $region19: #{basic_block_forward.11} parent=5 // pred_region
      // Predicated region
      $region21: #{basic_block_forward.11} parent=19 // pred_check
        %p131 = pneg %p30
      $region22: #{basic_block_forward.11} parent=19 // pred_check_branch
        %133 = sbr.rel (%p131) target = $region24
      $region23: #{basic_block_forward.11} parent=19 // pred_region
        %p134 = scmp.lt.s32.totalorder %s10, 1
        %s135 = scalar_select %p134, %s10, 1
        %s136 = smul.addr %s135, 6
        %s137 = smul.addr %s136, 4
        %s138 = scalar_lea.vmem %s0, %s137
      $region24: #{basic_block_forward.11} parent=19 // pred_fallthru
        _
    $region20: #{basic_block_forward.11} parent=5 // pred_fallthru
      _
    %p139 = scmp.le.s32.totalorder 1, %s10
    %p140 = scmp.lt.s32.totalorder %s10, 3
    %p141 = pnand %p139, %p140
    %p142 = pneg %p141
    // Predicated region
    $region25: #{basic_block_forward.11} parent=5 // pred_check
      _
    $region26: #{basic_block_forward.11} parent=5 // pred_check_branch
      %144 = sbr.rel (%p141) target = $region28
    $region27: #{basic_block_forward.11} parent=5 // pred_region
      %s145 = ssub.s32 %s10, 1
      %p146 = scmp.lt.s32.totalorder %s15, 1
      %s147 = scalar_select %p146, %s15, 1
      %s148 = smul.addr %s147, 6
      %s149 = smul.addr %s148, 4
      %s150 = scalar_lea.vmem %s0, %s149
      %p151 = pneg %p36
      %p152 = pneg %p33
      %p153 = pneg %p57
      %p154 = pneg %p54
      %p155 = pneg %p83
      %p156 = pneg %p80
      %p157 = scmp.lt.s32.totalorder %s15, 1
      %s158 = scalar_select %p157, %s15, 1
      %s159 = smul.addr %s158, 2
      %s160 = smul.addr %s159, 4
      %s161 = scalar_lea.vmem %s2, %s160
      %p162 = pneg %p109
      %p163 = pneg %p106
      %p164 = scmp.lt.s32.totalorder %s15, 1
      %s165 = scalar_select %p164, %s15, 1
      %s166 = smul.addr %s165, 2
      %s167 = scalar_lea.vmem %s3, %s166
      %p168 = scmp.lt.s32.totalorder %s15, 1
      %s169 = scalar_select %p168, %s15, 1
      %s170 = smul.addr %s169, 6
      %s171 = smul.addr %s170, 4
      %s172 = scalar_lea.vmem %s0, %s171
      %p173 = scmp.lt.s32.totalorder %s15, 1
      %s174 = scalar_select %p173, %s15, 1
      %s175 = smul.addr %s174, 2
      %s176 = smul.addr %s175, 4
      %s177 = scalar_lea.vmem %s2, %s176
      %p178 = scmp.lt.s32.totalorder %s15, 1
      %s179 = scalar_select %p178, %s15, 1
      %s180 = smul.addr %s179, 2
      %s181 = scalar_lea.vmem %s3, %s180
      %v183 = vld [vmem:[%s172] sm:$0x3]
      %v184 = vld [vmem:[%s172 + $0x4] sm:$0x3]
      %v185 = vld [vmem:[%s172 + $0x8] sm:$0x3]
      %v186 = vld [vmem:[%s172 + $0xc] sm:$0x3]
      %v187 = vld [vmem:[%s172] sm:$0x7]
      %v188 = vld [vmem:[%s172 + $0x4] sm:$0x7]
      %v189 = vld [vmem:[%s172 + $0x8] sm:$0x7]
      %v190 = vld [vmem:[%s172 + $0xc] sm:$0x7]
      %v191 = vld [vmem:[%s172] sm:$0x6]
      %v192 = vld [vmem:[%s172 + $0x4] sm:$0x6]
      %v193 = vld [vmem:[%s172 + $0x8] sm:$0x6]
      %v194 = vld [vmem:[%s172 + $0xc] sm:$0x6]
      %s195 = scalar_lea.vmem %s172, 4
      %v196 = vld [vmem:[%s195] sm:$0x3]
      %v197 = vld [vmem:[%s195 + $0x4] sm:$0x3]
      %v198 = vld [vmem:[%s195 + $0x8] sm:$0x3]
      %v199 = vld [vmem:[%s195 + $0xc] sm:$0x3]
      %v200 = vld [vmem:[%s195] sm:$0x7]
      %v201 = vld [vmem:[%s195 + $0x4] sm:$0x7]
      %v202 = vld [vmem:[%s195 + $0x8] sm:$0x7]
      %v203 = vld [vmem:[%s195 + $0xc] sm:$0x7]
      %v204 = vld [vmem:[%s195] sm:$0x6]
      %v205 = vld [vmem:[%s195 + $0x4] sm:$0x6]
      %v206 = vld [vmem:[%s195 + $0x8] sm:$0x6]
      %v207 = vld [vmem:[%s195 + $0xc] sm:$0x6]
      %s208 = scalar_lea.vmem %s172, 8
      %v209 = vld [vmem:[%s208] sm:$0x3]
      %v210 = vld [vmem:[%s208 + $0x4] sm:$0x3]
      %v211 = vld [vmem:[%s208 + $0x8] sm:$0x3]
      %v212 = vld [vmem:[%s208 + $0xc] sm:$0x3]
      %v213 = vld [vmem:[%s208] sm:$0x7]
      %v214 = vld [vmem:[%s208 + $0x4] sm:$0x7]
      %v215 = vld [vmem:[%s208 + $0x8] sm:$0x7]
      %v216 = vld [vmem:[%s208 + $0xc] sm:$0x7]
      %v217 = vld [vmem:[%s208] sm:$0x6]
      %v218 = vld [vmem:[%s208 + $0x4] sm:$0x6]
      %v219 = vld [vmem:[%s208 + $0x8] sm:$0x6]
      %v220 = vld [vmem:[%s208 + $0xc] sm:$0x6]
      %v225 = vunpack.c.l.b16 %v187
      %v226 = vunpack.c.l.b16 %v188
      %v227 = vunpack.c.l.b16 %v189
      %v228 = vunpack.c.l.b16 %v190
      %v229 = vpack.c.b16 %v225, %v225
      %v230 = vpack.c.b16 %v226, %v226
      %v231 = vpack.c.b16 %v227, %v227
      %v232 = vpack.c.b16 %v228, %v228
      %v234 = vshrl.u32 %v229, 16
      %v236 = vshll.u32 %v229, 16
      %v238 = vrot.slane %v236, 1
      %v239 = vor.u32 %v234, %v238
      %v241 = vshrl.u32 %v230, 16
      %v243 = vshll.u32 %v230, 16
      %v245 = vrot.slane %v243, 1
      %v246 = vor.u32 %v241, %v245
      %v248 = vshrl.u32 %v231, 16
      %v250 = vshll.u32 %v231, 16
      %v252 = vrot.slane %v250, 1
      %v253 = vor.u32 %v248, %v252
      %v255 = vshrl.u32 %v232, 16
      %v257 = vshll.u32 %v232, 16
      %v259 = vrot.slane %v257, 1
      %v260 = vor.u32 %v255, %v259
      %261 = vrot.lane.b32.xlu0 %v239, 64
      %v262 = vpop.permute.xlu0 %261
      %263 = vrot.lane.b32.xlu0 %v246, 64
      %v264 = vpop.permute.xlu0 %263
      %265 = vrot.lane.b32.xlu0 %v253, 64
      %v266 = vpop.permute.xlu0 %265
      %267 = vrot.lane.b32.xlu0 %v260, 64
      %v268 = vpop.permute.xlu0 %267
      %v273 = vunpack.c.l.b16 %v191
      %v274 = vunpack.c.l.b16 %v192
      %v275 = vunpack.c.l.b16 %v193
      %v276 = vunpack.c.l.b16 %v194
      %v277 = vpack.c.b16 %v273, %v273
      %v278 = vpack.c.b16 %v274, %v274
      %v279 = vpack.c.b16 %v275, %v275
      %v280 = vpack.c.b16 %v276, %v276
      %v281 = vrot.slane %v277, 1
      %v282 = vrot.slane %v278, 1
      %v283 = vrot.slane %v279, 1
      %v284 = vrot.slane %v280, 1
      %v289 = vunpack.c.l.b16 %v196
      %v290 = vunpack.c.l.b16 %v197
      %v291 = vunpack.c.l.b16 %v198
      %v292 = vunpack.c.l.b16 %v199
      %v293 = vpack.c.b16 %v289, %v289
      %v294 = vpack.c.b16 %v290, %v290
      %v295 = vpack.c.b16 %v291, %v291
      %v296 = vpack.c.b16 %v292, %v292
      %297 = vrot.lane.b32.xlu0 %v293, 64
      %v298 = vpop.permute.xlu0 %297
      %299 = vrot.lane.b32.xlu0 %v294, 64
      %v300 = vpop.permute.xlu0 %299
      %301 = vrot.lane.b32.xlu0 %v295, 64
      %v302 = vpop.permute.xlu0 %301
      %303 = vrot.lane.b32.xlu0 %v296, 64
      %v304 = vpop.permute.xlu0 %303
      %v309 = vunpack.c.l.b16 %v200
      %v310 = vunpack.c.l.b16 %v201
      %v311 = vunpack.c.l.b16 %v202
      %v312 = vunpack.c.l.b16 %v203
      %v313 = vpack.c.b16 %v309, %v309
      %v314 = vpack.c.b16 %v310, %v310
      %v315 = vpack.c.b16 %v311, %v311
      %v316 = vpack.c.b16 %v312, %v312
      %v318 = vshrl.u32 %v313, 16
      %v320 = vshll.u32 %v313, 16
      %v322 = vrot.slane %v320, 1
      %v323 = vor.u32 %v318, %v322
      %v325 = vshrl.u32 %v314, 16
      %v327 = vshll.u32 %v314, 16
      %v329 = vrot.slane %v327, 1
      %v330 = vor.u32 %v325, %v329
      %v332 = vshrl.u32 %v315, 16
      %v334 = vshll.u32 %v315, 16
      %v336 = vrot.slane %v334, 1
      %v337 = vor.u32 %v332, %v336
      %v339 = vshrl.u32 %v316, 16
      %v341 = vshll.u32 %v316, 16
      %v343 = vrot.slane %v341, 1
      %v344 = vor.u32 %v339, %v343
      %v349 = vunpack.c.l.b16 %v204
      %v350 = vunpack.c.l.b16 %v205
      %v351 = vunpack.c.l.b16 %v206
      %v352 = vunpack.c.l.b16 %v207
      %v353 = vpack.c.b16 %v349, %v349
      %v354 = vpack.c.b16 %v350, %v350
      %v355 = vpack.c.b16 %v351, %v351
      %v356 = vpack.c.b16 %v352, %v352
      %v357 = vrot.slane %v353, 1
      %v358 = vrot.slane %v354, 1
      %v359 = vrot.slane %v355, 1
      %v360 = vrot.slane %v356, 1
      %361 = vrot.lane.b32.xlu0 %v357, 64
      %v362 = vpop.permute.xlu0 %361
      %363 = vrot.lane.b32.xlu0 %v358, 64
      %v364 = vpop.permute.xlu0 %363
      %365 = vrot.lane.b32.xlu0 %v359, 64
      %v366 = vpop.permute.xlu0 %365
      %367 = vrot.lane.b32.xlu0 %v360, 64
      %v368 = vpop.permute.xlu0 %367
      %v373 = vunpack.c.l.b16 %v213
      %v374 = vunpack.c.l.b16 %v214
      %v375 = vunpack.c.l.b16 %v215
      %v376 = vunpack.c.l.b16 %v216
      %v377 = vpack.c.b16 %v373, %v373
      %v378 = vpack.c.b16 %v374, %v374
      %v379 = vpack.c.b16 %v375, %v375
      %v380 = vpack.c.b16 %v376, %v376
      %v382 = vshrl.u32 %v377, 16
      %v384 = vshll.u32 %v377, 16
      %v386 = vrot.slane %v384, 1
      %v387 = vor.u32 %v382, %v386
      %v389 = vshrl.u32 %v378, 16
      %v391 = vshll.u32 %v378, 16
      %v393 = vrot.slane %v391, 1
      %v394 = vor.u32 %v389, %v393
      %v396 = vshrl.u32 %v379, 16
      %v398 = vshll.u32 %v379, 16
      %v400 = vrot.slane %v398, 1
      %v401 = vor.u32 %v396, %v400
      %v403 = vshrl.u32 %v380, 16
      %v405 = vshll.u32 %v380, 16
      %v407 = vrot.slane %v405, 1
      %v408 = vor.u32 %v403, %v407
      %409 = vrot.lane.b32.xlu0 %v387, 64
      %v410 = vpop.permute.xlu0 %409
      %411 = vrot.lane.b32.xlu0 %v394, 64
      %v412 = vpop.permute.xlu0 %411
      %413 = vrot.lane.b32.xlu0 %v401, 64
      %v414 = vpop.permute.xlu0 %413
      %415 = vrot.lane.b32.xlu0 %v408, 64
      %v416 = vpop.permute.xlu0 %415
      %v421 = vunpack.c.l.b16 %v217
      %v422 = vunpack.c.l.b16 %v218
      %v423 = vunpack.c.l.b16 %v219
      %v424 = vunpack.c.l.b16 %v220
      %v425 = vpack.c.b16 %v421, %v421
      %v426 = vpack.c.b16 %v422, %v422
      %v427 = vpack.c.b16 %v423, %v423
      %v428 = vpack.c.b16 %v424, %v424
      %v429 = vrot.slane %v425, 1
      %v430 = vrot.slane %v426, 1
      %v431 = vrot.slane %v427, 1
      %v432 = vrot.slane %v428, 1
      %vm433 = vcmask 523264
      %v436 = vsel %vm433, %v183, %v262
      %v439 = vsel %vm433, %v184, %v264
      %v442 = vsel %vm433, %v185, %v266
      %v445 = vsel %vm433, %v186, %v268
      %v448 = vsel %vm433, %v281, %v298
      %v451 = vsel %vm433, %v282, %v300
      %v454 = vsel %vm433, %v283, %v302
      %v457 = vsel %vm433, %v284, %v304
      %v460 = vsel %vm433, %v323, %v362
      %v463 = vsel %vm433, %v330, %v364
      %v466 = vsel %vm433, %v337, %v366
      %v469 = vsel %vm433, %v344, %v368
      %v472 = vsel %vm433, %v209, %v410
      %v475 = vsel %vm433, %v210, %v412
      %v478 = vsel %vm433, %v211, %v414
      %v481 = vsel %vm433, %v212, %v416
      %v498 = vcombine.low %v436, %v448
      %v499 = vcombine.low %v460, %v472
      %v501 = vunpack.c.l.s4 1983009808
      %v502 = vunpack.c.0.s8 %v501
      %v503 = vlaneseq
      %v504 = vshrl.u32 %v503, 7
      %v505 = vsub.s32 %v502, %v504
      %v506 = vrot.slane %v498, %v505
      %v508 = vunpack.c.l.s4 1983009808
      %v509 = vunpack.c.0.s8 %v508
      %v510 = vlaneseq
      %v511 = vshrl.u32 %v510, 7
      %v512 = vsub.s32 %v509, %v511
      %v513 = vrot.slane %v499, %v512
      %v514 = vcombine.low %v506, %v513
      %v516 = vunpack.c.l.s4 1983009808
      %v517 = vunpack.c.0.s8 %v516
      %v518 = vlaneseq
      %v519 = vshrl.u32 %v518, 7
      %v520 = vsub.s32 %v517, %v519
      %v521 = vrot.slane %v429, %v520
      %v522 = vcombine.low %v439, %v451
      %v523 = vcombine.low %v463, %v475
      %v525 = vunpack.c.l.s4 1983009808
      %v526 = vunpack.c.0.s8 %v525
      %v527 = vlaneseq
      %v528 = vshrl.u32 %v527, 7
      %v529 = vsub.s32 %v526, %v528
      %v530 = vrot.slane %v522, %v529
      %v532 = vunpack.c.l.s4 1983009808
      %v533 = vunpack.c.0.s8 %v532
      %v534 = vlaneseq
      %v535 = vshrl.u32 %v534, 7
      %v536 = vsub.s32 %v533, %v535
      %v537 = vrot.slane %v523, %v536
      %v538 = vcombine.low %v530, %v537
      %v540 = vunpack.c.l.s4 1983009808
      %v541 = vunpack.c.0.s8 %v540
      %v542 = vlaneseq
      %v543 = vshrl.u32 %v542, 7
      %v544 = vsub.s32 %v541, %v543
      %v545 = vrot.slane %v430, %v544
      %v546 = vcombine.low %v442, %v454
      %v547 = vcombine.low %v466, %v478
      %v549 = vunpack.c.l.s4 1983009808
      %v550 = vunpack.c.0.s8 %v549
      %v551 = vlaneseq
      %v552 = vshrl.u32 %v551, 7
      %v553 = vsub.s32 %v550, %v552
      %v554 = vrot.slane %v546, %v553
      %v556 = vunpack.c.l.s4 1983009808
      %v557 = vunpack.c.0.s8 %v556
      %v558 = vlaneseq
      %v559 = vshrl.u32 %v558, 7
      %v560 = vsub.s32 %v557, %v559
      %v561 = vrot.slane %v547, %v560
      %v562 = vcombine.low %v554, %v561
      %v564 = vunpack.c.l.s4 1983009808
      %v565 = vunpack.c.0.s8 %v564
      %v566 = vlaneseq
      %v567 = vshrl.u32 %v566, 7
      %v568 = vsub.s32 %v565, %v567
      %v569 = vrot.slane %v431, %v568
      %v570 = vcombine.low %v445, %v457
      %v571 = vcombine.low %v469, %v481
      %v573 = vunpack.c.l.s4 1983009808
      %v574 = vunpack.c.0.s8 %v573
      %v575 = vlaneseq
      %v576 = vshrl.u32 %v575, 7
      %v577 = vsub.s32 %v574, %v576
      %v578 = vrot.slane %v570, %v577
      %v580 = vunpack.c.l.s4 1983009808
      %v581 = vunpack.c.0.s8 %v580
      %v582 = vlaneseq
      %v583 = vshrl.u32 %v582, 7
      %v584 = vsub.s32 %v581, %v583
      %v585 = vrot.slane %v571, %v584
      %v586 = vcombine.low %v578, %v585
      %v588 = vunpack.c.l.s4 1983009808
      %v589 = vunpack.c.0.s8 %v588
      %v590 = vlaneseq
      %v591 = vshrl.u32 %v590, 7
      %v592 = vsub.s32 %v589, %v591
      %v593 = vrot.slane %v432, %v592
      %v594 = vld [vmem:[%s1] sm:$0xf]
      %v595 = vld [vmem:[%s1 + $0x4] sm:$0xf]
      %v596 = vld [vmem:[%s1 + $0x8] sm:$0xf]
      %v597 = vld [vmem:[%s1 + $0xc] sm:$0xf]
      %v598 = vld [vmem:[%s1 + $0x10] sm:$0xf]
      %v599 = vld [vmem:[%s1 + $0x14] sm:$0xf]
      %v600 = vld [vmem:[%s1 + $0x18] sm:$0xf]
      %v601 = vld [vmem:[%s1 + $0x1c] sm:$0xf]
      %v602 = vld [vmem:[%s1 + $0x20] sm:$0xf]
      %v603 = vld [vmem:[%s1 + $0x24] sm:$0xf]
      %v604 = vld [vmem:[%s1 + $0x28] sm:$0xf]
      %v605 = vld [vmem:[%s1 + $0x2c] sm:$0xf]
      %v606 = vld [vmem:[%s1 + $0x30] sm:$0xf]
      %v607 = vld [vmem:[%s1 + $0x34] sm:$0xf]
      %v608 = vld [vmem:[%s1 + $0x38] sm:$0xf]
      %v609 = vld [vmem:[%s1 + $0x3c] sm:$0xf]
      %v610 = vld [vmem:[%s1 + $0x40] sm:$0xf]
      %v611 = vld [vmem:[%s1 + $0x44] sm:$0xf]
      %v612 = vld [vmem:[%s1 + $0x48] sm:$0xf]
      %v613 = vld [vmem:[%s1 + $0x4c] sm:$0xf]
      %v614 = vld [vmem:[%s1 + $0x50] sm:$0xf]
      %v615 = vld [vmem:[%s1 + $0x54] sm:$0xf]
      %v616 = vld [vmem:[%s1 + $0x58] sm:$0xf]
      %v617 = vld [vmem:[%s1 + $0x5c] sm:$0xf]
      %v618 = vld [vmem:[%s1 + $0x60] sm:$0xf]
      %v619 = vld [vmem:[%s1 + $0x64] sm:$0xf]
      %v620 = vld [vmem:[%s1 + $0x68] sm:$0xf]
      %v621 = vld [vmem:[%s1 + $0x6c] sm:$0xf]
      %v622 = vld [vmem:[%s1 + $0x70] sm:$0xf]
      %v623 = vld [vmem:[%s1 + $0x74] sm:$0xf]
      %v624 = vld [vmem:[%s1 + $0x78] sm:$0xf]
      %v625 = vld [vmem:[%s1 + $0x7c] sm:$0xf]
      %v626 = vld [vmem:[%s1 + $0x80] sm:$0xf]
      %v627 = vld [vmem:[%s1 + $0x84] sm:$0xf]
      %v628 = vld [vmem:[%s1 + $0x88] sm:$0xf]
      %v629 = vld [vmem:[%s1 + $0x8c] sm:$0xf]
      %v630 = vld [vmem:[%s1 + $0x90] sm:$0xf]
      %v631 = vld [vmem:[%s1 + $0x94] sm:$0xf]
      %v632 = vld [vmem:[%s1 + $0x98] sm:$0xf]
      %v633 = vld [vmem:[%s1 + $0x9c] sm:$0xf]
      %v634 = vld [vmem:[%s1 + $0xa0] sm:$0xf]
      %v635 = vld [vmem:[%s1 + $0xa4] sm:$0xf]
      %v636 = vld [vmem:[%s1 + $0xa8] sm:$0xf]
      %v637 = vld [vmem:[%s1 + $0xac] sm:$0xf]
      %v638 = vld [vmem:[%s1 + $0xb0] sm:$0xf]
      %v639 = vld [vmem:[%s1 + $0xb4] sm:$0xf]
      %v640 = vld [vmem:[%s1 + $0xb8] sm:$0xf]
      %v641 = vld [vmem:[%s1 + $0xbc] sm:$0xf]
      %v642 = vld [vmem:[%s1 + $0xc0] sm:$0xf]
      %v643 = vld [vmem:[%s1 + $0xc4] sm:$0xf]
      %v644 = vld [vmem:[%s1 + $0xc8] sm:$0xf]
      %v645 = vld [vmem:[%s1 + $0xcc] sm:$0xf]
      %v646 = vld [vmem:[%s1 + $0xd0] sm:$0xf]
      %v647 = vld [vmem:[%s1 + $0xd4] sm:$0xf]
      %v648 = vld [vmem:[%s1 + $0xd8] sm:$0xf]
      %v649 = vld [vmem:[%s1 + $0xdc] sm:$0xf]
      %v650 = vld [vmem:[%s1 + $0xe0] sm:$0xf]
      %v651 = vld [vmem:[%s1 + $0xe4] sm:$0xf]
      %v652 = vld [vmem:[%s1 + $0xe8] sm:$0xf]
      %v653 = vld [vmem:[%s1 + $0xec] sm:$0xf]
      %v654 = vld [vmem:[%s1 + $0xf0] sm:$0xf]
      %v655 = vld [vmem:[%s1 + $0xf4] sm:$0xf]
      %v656 = vld [vmem:[%s1 + $0xf8] sm:$0xf]
      %v657 = vld [vmem:[%s1 + $0xfc] sm:$0xf]
      %v658 = vld [vmem:[%s1 + $0x100] sm:$0xf]
      %v659 = vld [vmem:[%s1 + $0x104] sm:$0xf]
      %v660 = vld [vmem:[%s1 + $0x108] sm:$0xf]
      %v661 = vld [vmem:[%s1 + $0x10c] sm:$0xf]
      %v662 = vld [vmem:[%s1 + $0x110] sm:$0xf]
      %v663 = vld [vmem:[%s1 + $0x114] sm:$0xf]
      %v664 = vld [vmem:[%s1 + $0x118] sm:$0xf]
      %v665 = vld [vmem:[%s1 + $0x11c] sm:$0xf]
      %v666 = vcombine.low %v514, %v538
      %v667 = vcombine.high %v514, %v538
      %v668 = vcombine.low %v562, %v586
      %v669 = vcombine.high %v562, %v586
      %v671 = vunpack.c.l.s4 1983009808
      %v672 = vunpack.c.0.s8 %v671
      %v673 = vlaneseq
      %v674 = vshrl.u32 %v673, 7
      %v675 = vsub.s32 %v672, %v674
      %v676 = vrot.slane %v666, %v675
      %v678 = vunpack.c.l.s4 1983009808
      %v679 = vunpack.c.0.s8 %v678
      %v680 = vlaneseq
      %v681 = vshrl.u32 %v680, 7
      %v682 = vsub.s32 %v679, %v681
      %v683 = vrot.slane %v667, %v682
      %v685 = vunpack.c.l.s4 1983009808
      %v686 = vunpack.c.0.s8 %v685
      %v687 = vlaneseq
      %v688 = vshrl.u32 %v687, 7
      %v689 = vsub.s32 %v686, %v688
      %v690 = vrot.slane %v668, %v689
      %v692 = vunpack.c.l.s4 1983009808
      %v693 = vunpack.c.0.s8 %v692
      %v694 = vlaneseq
      %v695 = vshrl.u32 %v694, 7
      %v696 = vsub.s32 %v693, %v695
      %v697 = vrot.slane %v669, %v696
      %v698 = vcombine.low %v676, %v690
      %v699 = vcombine.high %v676, %v690
      %v700 = vcombine.low %v683, %v697
      %v701 = vcombine.high %v683, %v697
      %v702 = vcombine.low %v521, %v545
      %v703 = vcombine.low %v569, %v593
      %v705 = vunpack.c.l.s4 1983009808
      %v706 = vunpack.c.0.s8 %v705
      %v707 = vlaneseq
      %v708 = vshrl.u32 %v707, 7
      %v709 = vsub.s32 %v706, %v708
      %v710 = vrot.slane %v702, %v709
      %v712 = vunpack.c.l.s4 1983009808
      %v713 = vunpack.c.0.s8 %v712
      %v714 = vlaneseq
      %v715 = vshrl.u32 %v714, 7
      %v716 = vsub.s32 %v713, %v715
      %v717 = vrot.slane %v703, %v716
      %v718 = vcombine.low %v710, %v717
      %v795 = vunpack.c.l.b16 %v594
      %v796 = vunpack.c.l.b16 %v595
      %v797 = vunpack.c.l.b16 %v596
      %v798 = vunpack.c.l.b16 %v597
      %v799 = vunpack.c.l.b16 %v598
      %v800 = vunpack.c.l.b16 %v599
      %v801 = vunpack.c.l.b16 %v600
      %v802 = vunpack.c.l.b16 %v601
      %v803 = vunpack.c.l.b16 %v602
      %v804 = vunpack.c.l.b16 %v603
      %v805 = vunpack.c.l.b16 %v604
      %v806 = vunpack.c.l.b16 %v605
      %v807 = vunpack.c.l.b16 %v606
      %v808 = vunpack.c.l.b16 %v607
      %v809 = vunpack.c.l.b16 %v608
      %v810 = vunpack.c.l.b16 %v609
      %v811 = vunpack.c.l.b16 %v610
      %v812 = vunpack.c.l.b16 %v611
      %v813 = vunpack.c.l.b16 %v612
      %v814 = vunpack.c.l.b16 %v613
      %v815 = vunpack.c.l.b16 %v614
      %v816 = vunpack.c.l.b16 %v615
      %v817 = vunpack.c.l.b16 %v616
      %v818 = vunpack.c.l.b16 %v617
      %v819 = vunpack.c.l.b16 %v618
      %v820 = vunpack.c.l.b16 %v619
      %v821 = vunpack.c.l.b16 %v620
      %v822 = vunpack.c.l.b16 %v621
      %v823 = vunpack.c.l.b16 %v622
      %v824 = vunpack.c.l.b16 %v623
      %v825 = vunpack.c.l.b16 %v624
      %v826 = vunpack.c.l.b16 %v625
      %v827 = vunpack.c.l.b16 %v626
      %v828 = vunpack.c.l.b16 %v627
      %v829 = vunpack.c.l.b16 %v628
      %v830 = vunpack.c.l.b16 %v629
      %v831 = vunpack.c.l.b16 %v630
      %v832 = vunpack.c.l.b16 %v631
      %v833 = vunpack.c.l.b16 %v632
      %v834 = vunpack.c.l.b16 %v633
      %v835 = vunpack.c.l.b16 %v634
      %v836 = vunpack.c.l.b16 %v635
      %v837 = vunpack.c.l.b16 %v636
      %v838 = vunpack.c.l.b16 %v637
      %v839 = vunpack.c.l.b16 %v638
      %v840 = vunpack.c.l.b16 %v639
      %v841 = vunpack.c.l.b16 %v640
      %v842 = vunpack.c.l.b16 %v641
      %v843 = vunpack.c.l.b16 %v642
      %v844 = vunpack.c.l.b16 %v643
      %v845 = vunpack.c.l.b16 %v644
      %v846 = vunpack.c.l.b16 %v645
      %v847 = vunpack.c.l.b16 %v646
      %v848 = vunpack.c.l.b16 %v647
      %v849 = vunpack.c.l.b16 %v648
      %v850 = vunpack.c.l.b16 %v649
      %v851 = vunpack.c.l.b16 %v650
      %v852 = vunpack.c.l.b16 %v651
      %v853 = vunpack.c.l.b16 %v652
      %v854 = vunpack.c.l.b16 %v653
      %v855 = vunpack.c.l.b16 %v654
      %v856 = vunpack.c.l.b16 %v655
      %v857 = vunpack.c.l.b16 %v656
      %v858 = vunpack.c.l.b16 %v657
      %v859 = vunpack.c.l.b16 %v658
      %v860 = vunpack.c.l.b16 %v659
      %v861 = vunpack.c.l.b16 %v660
      %v862 = vunpack.c.l.b16 %v661
      %v863 = vunpack.c.l.b16 %v662
      %v864 = vunpack.c.l.b16 %v663
      %v865 = vunpack.c.l.b16 %v664
      %v866 = vunpack.c.l.b16 %v665
      %v867 = vpack.c.b16 %v796, %v795
      %v868 = vpack.c.b16 %v798, %v797
      %v869 = vpack.c.b16 %v800, %v799
      %v870 = vpack.c.b16 %v802, %v801
      %v871 = vpack.c.b16 %v804, %v803
      %v872 = vpack.c.b16 %v806, %v805
      %v873 = vpack.c.b16 %v808, %v807
      %v874 = vpack.c.b16 %v810, %v809
      %v875 = vpack.c.b16 %v812, %v811
      %v876 = vpack.c.b16 %v814, %v813
      %v877 = vpack.c.b16 %v816, %v815
      %v878 = vpack.c.b16 %v818, %v817
      %v879 = vpack.c.b16 %v820, %v819
      %v880 = vpack.c.b16 %v822, %v821
      %v881 = vpack.c.b16 %v824, %v823
      %v882 = vpack.c.b16 %v826, %v825
      %v883 = vpack.c.b16 %v828, %v827
      %v884 = vpack.c.b16 %v830, %v829
      %v885 = vpack.c.b16 %v832, %v831
      %v886 = vpack.c.b16 %v834, %v833
      %v887 = vpack.c.b16 %v836, %v835
      %v888 = vpack.c.b16 %v838, %v837
      %v889 = vpack.c.b16 %v840, %v839
      %v890 = vpack.c.b16 %v842, %v841
      %v891 = vpack.c.b16 %v844, %v843
      %v892 = vpack.c.b16 %v846, %v845
      %v893 = vpack.c.b16 %v848, %v847
      %v894 = vpack.c.b16 %v850, %v849
      %v895 = vpack.c.b16 %v852, %v851
      %v896 = vpack.c.b16 %v854, %v853
      %v897 = vpack.c.b16 %v856, %v855
      %v898 = vpack.c.b16 %v858, %v857
      %v899 = vpack.c.b16 %v860, %v859
      %v900 = vpack.c.b16 %v862, %v861
      %v901 = vpack.c.b16 %v864, %v863
      %v902 = vpack.c.b16 %v866, %v865
      %v940 = vsel %vm433, %v718, 0
      %942 = vmatprep.subr.bf16.mxu0 0
      %943 = vmatpush1.bf16.msra.mxu0 %v867
      %944 = vmatprep.subr.bf16.mxu0 0
      %945 = vmatpush1.bf16.msra.mxu0 %v868
      %946 = vmatprep.subr.bf16.mxu0 0
      %947 = vmatpush1.bf16.msra.mxu0 %v869
      %948 = vmatprep.subr.bf16.mxu0 0
      %949 = vmatpush1.bf16.msra.mxu0 %v870
      %950 = vmatprep.subr.bf16.mxu0 0
      %951 = vmatpush1.bf16.msra.mxu0 %v871
      %952 = vmatprep.subr.bf16.mxu0 0
      %953 = vmatpush1.bf16.msra.mxu0 %v872
      %954 = vmatprep.subr.bf16.mxu0 0
      %955 = vmatpush1.bf16.msra.mxu0 %v873
      %956 = vmatprep.subr.bf16.mxu0 0
      %957 = vmatpush1.bf16.msra.mxu0 %v874
      %958 = vmatprep.subr.bf16.mxu0 0
      %959 = vmatpush1.bf16.msra.mxu0 %v875
      %960 = vmatprep.subr.bf16.mxu0 0
      %961 = vmatpush1.bf16.msra.mxu0 %v876
      %962 = vmatprep.subr.bf16.mxu0 0
      %963 = vmatpush1.bf16.msra.mxu0 %v877
      %964 = vmatprep.subr.bf16.mxu0 0
      %965 = vmatpush1.bf16.msra.mxu0 %v878
      %966 = vmatprep.subr.bf16.mxu0 0
      %967 = vmatpush1.bf16.msra.mxu0 %v879
      %968 = vmatprep.subr.bf16.mxu0 0
      %969 = vmatpush1.bf16.msra.mxu0 %v880
      %970 = vmatprep.subr.bf16.mxu0 0
      %971 = vmatpush1.bf16.msra.mxu0 %v881
      %972 = vmatprep.subr.bf16.mxu0 0
      %973 = vmatpush1.bf16.msra.mxu0 %v882
      %974 = vmatprep.mubr.bf16.mxu0 %v699
      %975 = vmatmul.mubr.bf16.gmra.mrb[0].mxu0 %v698
      %v976 = vpop.f32.mrb[0].mxu0
      %v977 = vadd.f32 0.0, %v976
      %v978 = vpop.f32.mrb[0].mxu0
      %v979 = vpop.f32.mrb[0].mxu0
      %v980 = vadd.f32 0.0, %v979
      %v981 = vpop.f32.mrb[0].mxu0
      %982 = vdwg.mxu0
      %983 = vmatprep.subr.bf16.mxu0 0
      %984 = vmatpush1.bf16.msra.mxu0 %v883
      %985 = vmatprep.subr.bf16.mxu0 0
      %986 = vmatpush1.bf16.msra.mxu0 %v884
      %987 = vmatprep.subr.bf16.mxu0 0
      %988 = vmatpush1.bf16.msra.mxu0 %v885
      %989 = vmatprep.subr.bf16.mxu0 0
      %990 = vmatpush1.bf16.msra.mxu0 %v886
      %991 = vmatprep.subr.bf16.mxu0 0
      %992 = vmatpush1.bf16.msra.mxu0 %v887
      %993 = vmatprep.subr.bf16.mxu0 0
      %994 = vmatpush1.bf16.msra.mxu0 %v888
      %995 = vmatprep.subr.bf16.mxu0 0
      %996 = vmatpush1.bf16.msra.mxu0 %v889
      %997 = vmatprep.subr.bf16.mxu0 0
      %998 = vmatpush1.bf16.msra.mxu0 %v890
      %999 = vmatprep.subr.bf16.mxu0 0
      %1000 = vmatpush1.bf16.msra.mxu0 %v891
      %1001 = vmatprep.subr.bf16.mxu0 0
      %1002 = vmatpush1.bf16.msra.mxu0 %v892
      %1003 = vmatprep.subr.bf16.mxu0 0
      %1004 = vmatpush1.bf16.msra.mxu0 %v893
      %1005 = vmatprep.subr.bf16.mxu0 0
      %1006 = vmatpush1.bf16.msra.mxu0 %v894
      %1007 = vmatprep.subr.bf16.mxu0 0
      %1008 = vmatpush1.bf16.msra.mxu0 %v895
      %1009 = vmatprep.subr.bf16.mxu0 0
      %1010 = vmatpush1.bf16.msra.mxu0 %v896
      %1011 = vmatprep.subr.bf16.mxu0 0
      %1012 = vmatpush1.bf16.msra.mxu0 %v897
      %1013 = vmatprep.subr.bf16.mxu0 0
      %1014 = vmatpush1.bf16.msra.mxu0 %v898
      %1015 = vmatprep.mubr.bf16.mxu0 %v701
      %1016 = vmatmul.mubr.bf16.gmra.mrb[0].mxu0 %v700
      %v1017 = vpop.f32.mrb[0].mxu0
      %v1018 = vadd.f32 %v977, %v1017
      %v1019 = vpop.f32.mrb[0].mxu0
      %v1020 = vpop.f32.mrb[0].mxu0
      %v1021 = vadd.f32 %v980, %v1020
      %v1022 = vpop.f32.mrb[0].mxu0
      %1023 = vdwg.mxu0
      %1024 = vmatprep.subr.bf16.mxu0 0
      %1025 = vmatpush1.bf16.msra.mxu0 %v899
      %1026 = vmatprep.subr.bf16.mxu0 0
      %1027 = vmatpush1.bf16.msra.mxu0 %v900
      %1028 = vmatprep.subr.bf16.mxu0 0
      %1029 = vmatpush1.bf16.msra.mxu0 %v901
      %1030 = vmatprep.subr.bf16.mxu0 0
      %1031 = vmatpush1.bf16.msra.mxu0 %v902
      %1032 = vmatprep.subr.bf16.mxu0 0
      %1033 = vmatpush1.bf16.msra.mxu0 0
      %1034 = vmatprep.subr.bf16.mxu0 0
      %1035 = vmatpush1.bf16.msra.mxu0 0
      %1036 = vmatprep.subr.bf16.mxu0 0
      %1037 = vmatpush1.bf16.msra.mxu0 0
      %1038 = vmatprep.subr.bf16.mxu0 0
      %1039 = vmatpush1.bf16.msra.mxu0 0
      %1040 = vmatprep.subr.bf16.mxu0 0
      %1041 = vmatpush1.bf16.msra.mxu0 0
      %1042 = vmatprep.subr.bf16.mxu0 0
      %1043 = vmatpush1.bf16.msra.mxu0 0
      %1044 = vmatprep.subr.bf16.mxu0 0
      %1045 = vmatpush1.bf16.msra.mxu0 0
      %1046 = vmatprep.subr.bf16.mxu0 0
      %1047 = vmatpush1.bf16.msra.mxu0 0
      %1048 = vmatprep.subr.bf16.mxu0 0
      %1049 = vmatpush1.bf16.msra.mxu0 0
      %1050 = vmatprep.subr.bf16.mxu0 0
      %1051 = vmatpush1.bf16.msra.mxu0 0
      %1052 = vmatprep.subr.bf16.mxu0 0
      %1053 = vmatpush1.bf16.msra.mxu0 0
      %1054 = vmatprep.subr.bf16.mxu0 0
      %1055 = vmatpush1.bf16.msra.mxu0 0
      %1056 = vmatprep.mubr.bf16.mxu0 0
      %1057 = vmatmul.mubr.bf16.gmra.mrb[0].mxu0 %v940
      %v1058 = vpop.f32.mrb[0].mxu0
      %v1059 = vadd.f32 %v1018, %v1058
      %v1060 = vpop.f32.mrb[0].mxu0
      %v1061 = vpop.f32.mrb[0].mxu0
      %v1062 = vadd.f32 %v1021, %v1061
      %v1063 = vpop.f32.mrb[0].mxu0
      %1064 = vdwg.mxu0
      %v1065 = vpack.c.bf16 %v1062, %v1059
      %v1067 = vunpack.c.l.b16 %v1065
      %v1068 = vunpack.c.h.b16 %v1065
      %v1069 = vpack.c.b16 %v1067, %v1067
      %v1070 = vpack.c.b16 %v1068, %v1068
      %vm1073 = vcmask 519168
      %1074 = vst.msk [vmem:[%s177] sm:$0xf] %vm1073, %v1069
      %1075 = vst.msk [vmem:[%s177 + $0x4] sm:$0xf] %vm1073, %v1070
      %v1076 = vsel %vm433, %v1059, 0.0
      %v1077 = vsel %vm433, %v1062, 0.0
      %v1078 = vadd.f32 %v1076, %v1077
      %v1079 = vrot.slane %v1078, 4
      %v1080 = vadd.f32 %v1078, %v1079
      %v1081 = vrot.slane %v1080, 2
      %v1082 = vadd.f32 %v1080, %v1081
      %v1083 = vrot.slane %v1082, 1
      %v1084 = vadd.f32 %v1082, %v1083
      %v1085 = vmul.f32 %v1059, %v1059
      %v1086 = vmul.f32 %v1062, %v1062
      %v1087 = vsel %vm433, %v1085, 0.0
      %v1088 = vsel %vm433, %v1086, 0.0
      %v1089 = vadd.f32 %v1087, %v1088
      %v1090 = vrot.slane %v1089, 4
      %v1091 = vadd.f32 %v1089, %v1090
      %v1092 = vrot.slane %v1091, 2
      %v1093 = vadd.f32 %v1091, %v1092
      %v1094 = vrot.slane %v1093, 1
      %v1095 = vadd.f32 %v1093, %v1094
      %vm1096 = vcmask 1040384
      %v1097 = vsel %vm1096, %v1084, %v1095
      %vm1098 = vcmask 517120
      %1099 = vst.msk [vmem:[%s181] sm:$0x3] %vm1098, %v1097
      %p1100 = scmp.lt.s32.totalorder %s15, 1
      %s1101 = scalar_select %p1100, %s15, 1
      %s1102 = smul.addr %s1101, 2
      %s1103 = smul.addr %s1102, 4
      %s1104 = scalar_lea.vmem %s2, %s1103
      %p1105 = scmp.lt.s32.totalorder %s15, 1
      %s1106 = scalar_select %p1105, %s15, 1
      %s1107 = smul.addr %s1106, 2
      %s1108 = scalar_lea.vmem %s3, %s1107
      // Predicated region
      $region29: #{basic_block_forward.11} parent=27 // pred_check
        %p1109 = pneg %p80
      $region30: #{basic_block_forward.11} parent=27 // pred_check_branch
        %1111 = sbr.rel (%p1109) target = $region32
      $region31: #{basic_block_forward.11} parent=27 // pred_region
        _
      $region32: #{basic_block_forward.11} parent=27 // pred_fallthru
        _
      // Predicated region
      $region33: #{basic_block_forward.11} parent=27 // pred_check
        %p1112 = pneg %p106
      $region34: #{basic_block_forward.11} parent=27 // pred_check_branch
        %1114 = sbr.rel (%p1112) target = $region36
      $region35: #{basic_block_forward.11} parent=27 // pred_region
        _
      $region36: #{basic_block_forward.11} parent=27 // pred_fallthru
        _
    $region28: #{basic_block_forward.11} parent=5 // pred_fallthru
      _
    %p1115 = scmp.le.s32.totalorder 2, %s10
    // Predicated region
    $region37: #{basic_block_forward.11} parent=5 // pred_check
      %p1116 = pneg %p1115
    $region38: #{basic_block_forward.11} parent=5 // pred_check_branch
      %1118 = sbr.rel (%p1116) target = $region40
    $region39: #{basic_block_forward.11} parent=5 // pred_region
      %s1119 = ssub.s32 %s10, 2
      // Predicated region
      $region41: #{basic_block_forward.11} parent=39 // pred_check
        %p1120 = pneg %p86
      $region42: #{basic_block_forward.11} parent=39 // pred_check_branch
        %1122 = sbr.rel (%p1120) target = $region44
      $region43: #{basic_block_forward.11} parent=39 // pred_region
        %p1123 = scmp.lt.s32.totalorder %s16, 1
        %s1124 = scalar_select %p1123, %s16, 1
        %s1125 = smul.addr %s1124, 2
        %s1126 = smul.addr %s1125, 4
        %s1127 = scalar_lea.vmem %s2, %s1126
      $region44: #{basic_block_forward.11} parent=39 // pred_fallthru
        _
      // Predicated region
      $region45: #{basic_block_forward.11} parent=39 // pred_check
        %p1128 = pneg %p112
      $region46: #{basic_block_forward.11} parent=39 // pred_check_branch
        %1130 = sbr.rel (%p1128) target = $region48
      $region47: #{basic_block_forward.11} parent=39 // pred_region
        %p1131 = scmp.lt.s32.totalorder %s16, 1
        %s1132 = scalar_select %p1131, %s16, 1
        %s1133 = smul.addr %s1132, 2
        %s1134 = scalar_lea.vmem %s3, %s1133
      $region48: #{basic_block_forward.11} parent=39 // pred_fallthru
        _
    $region40: #{basic_block_forward.11} parent=5 // pred_fallthru
      _
  $region6: #{basic_block_forward.11} parent=0 // loop_footer
    %s14 = sadd.s32 1, %s10
  $region7: #{basic_block_forward.11} parent=0 // loop_footer_branch
    %9 = sbr.rel target = $region3
  $region8: #{basic_block_forward.11} parent=0 // loop_exit
    _

// kernel: basic_block_forward.13
$region0: #{basic_block_forward.13}
  #allocation0 [shape = 'u32[]', space=smem, size = 0x4, offset = 0x4, fixed_abs, tag = 'smem constant byte address 0x4 - core index']
  #allocation1 [shape = 'u32[144,128]{1,0:T(1,128)}', space=vmem, size = 0x12000, scoped, tag = 'internal scratch']
  %s0 = inlined_call_operand.vmem [shape: bf16[2,6,6,64], index: 0, kind: input, shape index: {}]
  %s1 = inlined_call_operand.vmem [shape: f32[1,1,576], index: 1, kind: input, shape index: {}]
  %s2 = inlined_call_operand.vmem [shape: f32[32,4], index: 2, kind: input, shape index: {}]
  %s3 = inlined_call_operand.vmem [shape: f32[4,32], index: 3, kind: input, shape index: {}]
  %s4 = inlined_call_operand.hbm [shape: f32[2,32,32], index: 4, kind: output, shape index: {}]
  %s5 = sld [smem:[#allocation0]]
  $region49: #{basic_block_forward.13} parent=0
    _
  %s7 = ssub.s32 1, %s5
  %s8 = scalar_select 0, %s7, %s5
  $region1: #{basic_block_forward.13} parent=0
    #allocation2 [shape = 'u8[32768]{0}', space=vmem, size = 0x8000, scoped, tag = 'output window, operand 0']
    #allocation3 [shape = 's32[2]{0}', space=sflag, size = 0x8, scoped, tag = 'scoped memory for basic_block_forward.13']
    %9 = vsyncpa [#allocation3], 0
    %s10 = scalar_lea.sflag [#allocation3], 1
    %11 = vsyncpa %s10, 0
    loop: start=0, step=1, limit=4
    $region2: #{basic_block_forward.13} parent=1 // loop_pre_header
      _
    $region3: #{basic_block_forward.13} parent=1 // loop_header
      %s13 = sphi 0, %s17
      %p14 = scmp.ge.s32.totalorder %s13, 4
      %s23 = sphi 0, %s25
      %s26 = sphi 0, %s23
      %s27 = sphi 0, %s26
      %s43 = sphi 0, %s27
      %s47 = sphi 0, %s47
      %s49 = sphi 0, %s47
      %s50 = sphi 0, %s49
      %s64 = sphi 0, %s50
      %s68 = sphi 0, %s68
      %s70 = sphi 0, %s68
      %s71 = sphi 0, %s70
      %s85 = sphi 0, %s71
      %s89 = sphi 0, %s89
      %s91 = sphi 0, %s89
      %s92 = sphi 0, %s91
      %s106 = sphi 0, %s92
      %s112 = sphi 0, %s114
      %s115 = sphi 0, %s112
      %s116 = sphi 0, %s115
      %s132 = sphi 0, %s116
    $region4: #{basic_block_forward.13} parent=1 // loop_header_branch
      %16 = sbr.rel (%p14) target = $region8
    $region5: #{basic_block_forward.13} parent=1 // loop_body
      %s18 = ssub.s32 %s13, 1
      %s19 = ssub.s32 %s13, 2
      %s20 = sadd.s32 %s13, 1
      %s21 = ssub.s32 %s13, %s20
      %p22 = scmp.eq.s32.totalorder %s21, 0
      %s24 = sadd.s32 %s23, 1
      %s25 = scalar_select %p22, %s23, %s24
      %p28 = pneg %p22
      %p29 = scmp.eq.s32.totalorder %s13, 1
      %p30 = por %p28, %p29
      %p31 = scmp.ne.s32.totalorder %s23, %s26
      %p32 = scmp.eq.s32.totalorder %s13, 0
      %p33 = por %p31, %p32
      %p34 = scmp.ne.s32.totalorder %s23, %s26
      %p35 = scmp.eq.s32.totalorder %s18, 1
      %p36 = por %p34, %p35
      %p37 = scmp.ne.s32.totalorder %s26, %s27
      %p38 = scmp.eq.s32.totalorder %s18, 0
      %p39 = por %p37, %p38
      %p40 = scmp.ne.s32.totalorder %s26, %s27
      %p41 = scmp.eq.s32.totalorder %s19, 1
      %p42 = por %p40, %p41
      %p44 = scmp.ne.s32.totalorder %s27, %s43
      %p45 = scmp.eq.s32.totalorder %s19, 0
      %p46 = por %p44, %p45
      %s48 = sadd.s32 %s47, 1
      %p51 = scmp.eq.s32.totalorder %s13, 1
      %p52 = scmp.ne.s32.totalorder %s47, %s49
      %p53 = scmp.eq.s32.totalorder %s13, 0
      %p54 = por %p52, %p53
      %p55 = scmp.ne.s32.totalorder %s47, %s49
      %p56 = scmp.eq.s32.totalorder %s18, 1
      %p57 = por %p55, %p56
      %p58 = scmp.ne.s32.totalorder %s49, %s50
      %p59 = scmp.eq.s32.totalorder %s18, 0
      %p60 = por %p58, %p59
      %p61 = scmp.ne.s32.totalorder %s49, %s50
      %p62 = scmp.eq.s32.totalorder %s19, 1
      %p63 = por %p61, %p62
      %p65 = scmp.ne.s32.totalorder %s50, %s64
      %p66 = scmp.eq.s32.totalorder %s19, 0
      %p67 = por %p65, %p66
      %s69 = sadd.s32 %s68, 1
      %p72 = scmp.eq.s32.totalorder %s13, 1
      %p73 = scmp.ne.s32.totalorder %s68, %s70
      %p74 = scmp.eq.s32.totalorder %s13, 0
      %p75 = por %p73, %p74
      %p76 = scmp.ne.s32.totalorder %s68, %s70
      %p77 = scmp.eq.s32.totalorder %s18, 1
      %p78 = por %p76, %p77
      %p79 = scmp.ne.s32.totalorder %s70, %s71
      %p80 = scmp.eq.s32.totalorder %s18, 0
      %p81 = por %p79, %p80
      %p82 = scmp.ne.s32.totalorder %s70, %s71
      %p83 = scmp.eq.s32.totalorder %s19, 1
      %p84 = por %p82, %p83
      %p86 = scmp.ne.s32.totalorder %s71, %s85
      %p87 = scmp.eq.s32.totalorder %s19, 0
      %p88 = por %p86, %p87
      %s90 = sadd.s32 %s89, 1
      %p93 = scmp.eq.s32.totalorder %s13, 1
      %p94 = scmp.ne.s32.totalorder %s89, %s91
      %p95 = scmp.eq.s32.totalorder %s13, 0
      %p96 = por %p94, %p95
      %p97 = scmp.ne.s32.totalorder %s89, %s91
      %p98 = scmp.eq.s32.totalorder %s18, 1
      %p99 = por %p97, %p98
      %p100 = scmp.ne.s32.totalorder %s91, %s92
      %p101 = scmp.eq.s32.totalorder %s18, 0
      %p102 = por %p100, %p101
      %p103 = scmp.ne.s32.totalorder %s91, %s92
      %p104 = scmp.eq.s32.totalorder %s19, 1
      %p105 = por %p103, %p104
      %p107 = scmp.ne.s32.totalorder %s92, %s106
      %p108 = scmp.eq.s32.totalorder %s19, 0
      %p109 = por %p107, %p108
      %s110 = ssub.s32 %s13, %s20
      %p111 = scmp.eq.s32.totalorder %s110, 0
      %s113 = sadd.s32 %s112, 1
      %s114 = scalar_select %p111, %s112, %s113
      %p117 = pneg %p111
      %p118 = scmp.eq.s32.totalorder %s13, 1
      %p119 = por %p117, %p118
      %p120 = scmp.ne.s32.totalorder %s112, %s115
      %p121 = scmp.eq.s32.totalorder %s13, 0
      %p122 = por %p120, %p121
      %p123 = scmp.ne.s32.totalorder %s112, %s115
      %p124 = scmp.eq.s32.totalorder %s18, 1
      %p125 = por %p123, %p124
      %p126 = scmp.ne.s32.totalorder %s115, %s116
      %p127 = scmp.eq.s32.totalorder %s18, 0
      %p128 = por %p126, %p127
      %p129 = scmp.ne.s32.totalorder %s115, %s116
      %p130 = scmp.eq.s32.totalorder %s19, 1
      %p131 = por %p129, %p130
      %p133 = scmp.ne.s32.totalorder %s116, %s132
      %p134 = scmp.eq.s32.totalorder %s19, 0
      %p135 = por %p133, %p134
      %p136 = scmp.le.s32.totalorder 1, %s13
      %p137 = scmp.lt.s32.totalorder %s13, 3
      %p138 = pnand %p136, %p137
      %p139 = pneg %p138
      // Predicated region
      $region9: #{basic_block_forward.13} parent=5 // pred_check
        _
      $region10: #{basic_block_forward.13} parent=5 // pred_check_branch
        %141 = sbr.rel (%p138) target = $region12
      $region11: #{basic_block_forward.13} parent=5 // pred_region
        %s142 = ssub.s32 %s13, 1
        // Predicated region
        $region13: #{basic_block_forward.13} parent=11 // pred_check
          %p143 = pneg %p60
        $region14: #{basic_block_forward.13} parent=11 // pred_check_branch
          %145 = sbr.rel (%p143) target = $region16
        $region15: #{basic_block_forward.13} parent=11 // pred_region
          _
        $region16: #{basic_block_forward.13} parent=11 // pred_fallthru
          _
        // Predicated region
        $region17: #{basic_block_forward.13} parent=11 // pred_check
          %p146 = pneg %p81
        $region18: #{basic_block_forward.13} parent=11 // pred_check_branch
          %148 = sbr.rel (%p146) target = $region20
        $region19: #{basic_block_forward.13} parent=11 // pred_region
          _
        $region20: #{basic_block_forward.13} parent=11 // pred_fallthru
          _
        // Predicated region
        $region21: #{basic_block_forward.13} parent=11 // pred_check
          %p149 = pneg %p102
        $region22: #{basic_block_forward.13} parent=11 // pred_check_branch
          %151 = sbr.rel (%p149) target = $region24
        $region23: #{basic_block_forward.13} parent=11 // pred_region
          _
        $region24: #{basic_block_forward.13} parent=11 // pred_fallthru
          _
      $region12: #{basic_block_forward.13} parent=5 // pred_fallthru
        _
      %p152 = scmp.lt.s32.totalorder %s13, 2
      // Predicated region
      $region25: #{basic_block_forward.13} parent=5 // pred_check
        %p153 = pneg %p152
      $region26: #{basic_block_forward.13} parent=5 // pred_check_branch
        %155 = sbr.rel (%p153) target = $region28
      $region27: #{basic_block_forward.13} parent=5 // pred_region
        // Predicated region
        $region29: #{basic_block_forward.13} parent=27 // pred_check
          %p156 = pneg %p33
        $region30: #{basic_block_forward.13} parent=27 // pred_check_branch
          %158 = sbr.rel (%p156) target = $region32
        $region31: #{basic_block_forward.13} parent=27 // pred_region
          %p159 = scmp.lt.s32.totalorder %s13, 1
          %s160 = scalar_select %p159, %s13, 1
          %s161 = smul.addr %s160, 6
          %s162 = smul.addr %s161, 4
          %s163 = scalar_lea.vmem %s0, %s162
        $region32: #{basic_block_forward.13} parent=27 // pred_fallthru
          _
      $region28: #{basic_block_forward.13} parent=5 // pred_fallthru
        _
      %p164 = scmp.le.s32.totalorder 1, %s13
      %p165 = scmp.lt.s32.totalorder %s13, 3
      %p166 = pnand %p164, %p165
      %p167 = pneg %p166
      // Predicated region
      $region33: #{basic_block_forward.13} parent=5 // pred_check
        _
      $region34: #{basic_block_forward.13} parent=5 // pred_check_branch
        %169 = sbr.rel (%p166) target = $region36
      $region35: #{basic_block_forward.13} parent=5 // pred_region
        %s170 = ssub.s32 %s13, 1
        %p171 = scmp.lt.s32.totalorder %s18, 1
        %s172 = scalar_select %p171, %s18, 1
        %s173 = smul.addr %s172, 6
        %s174 = smul.addr %s173, 4
        %s175 = scalar_lea.vmem %s0, %s174
        %p176 = pneg %p39
        %p177 = pneg %p36
        %p178 = pneg %p60
        %p179 = pneg %p57
        %p180 = pneg %p81
        %p181 = pneg %p78
        %p182 = pneg %p102
        %p183 = pneg %p99
        %p184 = pneg %p128
        %p185 = pneg %p125
        %s186 = sand.u32 %s115, 1
        %s187 = scalar_lea.sflag [#allocation3], %s186
        %s188 = sand.u32 %s115, 1
        %s189 = smul.addr %s188, 32
        %s190 = scalar_lea.vmem [#allocation2], %s189
        %p191 = scmp.lt.s32.totalorder %s18, 1
        %s192 = scalar_select %p191, %s18, 1
        %s193 = smul.addr %s192, 6
        %s194 = smul.addr %s193, 4
        %s195 = scalar_lea.vmem %s0, %s194
        %v196 = vld [vmem:[%s195] sm:$0x3]
        %v197 = vld [vmem:[%s195 + $0x4] sm:$0x3]
        %v198 = vld [vmem:[%s195 + $0x8] sm:$0x3]
        %v199 = vld [vmem:[%s195 + $0xc] sm:$0x3]
        %v200 = vld [vmem:[%s195] sm:$0x7]
        %v201 = vld [vmem:[%s195 + $0x4] sm:$0x7]
        %v202 = vld [vmem:[%s195 + $0x8] sm:$0x7]
        %v203 = vld [vmem:[%s195 + $0xc] sm:$0x7]
        %v204 = vld [vmem:[%s195] sm:$0x6]
        %v205 = vld [vmem:[%s195 + $0x4] sm:$0x6]
        %v206 = vld [vmem:[%s195 + $0x8] sm:$0x6]
        %v207 = vld [vmem:[%s195 + $0xc] sm:$0x6]
        %s208 = scalar_lea.vmem %s195, 4
        %v209 = vld [vmem:[%s208] sm:$0x3]
        %v210 = vld [vmem:[%s208 + $0x4] sm:$0x3]
        %v211 = vld [vmem:[%s208 + $0x8] sm:$0x3]
        %v212 = vld [vmem:[%s208 + $0xc] sm:$0x3]
        %v213 = vld [vmem:[%s208] sm:$0x7]
        %v214 = vld [vmem:[%s208 + $0x4] sm:$0x7]
        %v215 = vld [vmem:[%s208 + $0x8] sm:$0x7]
        %v216 = vld [vmem:[%s208 + $0xc] sm:$0x7]
        %v217 = vld [vmem:[%s208] sm:$0x6]
        %v218 = vld [vmem:[%s208 + $0x4] sm:$0x6]
        %v219 = vld [vmem:[%s208 + $0x8] sm:$0x6]
        %v220 = vld [vmem:[%s208 + $0xc] sm:$0x6]
        %s221 = scalar_lea.vmem %s195, 8
        %v222 = vld [vmem:[%s221] sm:$0x3]
        %v223 = vld [vmem:[%s221 + $0x4] sm:$0x3]
        %v224 = vld [vmem:[%s221 + $0x8] sm:$0x3]
        %v225 = vld [vmem:[%s221 + $0xc] sm:$0x3]
        %v226 = vld [vmem:[%s221] sm:$0x7]
        %v227 = vld [vmem:[%s221 + $0x4] sm:$0x7]
        %v228 = vld [vmem:[%s221 + $0x8] sm:$0x7]
        %v229 = vld [vmem:[%s221 + $0xc] sm:$0x7]
        %v230 = vld [vmem:[%s221] sm:$0x6]
        %v231 = vld [vmem:[%s221 + $0x4] sm:$0x6]
        %v232 = vld [vmem:[%s221 + $0x8] sm:$0x6]
        %v233 = vld [vmem:[%s221 + $0xc] sm:$0x6]
        %v238 = vunpack.c.l.b16 %v200
        %v239 = vunpack.c.l.b16 %v201
        %v240 = vunpack.c.l.b16 %v202
        %v241 = vunpack.c.l.b16 %v203
        %v242 = vpack.c.b16 %v238, %v238
        %v243 = vpack.c.b16 %v239, %v239
        %v244 = vpack.c.b16 %v240, %v240
        %v245 = vpack.c.b16 %v241, %v241
        %v247 = vshrl.u32 %v242, 16
        %v249 = vshll.u32 %v242, 16
        %v251 = vrot.slane %v249, 1
        %v252 = vor.u32 %v247, %v251
        %v254 = vshrl.u32 %v243, 16
        %v256 = vshll.u32 %v243, 16
        %v258 = vrot.slane %v256, 1
        %v259 = vor.u32 %v254, %v258
        %v261 = vshrl.u32 %v244, 16
        %v263 = vshll.u32 %v244, 16
        %v265 = vrot.slane %v263, 1
        %v266 = vor.u32 %v261, %v265
        %v268 = vshrl.u32 %v245, 16
        %v270 = vshll.u32 %v245, 16
        %v272 = vrot.slane %v270, 1
        %v273 = vor.u32 %v268, %v272
        %274 = vrot.lane.b32.xlu0 %v252, 64
        %v275 = vpop.permute.xlu0 %274
        %276 = vrot.lane.b32.xlu0 %v259, 64
        %v277 = vpop.permute.xlu0 %276
        %278 = vrot.lane.b32.xlu0 %v266, 64
        %v279 = vpop.permute.xlu0 %278
        %280 = vrot.lane.b32.xlu0 %v273, 64
        %v281 = vpop.permute.xlu0 %280
        %v286 = vunpack.c.l.b16 %v204
        %v287 = vunpack.c.l.b16 %v205
        %v288 = vunpack.c.l.b16 %v206
        %v289 = vunpack.c.l.b16 %v207
        %v290 = vpack.c.b16 %v286, %v286
        %v291 = vpack.c.b16 %v287, %v287
        %v292 = vpack.c.b16 %v288, %v288
        %v293 = vpack.c.b16 %v289, %v289
        %v294 = vrot.slane %v290, 1
        %v295 = vrot.slane %v291, 1
        %v296 = vrot.slane %v292, 1
        %v297 = vrot.slane %v293, 1
        %v302 = vunpack.c.l.b16 %v209
        %v303 = vunpack.c.l.b16 %v210
        %v304 = vunpack.c.l.b16 %v211
        %v305 = vunpack.c.l.b16 %v212
        %v306 = vpack.c.b16 %v302, %v302
        %v307 = vpack.c.b16 %v303, %v303
        %v308 = vpack.c.b16 %v304, %v304
        %v309 = vpack.c.b16 %v305, %v305
        %310 = vrot.lane.b32.xlu0 %v306, 64
        %v311 = vpop.permute.xlu0 %310
        %312 = vrot.lane.b32.xlu0 %v307, 64
        %v313 = vpop.permute.xlu0 %312
        %314 = vrot.lane.b32.xlu0 %v308, 64
        %v315 = vpop.permute.xlu0 %314
        %316 = vrot.lane.b32.xlu0 %v309, 64
        %v317 = vpop.permute.xlu0 %316
        %v322 = vunpack.c.l.b16 %v213
        %v323 = vunpack.c.l.b16 %v214
        %v324 = vunpack.c.l.b16 %v215
        %v325 = vunpack.c.l.b16 %v216
        %v326 = vpack.c.b16 %v322, %v322
        %v327 = vpack.c.b16 %v323, %v323
        %v328 = vpack.c.b16 %v324, %v324
        %v329 = vpack.c.b16 %v325, %v325
        %v331 = vshrl.u32 %v326, 16
        %v333 = vshll.u32 %v326, 16
        %v335 = vrot.slane %v333, 1
        %v336 = vor.u32 %v331, %v335
        %v338 = vshrl.u32 %v327, 16
        %v340 = vshll.u32 %v327, 16
        %v342 = vrot.slane %v340, 1
        %v343 = vor.u32 %v338, %v342
        %v345 = vshrl.u32 %v328, 16
        %v347 = vshll.u32 %v328, 16
        %v349 = vrot.slane %v347, 1
        %v350 = vor.u32 %v345, %v349
        %v352 = vshrl.u32 %v329, 16
        %v354 = vshll.u32 %v329, 16
        %v356 = vrot.slane %v354, 1
        %v357 = vor.u32 %v352, %v356
        %v362 = vunpack.c.l.b16 %v217
        %v363 = vunpack.c.l.b16 %v218
        %v364 = vunpack.c.l.b16 %v219
        %v365 = vunpack.c.l.b16 %v220
        %v366 = vpack.c.b16 %v362, %v362
        %v367 = vpack.c.b16 %v363, %v363
        %v368 = vpack.c.b16 %v364, %v364
        %v369 = vpack.c.b16 %v365, %v365
        %v370 = vrot.slane %v366, 1
        %v371 = vrot.slane %v367, 1
        %v372 = vrot.slane %v368, 1
        %v373 = vrot.slane %v369, 1
        %374 = vrot.lane.b32.xlu0 %v370, 64
        %v375 = vpop.permute.xlu0 %374
        %376 = vrot.lane.b32.xlu0 %v371, 64
        %v377 = vpop.permute.xlu0 %376
        %378 = vrot.lane.b32.xlu0 %v372, 64
        %v379 = vpop.permute.xlu0 %378
        %380 = vrot.lane.b32.xlu0 %v373, 64
        %v381 = vpop.permute.xlu0 %380
        %v386 = vunpack.c.l.b16 %v226
        %v387 = vunpack.c.l.b16 %v227
        %v388 = vunpack.c.l.b16 %v228
        %v389 = vunpack.c.l.b16 %v229
        %v390 = vpack.c.b16 %v386, %v386
        %v391 = vpack.c.b16 %v387, %v387
        %v392 = vpack.c.b16 %v388, %v388
        %v393 = vpack.c.b16 %v389, %v389
        %v395 = vshrl.u32 %v390, 16
        %v397 = vshll.u32 %v390, 16
        %v399 = vrot.slane %v397, 1
        %v400 = vor.u32 %v395, %v399
        %v402 = vshrl.u32 %v391, 16
        %v404 = vshll.u32 %v391, 16
        %v406 = vrot.slane %v404, 1
        %v407 = vor.u32 %v402, %v406
        %v409 = vshrl.u32 %v392, 16
        %v411 = vshll.u32 %v392, 16
        %v413 = vrot.slane %v411, 1
        %v414 = vor.u32 %v409, %v413
        %v416 = vshrl.u32 %v393, 16
        %v418 = vshll.u32 %v393, 16
        %v420 = vrot.slane %v418, 1
        %v421 = vor.u32 %v416, %v420
        %422 = vrot.lane.b32.xlu0 %v400, 64
        %v423 = vpop.permute.xlu0 %422
        %424 = vrot.lane.b32.xlu0 %v407, 64
        %v425 = vpop.permute.xlu0 %424
        %426 = vrot.lane.b32.xlu0 %v414, 64
        %v427 = vpop.permute.xlu0 %426
        %428 = vrot.lane.b32.xlu0 %v421, 64
        %v429 = vpop.permute.xlu0 %428
        %v434 = vunpack.c.l.b16 %v230
        %v435 = vunpack.c.l.b16 %v231
        %v436 = vunpack.c.l.b16 %v232
        %v437 = vunpack.c.l.b16 %v233
        %v438 = vpack.c.b16 %v434, %v434
        %v439 = vpack.c.b16 %v435, %v435
        %v440 = vpack.c.b16 %v436, %v436
        %v441 = vpack.c.b16 %v437, %v437
        %v442 = vrot.slane %v438, 1
        %v443 = vrot.slane %v439, 1
        %v444 = vrot.slane %v440, 1
        %v445 = vrot.slane %v441, 1
        %vm450 = vcmask 523264
        %v453 = vsel %vm450, %v196, %v275
        %v457 = vsel %vm450, %v197, %v277
        %v461 = vsel %vm450, %v198, %v279
        %v465 = vsel %vm450, %v199, %v281
        %v469 = vsel %vm450, %v294, %v311
        %v473 = vsel %vm450, %v295, %v313
        %v477 = vsel %vm450, %v296, %v315
        %v481 = vsel %vm450, %v297, %v317
        %v485 = vsel %vm450, %v336, %v375
        %v489 = vsel %vm450, %v343, %v377
        %v493 = vsel %vm450, %v350, %v379
        %v497 = vsel %vm450, %v357, %v381
        %v501 = vsel %vm450, %v222, %v423
        %v505 = vsel %vm450, %v223, %v425
        %v509 = vsel %vm450, %v224, %v427
        %v513 = vsel %vm450, %v225, %v429
        %v515 = vunpack.c.l.bf16 %v453
        %v516 = vunpack.c.l.bf16 %v469
        %v517 = vunpack.c.l.bf16 %v485
        %v518 = vunpack.c.l.bf16 %v501
        %v519 = vunpack.c.l.bf16 %v442
        %v520 = vunpack.c.l.bf16 %v457
        %v521 = vunpack.c.l.bf16 %v473
        %v522 = vunpack.c.l.bf16 %v489
        %v523 = vunpack.c.l.bf16 %v505
        %v524 = vunpack.c.l.bf16 %v443
        %v525 = vunpack.c.l.bf16 %v461
        %v526 = vunpack.c.l.bf16 %v477
        %v527 = vunpack.c.l.bf16 %v493
        %v528 = vunpack.c.l.bf16 %v509
        %v529 = vunpack.c.l.bf16 %v444
        %v530 = vunpack.c.l.bf16 %v465
        %v531 = vunpack.c.l.bf16 %v481
        %v532 = vunpack.c.l.bf16 %v497
        %v533 = vunpack.c.l.bf16 %v513
        %v534 = vunpack.c.l.bf16 %v445
        %v535 = vld [vmem:[%s1] sm:$0x1f]
        %v537 = vlaneseq
        %v538 = vshrl.u32 %v537, 7
        %v539 = vsub.s32 0, %v538
        %v540 = vrot.slane %v535, %v539
        %v541 = vlaneseq
        %v542 = vshrl.u32 %v541, 7
        %v543 = vsub.s32 1, %v542
        %v544 = vrot.slane %v535, %v543
        %v545 = vlaneseq
        %v546 = vshrl.u32 %v545, 7
        %v547 = vsub.s32 2, %v546
        %v548 = vrot.slane %v535, %v547
        %v549 = vlaneseq
        %v550 = vshrl.u32 %v549, 7
        %v551 = vsub.s32 3, %v550
        %v552 = vrot.slane %v535, %v551
        %v553 = vlaneseq
        %v554 = vshrl.u32 %v553, 7
        %v555 = vsub.s32 4, %v554
        %v556 = vrot.slane %v535, %v555
        %v562 = vmul.f32 %v515, %v540
        %v563 = vmul.f32 %v516, %v544
        %v564 = vmul.f32 %v517, %v548
        %v565 = vmul.f32 %v518, %v552
        %v566 = vmul.f32 %v519, %v556
        %v567 = vmul.f32 %v520, %v540
        %v568 = vmul.f32 %v521, %v544
        %v569 = vmul.f32 %v522, %v548
        %v570 = vmul.f32 %v523, %v552
        %v571 = vmul.f32 %v524, %v556
        %v572 = vmul.f32 %v525, %v540
        %v573 = vmul.f32 %v526, %v544
        %v574 = vmul.f32 %v527, %v548
        %v575 = vmul.f32 %v528, %v552
        %v576 = vmul.f32 %v529, %v556
        %v577 = vmul.f32 %v530, %v540
        %v578 = vmul.f32 %v531, %v544
        %v579 = vmul.f32 %v532, %v548
        %v580 = vmul.f32 %v533, %v552
        %v581 = vmul.f32 %v534, %v556
        %vm582 = vcmask 1043456
        %v583 = vsel %vm582, %v562, 0.0
        %v584 = vsel %vm582, %v563, 0.0
        %v585 = vadd.f32 %v583, %v584
        %v586 = vsel %vm582, %v564, 0.0
        %v587 = vadd.f32 %v585, %v586
        %v588 = vsel %vm582, %v565, 0.0
        %v589 = vadd.f32 %v587, %v588
        %vm590 = vcmask 519168
        %v591 = vsel %vm590, %v566, 0.0
        %v592 = vadd.f32 %v589, %v591
        %593 = vadd.xlane.f32.xlu0 %v592
        %v594 = vpop.xlane.xlu0 %593
        %v595 = vsel %vm582, %v567, 0.0
        %v596 = vsel %vm582, %v568, 0.0
        %v597 = vadd.f32 %v595, %v596
        %v598 = vsel %vm582, %v569, 0.0
        %v599 = vadd.f32 %v597, %v598
        %v600 = vsel %vm582, %v570, 0.0
        %v601 = vadd.f32 %v599, %v600
        %v602 = vsel %vm590, %v571, 0.0
        %v603 = vadd.f32 %v601, %v602
        %604 = vadd.xlane.f32.xlu0 %v603
        %v605 = vpop.xlane.xlu0 %604
        %v606 = vsel %vm582, %v572, 0.0
        %v607 = vsel %vm582, %v573, 0.0
        %v608 = vadd.f32 %v606, %v607
        %v609 = vsel %vm582, %v574, 0.0
        %v610 = vadd.f32 %v608, %v609
        %v611 = vsel %vm582, %v575, 0.0
        %v612 = vadd.f32 %v610, %v611
        %v613 = vsel %vm590, %v576, 0.0
        %v614 = vadd.f32 %v612, %v613
        %615 = vadd.xlane.f32.xlu0 %v614
        %v616 = vpop.xlane.xlu0 %615
        %v617 = vsel %vm582, %v577, 0.0
        %v618 = vsel %vm582, %v578, 0.0
        %v619 = vadd.f32 %v617, %v618
        %v620 = vsel %vm582, %v579, 0.0
        %v621 = vadd.f32 %v619, %v620
        %v622 = vsel %vm582, %v580, 0.0
        %v623 = vadd.f32 %v621, %v622
        %v624 = vsel %vm590, %v581, 0.0
        %v625 = vadd.f32 %v623, %v624
        %626 = vadd.xlane.f32.xlu0 %v625
        %v627 = vpop.xlane.xlu0 %626
        %vm628 = vcmp.ge.f32.partialorder %v594, 0.0
        %vm629 = vcmp.ge.f32.partialorder %v605, 0.0
        %vm630 = vcmp.ge.f32.partialorder %v616, 0.0
        %vm631 = vcmp.ge.f32.partialorder %v627, 0.0
        %v632 = vmul.f32 %v594, 0.01
        %v633 = vmul.f32 %v605, 0.01
        %v634 = vmul.f32 %v616, 0.01
        %v635 = vmul.f32 %v627, 0.01
        %v636 = vsel %vm628, %v594, %v632
        %v637 = vsel %vm629, %v605, %v633
        %v638 = vsel %vm630, %v616, %v634
        %v639 = vsel %vm631, %v627, %v635
        %v640 = vld [vmem:[%s3] sm:$0xf]
        %v645 = vlaneseq
        %v646 = vand.u32 %v645, 127
        %v647 = vlaneseq
        %v648 = vshrl.u32 %v647, 7
        %v649 = vsub.s32 %v646, %v648
        %v650 = vrot.slane %v636, %v649
        %v651 = vlaneseq
        %v652 = vshrl.u32 %v651, 7
        %v653 = vsub.s32 %v646, %v652
        %v654 = vrot.slane %v637, %v653
        %v655 = vlaneseq
        %v656 = vshrl.u32 %v655, 7
        %v657 = vsub.s32 %v646, %v656
        %v658 = vrot.slane %v638, %v657
        %v659 = vlaneseq
        %v660 = vshrl.u32 %v659, 7
        %v661 = vsub.s32 %v646, %v660
        %v662 = vrot.slane %v639, %v661
        %vm663 = vcmask 1041409
        %v664 = vsel %vm663, %v654, %v650
        %vm665 = vcmask 1042434
        %v666 = vsel %vm665, %v658, %v664
        %vm667 = vcmask 1043459
        %v668 = vsel %vm667, %v662, %v666
        %vm669 = vcmask 31744
        %v670 = vsel %vm669, %v668, 0
        %v673 = vsel %vm582, %v640, 0
        %675 = vmatprep.subr.mxu0 0.0
        %676 = vmatpush1.msra.mxu0 %v673
        %677 = vmatprep.subr.mxu0 0.0
        %678 = vmatpush1.msra.mxu0 0.0
        %679 = vmatprep.subr.mxu0 0.0
        %680 = vmatpush1.msra.mxu0 0.0
        %681 = vmatprep.subr.mxu0 0.0
        %682 = vmatpush1.msra.mxu0 0.0
        %683 = vmatprep.subr.mxu0 0.0
        %684 = vmatpush1.msra.mxu0 0.0
        %685 = vmatprep.subr.mxu0 0.0
        %686 = vmatpush1.msra.mxu0 0.0
        %687 = vmatprep.subr.mxu0 0.0
        %688 = vmatpush1.msra.mxu0 0.0
        %689 = vmatprep.subr.mxu0 0.0
        %690 = vmatpush1.msra.mxu0 0.0
        %691 = vmatprep.subr.mxu0 0.0
        %692 = vmatpush1.msra.mxu0 0.0
        %693 = vmatprep.subr.mxu0 0.0
        %694 = vmatpush1.msra.mxu0 0.0
        %695 = vmatprep.subr.mxu0 0.0
        %696 = vmatpush1.msra.mxu0 0.0
        %697 = vmatprep.subr.mxu0 0.0
        %698 = vmatpush1.msra.mxu0 0.0
        %699 = vmatprep.subr.mxu0 0.0
        %700 = vmatpush1.msra.mxu0 0.0
        %701 = vmatprep.subr.mxu0 0.0
        %702 = vmatpush1.msra.mxu0 0.0
        %703 = vmatprep.subr.mxu0 0.0
        %704 = vmatpush1.msra.mxu0 0.0
        %705 = vmatprep.subr.mxu0 0.0
        %706 = vmatpush1.msra.mxu0 0.0
        %707 = vmatprep.subr.mxu0 0.0
        %708 = vmatpush1.msra.mxu0 0.0
        %709 = vmatprep.subr.mxu0 0.0
        %710 = vmatpush1.msra.mxu0 0.0
        %711 = vmatprep.subr.mxu0 0.0
        %712 = vmatpush1.msra.mxu0 0.0
        %713 = vmatprep.subr.mxu0 0.0
        %714 = vmatpush1.msra.mxu0 0.0
        %715 = vmatprep.subr.mxu0 0.0
        %716 = vmatpush1.msra.mxu0 0.0
        %717 = vmatprep.subr.mxu0 0.0
        %718 = vmatpush1.msra.mxu0 0.0
        %719 = vmatprep.subr.mxu0 0.0
        %720 = vmatpush1.msra.mxu0 0.0
        %721 = vmatprep.subr.mxu0 0.0
        %722 = vmatpush1.msra.mxu0 0.0
        %723 = vmatprep.subr.mxu0 0.0
        %724 = vmatpush1.msra.mxu0 0.0
        %725 = vmatprep.subr.mxu0 0.0
        %726 = vmatpush1.msra.mxu0 0.0
        %727 = vmatprep.subr.mxu0 0.0
        %728 = vmatpush1.msra.mxu0 0.0
        %729 = vmatprep.subr.mxu0 0.0
        %730 = vmatpush1.msra.mxu0 0.0
        %731 = vmatprep.subr.mxu0 0.0
        %732 = vmatpush1.msra.mxu0 0.0
        %733 = vmatprep.subr.mxu0 0.0
        %734 = vmatpush1.msra.mxu0 0.0
        %735 = vmatprep.subr.mxu0 0.0
        %736 = vmatpush1.msra.mxu0 0.0
        %737 = vmatprep.subr.mxu0 0.0
        %738 = vmatpush1.msra.mxu0 0.0
        %739 = vmatprep.mubr.f32.mxu0 0.0
        %740 = vmatmul.mubr.f32.gmra.mrb[0].mxu0 %v670
        %v741 = vpop.f32.mrb[0].mxu0
        %v742 = vadd.f32 0.0, %v741
        %v743 = vpop.f32.mrb[0].mxu0
        %744 = vdwg.mxu0
        %v745 = vld [vmem:[%s2] sm:$0xff]
        %v746 = vld [vmem:[%s2 + $0x8] sm:$0xff]
        %v747 = vld [vmem:[%s2 + $0x10] sm:$0xff]
        %v748 = vld [vmem:[%s2 + $0x18] sm:$0xff]
        %v750 = vsel %vm669, %v745, 0
        %v753 = vsel %vm669, %v746, 0
        %v756 = vsel %vm669, %v747, 0
        %v759 = vsel %vm669, %v748, 0
        %v762 = vsel %vm582, %v742, 0
        %764 = vmatprep.subr.mxu0 0.0
        %765 = vmatpush1.msra.mxu0 %v762
        %766 = vmatprep.subr.mxu0 0.0
        %767 = vmatpush1.msra.mxu0 0.0
        %768 = vmatprep.subr.mxu0 0.0
        %769 = vmatpush1.msra.mxu0 0.0
        %770 = vmatprep.subr.mxu0 0.0
        %771 = vmatpush1.msra.mxu0 0.0
        %772 = vmatprep.subr.mxu0 0.0
        %773 = vmatpush1.msra.mxu0 0.0
        %774 = vmatprep.subr.mxu0 0.0
        %775 = vmatpush1.msra.mxu0 0.0
        %776 = vmatprep.subr.mxu0 0.0
        %777 = vmatpush1.msra.mxu0 0.0
        %778 = vmatprep.subr.mxu0 0.0
        %779 = vmatpush1.msra.mxu0 0.0
        %780 = vmatprep.subr.mxu0 0.0
        %781 = vmatpush1.msra.mxu0 0.0
        %782 = vmatprep.subr.mxu0 0.0
        %783 = vmatpush1.msra.mxu0 0.0
        %784 = vmatprep.subr.mxu0 0.0
        %785 = vmatpush1.msra.mxu0 0.0
        %786 = vmatprep.subr.mxu0 0.0
        %787 = vmatpush1.msra.mxu0 0.0
        %788 = vmatprep.subr.mxu0 0.0
        %789 = vmatpush1.msra.mxu0 0.0
        %790 = vmatprep.subr.mxu0 0.0
        %791 = vmatpush1.msra.mxu0 0.0
        %792 = vmatprep.subr.mxu0 0.0
        %793 = vmatpush1.msra.mxu0 0.0
        %794 = vmatprep.subr.mxu0 0.0
        %795 = vmatpush1.msra.mxu0 0.0
        %796 = vmatprep.subr.mxu0 0.0
        %797 = vmatpush1.msra.mxu0 0.0
        %798 = vmatprep.subr.mxu0 0.0
        %799 = vmatpush1.msra.mxu0 0.0
        %800 = vmatprep.subr.mxu0 0.0
        %801 = vmatpush1.msra.mxu0 0.0
        %802 = vmatprep.subr.mxu0 0.0
        %803 = vmatpush1.msra.mxu0 0.0
        %804 = vmatprep.subr.mxu0 0.0
        %805 = vmatpush1.msra.mxu0 0.0
        %806 = vmatprep.subr.mxu0 0.0
        %807 = vmatpush1.msra.mxu0 0.0
        %808 = vmatprep.subr.mxu0 0.0
        %809 = vmatpush1.msra.mxu0 0.0
        %810 = vmatprep.subr.mxu0 0.0
        %811 = vmatpush1.msra.mxu0 0.0
        %812 = vmatprep.subr.mxu0 0.0
        %813 = vmatpush1.msra.mxu0 0.0
        %814 = vmatprep.subr.mxu0 0.0
        %815 = vmatpush1.msra.mxu0 0.0
        %816 = vmatprep.subr.mxu0 0.0
        %817 = vmatpush1.msra.mxu0 0.0
        %818 = vmatprep.subr.mxu0 0.0
        %819 = vmatpush1.msra.mxu0 0.0
        %820 = vmatprep.subr.mxu0 0.0
        %821 = vmatpush1.msra.mxu0 0.0
        %822 = vmatprep.subr.mxu0 0.0
        %823 = vmatpush1.msra.mxu0 0.0
        %824 = vmatprep.subr.mxu0 0.0
        %825 = vmatpush1.msra.mxu0 0.0
        %826 = vmatprep.subr.mxu0 0.0
        %827 = vmatpush1.msra.mxu0 0.0
        %828 = vmatprep.mubr.f32.mxu0 0.0
        %829 = vmatmul.mubr.f32.gmra.mrb[0].mxu0 %v750
        %v830 = vpop.f32.mrb[0].mxu0
        %v831 = vadd.f32 0.0, %v830
        %v832 = vpop.f32.mrb[0].mxu0
        %833 = vmatprep.mubr.f32.mxu0 0.0
        %834 = vmatmul.mubr.f32.gmra.mrb[0].mxu0 %v753
        %v835 = vpop.f32.mrb[0].mxu0
        %v836 = vadd.f32 0.0, %v835
        %v837 = vpop.f32.mrb[0].mxu0
        %838 = vmatprep.mubr.f32.mxu0 0.0
        %839 = vmatmul.mubr.f32.gmra.mrb[0].mxu0 %v756
        %v840 = vpop.f32.mrb[0].mxu0
        %v841 = vadd.f32 0.0, %v840
        %v842 = vpop.f32.mrb[0].mxu0
        %843 = vmatprep.mubr.f32.mxu0 0.0
        %844 = vmatmul.mubr.f32.gmra.mrb[0].mxu0 %v759
        %v845 = vpop.f32.mrb[0].mxu0
        %v846 = vadd.f32 0.0, %v845
        %v847 = vpop.f32.mrb[0].mxu0
        %848 = vdwg.mxu0
        %vm849 = vcmask 261120
        %v850 = vsel %vm849, %v831, -inf
        %v851 = vsel %vm849, %v836, -inf
        %v852 = vsel %vm849, %v841, -inf
        %v853 = vsel %vm849, %v846, -inf
        %v854 = vmax.f32 %v850, %v851
        %v855 = vmax.f32 %v852, %v853
        %v856 = vmax.f32 %v854, %v855
        %857 = vmax.xlane.f32.xlu0 %v856
        %v858 = vpop.xlane.xlu0 %857
        %v859 = vrot.slane %v858, 4
        %v860 = vmax.f32 %v858, %v859
        %v861 = vrot.slane %v860, 2
        %v862 = vmax.f32 %v860, %v861
        %v863 = vrot.slane %v862, 1
        %v864 = vmax.f32 %v862, %v863
        %s865 = vtos %v864
        %v866 = vstv %s865
        %v867 = vsub.f32 %v831, %v866
        %v868 = vsub.f32 %v836, %v866
        %v869 = vsub.f32 %v841, %v866
        %v870 = vsub.f32 %v846, %v866
        %v871 = vmul.f32 %v867, 1.442695
        %v872 = vpow.pop %v871
        %v873 = vmul.f32 %v868, 1.442695
        %v874 = vpow.pop %v873
        %v875 = vmul.f32 %v869, 1.442695
        %v876 = vpow.pop %v875
        %v877 = vmul.f32 %v870, 1.442695
        %v878 = vpow.pop %v877
        %v879 = vsel %vm849, %v872, 0.0
        %v880 = vsel %vm849, %v874, 0.0
        %v881 = vadd.f32 %v879, %v880
        %v882 = vsel %vm849, %v876, 0.0
        %v883 = vadd.f32 %v881, %v882
        %v884 = vsel %vm849, %v878, 0.0
        %v885 = vadd.f32 %v883, %v884
        %886 = vadd.xlane.f32.xlu0 %v885
        %v887 = vpop.xlane.xlu0 %886
        %v888 = vrot.slane %v887, 4
        %v889 = vadd.f32 %v887, %v888
        %v890 = vrot.slane %v889, 2
        %v891 = vadd.f32 %v889, %v890
        %v892 = vrot.slane %v891, 1
        %v893 = vadd.f32 %v891, %v892
        %s894 = vtos %v893
        %v895 = vstv %s894
        %v896 = vrcp.pop %v895
        %v897 = vmul.f32 %v872, %v896
        %v898 = vmul.f32 %v874, %v896
        %v899 = vmul.f32 %v876, %v896
        %v900 = vmul.f32 %v878, %v896
        %901 = vst.msk [vmem:[%s190] sm:$0xff] %vm849, %v897
        %902 = vst.msk [vmem:[%s190 + $0x8] sm:$0xff] %vm849, %v898
        %903 = vst.msk [vmem:[%s190 + $0x10] sm:$0xff] %vm849, %v899
        %904 = vst.msk [vmem:[%s190 + $0x18] sm:$0xff] %vm849, %v900
        %s905 = sand.u32 %s115, 1
        %s906 = scalar_lea.sflag [#allocation3], %s905
        %s907 = sand.u32 %s115, 1
        %s908 = smul.addr %s907, 32
        %s909 = scalar_lea.vmem [#allocation2], %s908
        // Predicated region
        $region37: #{basic_block_forward.13} parent=35 // pred_check
          %p910 = pneg %p125
        $region38: #{basic_block_forward.13} parent=35 // pred_check_branch
          %912 = sbr.rel (%p910) target = $region40
        $region39: #{basic_block_forward.13} parent=35 // pred_region
          %s914 = ssub.s32 512, 512
          %915 = vsyncadd %s906, %s914
          %s916 = smul.addr %s18, 4
          %s917 = smul.addr %s916, 128
          %s918 = scalar_lea.hbm %s4, %s917
          %s919 = sshll.u32 %s909, 4
          %s920 = int_to_ptr.vmem [resolvable:$true] %s919
          %925 = dma.vmem_to_hbm [thread:$0]  %s920, 512, %s918, %s906, 128, 128, 8
        $region40: #{basic_block_forward.13} parent=35 // pred_fallthru
          _
      $region36: #{basic_block_forward.13} parent=5 // pred_fallthru
        _
      %p926 = scmp.le.s32.totalorder 2, %s13
      // Predicated region
      $region41: #{basic_block_forward.13} parent=5 // pred_check
        %p927 = pneg %p926
      $region42: #{basic_block_forward.13} parent=5 // pred_check_branch
        %929 = sbr.rel (%p927) target = $region44
      $region43: #{basic_block_forward.13} parent=5 // pred_region
        %s930 = ssub.s32 %s13, 2
        // Predicated region
        $region45: #{basic_block_forward.13} parent=43 // pred_check
          %p931 = pneg %p131
        $region46: #{basic_block_forward.13} parent=43 // pred_check_branch
          %933 = sbr.rel (%p931) target = $region48
        $region47: #{basic_block_forward.13} parent=43 // pred_region
          %s934 = sand.u32 %s116, 1
          %s935 = scalar_lea.sflag [#allocation3], %s934
          %s936 = sand.u32 %s116, 1
          %s937 = smul.addr %s936, 32
          %s938 = scalar_lea.vmem [#allocation2], %s937
          %939 = dma.done %s935, 512
        $region48: #{basic_block_forward.13} parent=43 // pred_fallthru
          _
      $region44: #{basic_block_forward.13} parent=5 // pred_fallthru
        _
    $region6: #{basic_block_forward.13} parent=1 // loop_footer
      %s17 = sadd.s32 1, %s13
    $region7: #{basic_block_forward.13} parent=1 // loop_footer_branch
      %12 = sbr.rel target = $region3
    $region8: #{basic_block_forward.13} parent=1 // loop_exit
      _
    %940 = vsyncpa [#allocation3], 1
    %s941 = scalar_lea.sflag [#allocation3], 1
    %942 = vsyncpa %s941, 1

// kernel: basic_block_forward.9
$region0: #{basic_block_forward.9}
  #allocation0 [shape = 'u32[]', space=smem, size = 0x4, offset = 0x4, fixed_abs, tag = 'smem constant byte address 0x4 - core index']
  #allocation1 [shape = 'u32[144,128]{1,0:T(1,128)}', space=vmem, size = 0x12000, scoped, tag = 'internal scratch']
  %s0 = inlined_call_operand.vmem [shape: bf16[2,4,6,6,64], index: 0, kind: input, shape index: {}]
  %s1 = inlined_call_operand.vmem [shape: bf16[1600,64], index: 1, kind: input, shape index: {}]
  %s2 = inlined_call_operand.vmem [shape: bf16[2,16,64], index: 2, kind: output, shape index: {0}]
  %s3 = inlined_call_operand.vmem [shape: f32[2,2,64], index: 3, kind: output, shape index: {1}]
  %4 = xla_tuple %s2, %s3
  %s5 = sld [smem:[#allocation0]]
  $region49: #{basic_block_forward.9} parent=0
    _
  %s7 = ssub.s32 1, %s5
  %s8 = scalar_select 0, %s7, %s5
  loop: start=0, step=1, limit=4
  $region2: #{basic_block_forward.9} parent=0 // loop_pre_header
    _
  $region3: #{basic_block_forward.9} parent=0 // loop_header
    %s10 = sphi 0, %s14
    %p11 = scmp.ge.s32.totalorder %s10, 4
    %s20 = sphi 0, %s22
    %s23 = sphi 0, %s20
    %s24 = sphi 0, %s23
    %s40 = sphi 0, %s24
    %s44 = sphi 0, %s44
    %s46 = sphi 0, %s44
    %s47 = sphi 0, %s46
    %s61 = sphi 0, %s47
    %s67 = sphi 0, %s69
    %s70 = sphi 0, %s67
    %s71 = sphi 0, %s70
    %s87 = sphi 0, %s71
    %s93 = sphi 0, %s95
    %s96 = sphi 0, %s93
    %s97 = sphi 0, %s96
    %s113 = sphi 0, %s97
  $region4: #{basic_block_forward.9} parent=0 // loop_header_branch
    %13 = sbr.rel (%p11) target = $region8
  $region5: #{basic_block_forward.9} parent=0 // loop_body
    %s15 = ssub.s32 %s10, 1
    %s16 = ssub.s32 %s10, 2
    %s17 = sadd.s32 %s10, 1
    %s18 = ssub.s32 %s10, %s17
    %p19 = scmp.eq.s32.totalorder %s18, 0
    %s21 = sadd.s32 %s20, 1
    %s22 = scalar_select %p19, %s20, %s21
    %p25 = pneg %p19
    %p26 = scmp.eq.s32.totalorder %s10, 1
    %p27 = por %p25, %p26
    %p28 = scmp.ne.s32.totalorder %s20, %s23
    %p29 = scmp.eq.s32.totalorder %s10, 0
    %p30 = por %p28, %p29
    %p31 = scmp.ne.s32.totalorder %s20, %s23
    %p32 = scmp.eq.s32.totalorder %s15, 1
    %p33 = por %p31, %p32
    %p34 = scmp.ne.s32.totalorder %s23, %s24
    %p35 = scmp.eq.s32.totalorder %s15, 0
    %p36 = por %p34, %p35
    %p37 = scmp.ne.s32.totalorder %s23, %s24
    %p38 = scmp.eq.s32.totalorder %s16, 1
    %p39 = por %p37, %p38
    %p41 = scmp.ne.s32.totalorder %s24, %s40
    %p42 = scmp.eq.s32.totalorder %s16, 0
    %p43 = por %p41, %p42
    %s45 = sadd.s32 %s44, 1
    %p48 = scmp.eq.s32.totalorder %s10, 1
    %p49 = scmp.ne.s32.totalorder %s44, %s46
    %p50 = scmp.eq.s32.totalorder %s10, 0
    %p51 = por %p49, %p50
    %p52 = scmp.ne.s32.totalorder %s44, %s46
    %p53 = scmp.eq.s32.totalorder %s15, 1
    %p54 = por %p52, %p53
    %p55 = scmp.ne.s32.totalorder %s46, %s47
    %p56 = scmp.eq.s32.totalorder %s15, 0
    %p57 = por %p55, %p56
    %p58 = scmp.ne.s32.totalorder %s46, %s47
    %p59 = scmp.eq.s32.totalorder %s16, 1
    %p60 = por %p58, %p59
    %p62 = scmp.ne.s32.totalorder %s47, %s61
    %p63 = scmp.eq.s32.totalorder %s16, 0
    %p64 = por %p62, %p63
    %s65 = ssub.s32 %s10, %s17
    %p66 = scmp.eq.s32.totalorder %s65, 0
    %s68 = sadd.s32 %s67, 1
    %s69 = scalar_select %p66, %s67, %s68
    %p72 = pneg %p66
    %p73 = scmp.eq.s32.totalorder %s10, 1
    %p74 = por %p72, %p73
    %p75 = scmp.ne.s32.totalorder %s67, %s70
    %p76 = scmp.eq.s32.totalorder %s10, 0
    %p77 = por %p75, %p76
    %p78 = scmp.ne.s32.totalorder %s67, %s70
    %p79 = scmp.eq.s32.totalorder %s15, 1
    %p80 = por %p78, %p79
    %p81 = scmp.ne.s32.totalorder %s70, %s71
    %p82 = scmp.eq.s32.totalorder %s15, 0
    %p83 = por %p81, %p82
    %p84 = scmp.ne.s32.totalorder %s70, %s71
    %p85 = scmp.eq.s32.totalorder %s16, 1
    %p86 = por %p84, %p85
    %p88 = scmp.ne.s32.totalorder %s71, %s87
    %p89 = scmp.eq.s32.totalorder %s16, 0
    %p90 = por %p88, %p89
    %s91 = ssub.s32 %s10, %s17
    %p92 = scmp.eq.s32.totalorder %s91, 0
    %s94 = sadd.s32 %s93, 1
    %s95 = scalar_select %p92, %s93, %s94
    %p98 = pneg %p92
    %p99 = scmp.eq.s32.totalorder %s10, 1
    %p100 = por %p98, %p99
    %p101 = scmp.ne.s32.totalorder %s93, %s96
    %p102 = scmp.eq.s32.totalorder %s10, 0
    %p103 = por %p101, %p102
    %p104 = scmp.ne.s32.totalorder %s93, %s96
    %p105 = scmp.eq.s32.totalorder %s15, 1
    %p106 = por %p104, %p105
    %p107 = scmp.ne.s32.totalorder %s96, %s97
    %p108 = scmp.eq.s32.totalorder %s15, 0
    %p109 = por %p107, %p108
    %p110 = scmp.ne.s32.totalorder %s96, %s97
    %p111 = scmp.eq.s32.totalorder %s16, 1
    %p112 = por %p110, %p111
    %p114 = scmp.ne.s32.totalorder %s97, %s113
    %p115 = scmp.eq.s32.totalorder %s16, 0
    %p116 = por %p114, %p115
    %p117 = scmp.le.s32.totalorder 1, %s10
    %p118 = scmp.lt.s32.totalorder %s10, 3
    %p119 = pnand %p117, %p118
    %p120 = pneg %p119
    // Predicated region
    $region9: #{basic_block_forward.9} parent=5 // pred_check
      _
    $region10: #{basic_block_forward.9} parent=5 // pred_check_branch
      %122 = sbr.rel (%p119) target = $region12
    $region11: #{basic_block_forward.9} parent=5 // pred_region
      %s123 = ssub.s32 %s10, 1
      // Predicated region
      $region13: #{basic_block_forward.9} parent=11 // pred_check
        %p124 = pneg %p57
      $region14: #{basic_block_forward.9} parent=11 // pred_check_branch
        %126 = sbr.rel (%p124) target = $region16
      $region15: #{basic_block_forward.9} parent=11 // pred_region
        _
      $region16: #{basic_block_forward.9} parent=11 // pred_fallthru
        _
    $region12: #{basic_block_forward.9} parent=5 // pred_fallthru
      _
    %p127 = scmp.lt.s32.totalorder %s10, 2
    // Predicated region
    $region17: #{basic_block_forward.9} parent=5 // pred_check
      %p128 = pneg %p127
    $region18: #{basic_block_forward.9} parent=5 // pred_check_branch
      %130 = sbr.rel (%p128) target = $region20
    $region19: #{basic_block_forward.9} parent=5 // pred_region
      // Predicated region
      $region21: #{basic_block_forward.9} parent=19 // pred_check
        %p131 = pneg %p30
      $region22: #{basic_block_forward.9} parent=19 // pred_check_branch
        %133 = sbr.rel (%p131) target = $region24
      $region23: #{basic_block_forward.9} parent=19 // pred_region
        %p134 = scmp.lt.s32.totalorder %s10, 1
        %s135 = scalar_select %p134, %s10, 1
        %s136 = smul.addr %s135, 24
        %s137 = smul.addr %s136, 4
        %s138 = scalar_lea.vmem %s0, %s137
      $region24: #{basic_block_forward.9} parent=19 // pred_fallthru
        _
    $region20: #{basic_block_forward.9} parent=5 // pred_fallthru
      _
    %p139 = scmp.le.s32.totalorder 1, %s10
    %p140 = scmp.lt.s32.totalorder %s10, 3
    %p141 = pnand %p139, %p140
    %p142 = pneg %p141
    // Predicated region
    $region25: #{basic_block_forward.9} parent=5 // pred_check
      _
    $region26: #{basic_block_forward.9} parent=5 // pred_check_branch
      %144 = sbr.rel (%p141) target = $region28
    $region27: #{basic_block_forward.9} parent=5 // pred_region
      %s145 = ssub.s32 %s10, 1
      %p146 = scmp.lt.s32.totalorder %s15, 1
      %s147 = scalar_select %p146, %s15, 1
      %s148 = smul.addr %s147, 24
      %s149 = smul.addr %s148, 4
      %s150 = scalar_lea.vmem %s0, %s149
      %p151 = pneg %p36
      %p152 = pneg %p33
      %p153 = pneg %p57
      %p154 = pneg %p54
      %p155 = pneg %p83
      %p156 = pneg %p80
      %p157 = scmp.lt.s32.totalorder %s15, 1
      %s158 = scalar_select %p157, %s15, 1
      %s159 = smul.addr %s158, 2
      %s160 = smul.addr %s159, 4
      %s161 = scalar_lea.vmem %s2, %s160
      %p162 = pneg %p109
      %p163 = pneg %p106
      %p164 = scmp.lt.s32.totalorder %s15, 1
      %s165 = scalar_select %p164, %s15, 1
      %s166 = smul.addr %s165, 2
      %s167 = scalar_lea.vmem %s3, %s166
      %p168 = scmp.lt.s32.totalorder %s15, 1
      %s169 = scalar_select %p168, %s15, 1
      %s170 = smul.addr %s169, 24
      %s171 = smul.addr %s170, 4
      %s172 = scalar_lea.vmem %s0, %s171
      %p173 = scmp.lt.s32.totalorder %s15, 1
      %s174 = scalar_select %p173, %s15, 1
      %s175 = smul.addr %s174, 2
      %s176 = smul.addr %s175, 4
      %s177 = scalar_lea.vmem %s2, %s176
      %p178 = scmp.lt.s32.totalorder %s15, 1
      %s179 = scalar_select %p178, %s15, 1
      %s180 = smul.addr %s179, 2
      %s181 = scalar_lea.vmem %s3, %s180
      %v183 = vld [vmem:[%s172] sm:$0x3]
      %v184 = vld [vmem:[%s172 + $0x4] sm:$0x3]
      %v185 = vld [vmem:[%s172 + $0x8] sm:$0x3]
      %v186 = vld [vmem:[%s172 + $0xc] sm:$0x3]
      %s187 = scalar_lea.vmem %s172, 24
      %v188 = vld [vmem:[%s187] sm:$0x3]
      %v189 = vld [vmem:[%s187 + $0x4] sm:$0x3]
      %v190 = vld [vmem:[%s187 + $0x8] sm:$0x3]
      %v191 = vld [vmem:[%s187 + $0xc] sm:$0x3]
      %v192 = vld [vmem:[%s172] sm:$0x7]
      %v193 = vld [vmem:[%s172 + $0x4] sm:$0x7]
      %v194 = vld [vmem:[%s172 + $0x8] sm:$0x7]
      %v195 = vld [vmem:[%s172 + $0xc] sm:$0x7]
      %v196 = vld [vmem:[%s187] sm:$0x7]
      %v197 = vld [vmem:[%s187 + $0x4] sm:$0x7]
      %v198 = vld [vmem:[%s187 + $0x8] sm:$0x7]
      %v199 = vld [vmem:[%s187 + $0xc] sm:$0x7]
      %v200 = vld [vmem:[%s172] sm:$0x6]
      %v201 = vld [vmem:[%s172 + $0x4] sm:$0x6]
      %v202 = vld [vmem:[%s172 + $0x8] sm:$0x6]
      %v203 = vld [vmem:[%s172 + $0xc] sm:$0x6]
      %s204 = scalar_lea.vmem %s172, 48
      %v205 = vld [vmem:[%s204] sm:$0x3]
      %v206 = vld [vmem:[%s204 + $0x4] sm:$0x3]
      %v207 = vld [vmem:[%s204 + $0x8] sm:$0x3]
      %v208 = vld [vmem:[%s204 + $0xc] sm:$0x3]
      %s209 = scalar_lea.vmem %s172, 72
      %v210 = vld [vmem:[%s209] sm:$0x3]
      %v211 = vld [vmem:[%s209 + $0x4] sm:$0x3]
      %v212 = vld [vmem:[%s209 + $0x8] sm:$0x3]
      %v213 = vld [vmem:[%s209 + $0xc] sm:$0x3]
      %v214 = vld [vmem:[%s204] sm:$0x7]
      %v215 = vld [vmem:[%s204 + $0x4] sm:$0x7]
      %v216 = vld [vmem:[%s204 + $0x8] sm:$0x7]
      %v217 = vld [vmem:[%s204 + $0xc] sm:$0x7]
      %v218 = vld [vmem:[%s209] sm:$0x7]
      %v219 = vld [vmem:[%s209 + $0x4] sm:$0x7]
      %v220 = vld [vmem:[%s209 + $0x8] sm:$0x7]
      %v221 = vld [vmem:[%s209 + $0xc] sm:$0x7]
      %v222 = vld [vmem:[%s204] sm:$0x6]
      %v223 = vld [vmem:[%s204 + $0x4] sm:$0x6]
      %v224 = vld [vmem:[%s204 + $0x8] sm:$0x6]
      %v225 = vld [vmem:[%s204 + $0xc] sm:$0x6]
      %s226 = scalar_lea.vmem %s172, 4
      %v227 = vld [vmem:[%s226] sm:$0x3]
      %v228 = vld [vmem:[%s226 + $0x4] sm:$0x3]
      %v229 = vld [vmem:[%s226 + $0x8] sm:$0x3]
      %v230 = vld [vmem:[%s226 + $0xc] sm:$0x3]
      %s231 = scalar_lea.vmem %s172, 28
      %v232 = vld [vmem:[%s231] sm:$0x3]
      %v233 = vld [vmem:[%s231 + $0x4] sm:$0x3]
      %v234 = vld [vmem:[%s231 + $0x8] sm:$0x3]
      %v235 = vld [vmem:[%s231 + $0xc] sm:$0x3]
      %v236 = vld [vmem:[%s226] sm:$0x7]
      %v237 = vld [vmem:[%s226 + $0x4] sm:$0x7]
      %v238 = vld [vmem:[%s226 + $0x8] sm:$0x7]
      %v239 = vld [vmem:[%s226 + $0xc] sm:$0x7]
      %v240 = vld [vmem:[%s231] sm:$0x7]
      %v241 = vld [vmem:[%s231 + $0x4] sm:$0x7]
      %v242 = vld [vmem:[%s231 + $0x8] sm:$0x7]
      %v243 = vld [vmem:[%s231 + $0xc] sm:$0x7]
      %v244 = vld [vmem:[%s226] sm:$0x6]
      %v245 = vld [vmem:[%s226 + $0x4] sm:$0x6]
      %v246 = vld [vmem:[%s226 + $0x8] sm:$0x6]
      %v247 = vld [vmem:[%s226 + $0xc] sm:$0x6]
      %s248 = scalar_lea.vmem %s172, 52
      %v249 = vld [vmem:[%s248] sm:$0x3]
      %v250 = vld [vmem:[%s248 + $0x4] sm:$0x3]
      %v251 = vld [vmem:[%s248 + $0x8] sm:$0x3]
      %v252 = vld [vmem:[%s248 + $0xc] sm:$0x3]
      %s253 = scalar_lea.vmem %s172, 76
      %v254 = vld [vmem:[%s253] sm:$0x3]
      %v255 = vld [vmem:[%s253 + $0x4] sm:$0x3]
      %v256 = vld [vmem:[%s253 + $0x8] sm:$0x3]
      %v257 = vld [vmem:[%s253 + $0xc] sm:$0x3]
      %v258 = vld [vmem:[%s248] sm:$0x7]
      %v259 = vld [vmem:[%s248 + $0x4] sm:$0x7]
      %v260 = vld [vmem:[%s248 + $0x8] sm:$0x7]
      %v261 = vld [vmem:[%s248 + $0xc] sm:$0x7]
      %v262 = vld [vmem:[%s253] sm:$0x7]
      %v263 = vld [vmem:[%s253 + $0x4] sm:$0x7]
      %v264 = vld [vmem:[%s253 + $0x8] sm:$0x7]
      %v265 = vld [vmem:[%s253 + $0xc] sm:$0x7]
      %v266 = vld [vmem:[%s248] sm:$0x6]
      %v267 = vld [vmem:[%s248 + $0x4] sm:$0x6]
      %v268 = vld [vmem:[%s248 + $0x8] sm:$0x6]
      %v269 = vld [vmem:[%s248 + $0xc] sm:$0x6]
      %s270 = scalar_lea.vmem %s172, 8
      %v271 = vld [vmem:[%s270] sm:$0x3]
      %v272 = vld [vmem:[%s270 + $0x4] sm:$0x3]
      %v273 = vld [vmem:[%s270 + $0x8] sm:$0x3]
      %v274 = vld [vmem:[%s270 + $0xc] sm:$0x3]
      %s275 = scalar_lea.vmem %s172, 32
      %v276 = vld [vmem:[%s275] sm:$0x3]
      %v277 = vld [vmem:[%s275 + $0x4] sm:$0x3]
      %v278 = vld [vmem:[%s275 + $0x8] sm:$0x3]
      %v279 = vld [vmem:[%s275 + $0xc] sm:$0x3]
      %v280 = vld [vmem:[%s270] sm:$0x7]
      %v281 = vld [vmem:[%s270 + $0x4] sm:$0x7]
      %v282 = vld [vmem:[%s270 + $0x8] sm:$0x7]
      %v283 = vld [vmem:[%s270 + $0xc] sm:$0x7]
      %v284 = vld [vmem:[%s275] sm:$0x7]
      %v285 = vld [vmem:[%s275 + $0x4] sm:$0x7]
      %v286 = vld [vmem:[%s275 + $0x8] sm:$0x7]
      %v287 = vld [vmem:[%s275 + $0xc] sm:$0x7]
      %v288 = vld [vmem:[%s270] sm:$0x6]
      %v289 = vld [vmem:[%s270 + $0x4] sm:$0x6]
      %v290 = vld [vmem:[%s270 + $0x8] sm:$0x6]
      %v291 = vld [vmem:[%s270 + $0xc] sm:$0x6]
      %v296 = vunpack.c.l.b16 %v188
      %v297 = vunpack.c.l.b16 %v189
      %v298 = vunpack.c.l.b16 %v190
      %v299 = vunpack.c.l.b16 %v191
      %v300 = vpack.c.b16 %v296, %v296
      %v301 = vpack.c.b16 %v297, %v297
      %v302 = vpack.c.b16 %v298, %v298
      %v303 = vpack.c.b16 %v299, %v299
      %304 = vrot.lane.b32.xlu0 %v300, 64
      %v305 = vpop.permute.xlu0 %304
      %306 = vrot.lane.b32.xlu0 %v301, 64
      %v307 = vpop.permute.xlu0 %306
      %308 = vrot.lane.b32.xlu0 %v302, 64
      %v309 = vpop.permute.xlu0 %308
      %310 = vrot.lane.b32.xlu0 %v303, 64
      %v311 = vpop.permute.xlu0 %310
      %v316 = vunpack.c.l.b16 %v192
      %v317 = vunpack.c.l.b16 %v193
      %v318 = vunpack.c.l.b16 %v194
      %v319 = vunpack.c.l.b16 %v195
      %v320 = vpack.c.b16 %v316, %v316
      %v321 = vpack.c.b16 %v317, %v317
      %v322 = vpack.c.b16 %v318, %v318
      %v323 = vpack.c.b16 %v319, %v319
      %v325 = vshrl.u32 %v320, 16
      %v327 = vshll.u32 %v320, 16
      %v329 = vrot.slane %v327, 1
      %v330 = vor.u32 %v325, %v329
      %v332 = vshrl.u32 %v321, 16
      %v334 = vshll.u32 %v321, 16
      %v336 = vrot.slane %v334, 1
      %v337 = vor.u32 %v332, %v336
      %v339 = vshrl.u32 %v322, 16
      %v341 = vshll.u32 %v322, 16
      %v343 = vrot.slane %v341, 1
      %v344 = vor.u32 %v339, %v343
      %v346 = vshrl.u32 %v323, 16
      %v348 = vshll.u32 %v323, 16
      %v350 = vrot.slane %v348, 1
      %v351 = vor.u32 %v346, %v350
      %v356 = vunpack.c.l.b16 %v196
      %v357 = vunpack.c.l.b16 %v197
      %v358 = vunpack.c.l.b16 %v198
      %v359 = vunpack.c.l.b16 %v199
      %v360 = vpack.c.b16 %v356, %v356
      %v361 = vpack.c.b16 %v357, %v357
      %v362 = vpack.c.b16 %v358, %v358
      %v363 = vpack.c.b16 %v359, %v359
      %v365 = vshrl.u32 %v360, 16
      %v367 = vshll.u32 %v360, 16
      %v369 = vrot.slane %v367, 1
      %v370 = vor.u32 %v365, %v369
      %v372 = vshrl.u32 %v361, 16
      %v374 = vshll.u32 %v361, 16
      %v376 = vrot.slane %v374, 1
      %v377 = vor.u32 %v372, %v376
      %v379 = vshrl.u32 %v362, 16
      %v381 = vshll.u32 %v362, 16
      %v383 = vrot.slane %v381, 1
      %v384 = vor.u32 %v379, %v383
      %v386 = vshrl.u32 %v363, 16
      %v388 = vshll.u32 %v363, 16
      %v390 = vrot.slane %v388, 1
      %v391 = vor.u32 %v386, %v390
      %392 = vrot.lane.b32.xlu0 %v370, 64
      %v393 = vpop.permute.xlu0 %392
      %394 = vrot.lane.b32.xlu0 %v377, 64
      %v395 = vpop.permute.xlu0 %394
      %396 = vrot.lane.b32.xlu0 %v384, 64
      %v397 = vpop.permute.xlu0 %396
      %398 = vrot.lane.b32.xlu0 %v391, 64
      %v399 = vpop.permute.xlu0 %398
      %v404 = vunpack.c.l.b16 %v200
      %v405 = vunpack.c.l.b16 %v201
      %v406 = vunpack.c.l.b16 %v202
      %v407 = vunpack.c.l.b16 %v203
      %v408 = vpack.c.b16 %v404, %v404
      %v409 = vpack.c.b16 %v405, %v405
      %v410 = vpack.c.b16 %v406, %v406
      %v411 = vpack.c.b16 %v407, %v407
      %v412 = vrot.slane %v408, 1
      %v413 = vrot.slane %v409, 1
      %v414 = vrot.slane %v410, 1
      %v415 = vrot.slane %v411, 1
      %v420 = vunpack.c.l.b16 %v205
      %v421 = vunpack.c.l.b16 %v206
      %v422 = vunpack.c.l.b16 %v207
      %v423 = vunpack.c.l.b16 %v208
      %v424 = vpack.c.b16 %v420, %v420
      %v425 = vpack.c.b16 %v421, %v421
      %v426 = vpack.c.b16 %v422, %v422
      %v427 = vpack.c.b16 %v423, %v423
      %428 = vrot.lane.b32.xlu0 %v424, 64
      %v429 = vpop.permute.xlu0 %428
      %430 = vrot.lane.b32.xlu0 %v425, 64
      %v431 = vpop.permute.xlu0 %430
      %432 = vrot.lane.b32.xlu0 %v426, 64
      %v433 = vpop.permute.xlu0 %432
      %434 = vrot.lane.b32.xlu0 %v427, 64
      %v435 = vpop.permute.xlu0 %434
      %v440 = vunpack.c.l.b16 %v214
      %v441 = vunpack.c.l.b16 %v215
      %v442 = vunpack.c.l.b16 %v216
      %v443 = vunpack.c.l.b16 %v217
      %v444 = vpack.c.b16 %v440, %v440
      %v445 = vpack.c.b16 %v441, %v441
      %v446 = vpack.c.b16 %v442, %v442
      %v447 = vpack.c.b16 %v443, %v443
      %v449 = vshrl.u32 %v444, 16
      %v451 = vshll.u32 %v444, 16
      %v453 = vrot.slane %v451, 1
      %v454 = vor.u32 %v449, %v453
      %v456 = vshrl.u32 %v445, 16
      %v458 = vshll.u32 %v445, 16
      %v460 = vrot.slane %v458, 1
      %v461 = vor.u32 %v456, %v460
      %v463 = vshrl.u32 %v446, 16
      %v465 = vshll.u32 %v446, 16
      %v467 = vrot.slane %v465, 1
      %v468 = vor.u32 %v463, %v467
      %v470 = vshrl.u32 %v447, 16
      %v472 = vshll.u32 %v447, 16
      %v474 = vrot.slane %v472, 1
      %v475 = vor.u32 %v470, %v474
      %476 = vrot.lane.b32.xlu0 %v454, 64
      %v477 = vpop.permute.xlu0 %476
      %478 = vrot.lane.b32.xlu0 %v461, 64
      %v479 = vpop.permute.xlu0 %478
      %480 = vrot.lane.b32.xlu0 %v468, 64
      %v481 = vpop.permute.xlu0 %480
      %482 = vrot.lane.b32.xlu0 %v475, 64
      %v483 = vpop.permute.xlu0 %482
      %v488 = vunpack.c.l.b16 %v218
      %v489 = vunpack.c.l.b16 %v219
      %v490 = vunpack.c.l.b16 %v220
      %v491 = vunpack.c.l.b16 %v221
      %v492 = vpack.c.b16 %v488, %v488
      %v493 = vpack.c.b16 %v489, %v489
      %v494 = vpack.c.b16 %v490, %v490
      %v495 = vpack.c.b16 %v491, %v491
      %v497 = vshrl.u32 %v492, 16
      %v499 = vshll.u32 %v492, 16
      %v501 = vrot.slane %v499, 1
      %v502 = vor.u32 %v497, %v501
      %v504 = vshrl.u32 %v493, 16
      %v506 = vshll.u32 %v493, 16
      %v508 = vrot.slane %v506, 1
      %v509 = vor.u32 %v504, %v508
      %v511 = vshrl.u32 %v494, 16
      %v513 = vshll.u32 %v494, 16
      %v515 = vrot.slane %v513, 1
      %v516 = vor.u32 %v511, %v515
      %v518 = vshrl.u32 %v495, 16
      %v520 = vshll.u32 %v495, 16
      %v522 = vrot.slane %v520, 1
      %v523 = vor.u32 %v518, %v522
      %v528 = vunpack.c.l.b16 %v222
      %v529 = vunpack.c.l.b16 %v223
      %v530 = vunpack.c.l.b16 %v224
      %v531 = vunpack.c.l.b16 %v225
      %v532 = vpack.c.b16 %v528, %v528
      %v533 = vpack.c.b16 %v529, %v529
      %v534 = vpack.c.b16 %v530, %v530
      %v535 = vpack.c.b16 %v531, %v531
      %v536 = vrot.slane %v532, 1
      %v537 = vrot.slane %v533, 1
      %v538 = vrot.slane %v534, 1
      %v539 = vrot.slane %v535, 1
      %540 = vrot.lane.b32.xlu0 %v536, 64
      %v541 = vpop.permute.xlu0 %540
      %542 = vrot.lane.b32.xlu0 %v537, 64
      %v543 = vpop.permute.xlu0 %542
      %544 = vrot.lane.b32.xlu0 %v538, 64
      %v545 = vpop.permute.xlu0 %544
      %546 = vrot.lane.b32.xlu0 %v539, 64
      %v547 = vpop.permute.xlu0 %546
      %v552 = vunpack.c.l.b16 %v232
      %v553 = vunpack.c.l.b16 %v233
      %v554 = vunpack.c.l.b16 %v234
      %v555 = vunpack.c.l.b16 %v235
      %v556 = vpack.c.b16 %v552, %v552
      %v557 = vpack.c.b16 %v553, %v553
      %v558 = vpack.c.b16 %v554, %v554
      %v559 = vpack.c.b16 %v555, %v555
      %560 = vrot.lane.b32.xlu0 %v556, 64
      %v561 = vpop.permute.xlu0 %560
      %562 = vrot.lane.b32.xlu0 %v557, 64
      %v563 = vpop.permute.xlu0 %562
      %564 = vrot.lane.b32.xlu0 %v558, 64
      %v565 = vpop.permute.xlu0 %564
      %566 = vrot.lane.b32.xlu0 %v559, 64
      %v567 = vpop.permute.xlu0 %566
      %v572 = vunpack.c.l.b16 %v236
      %v573 = vunpack.c.l.b16 %v237
      %v574 = vunpack.c.l.b16 %v238
      %v575 = vunpack.c.l.b16 %v239
      %v576 = vpack.c.b16 %v572, %v572
      %v577 = vpack.c.b16 %v573, %v573
      %v578 = vpack.c.b16 %v574, %v574
      %v579 = vpack.c.b16 %v575, %v575
      %v581 = vshrl.u32 %v576, 16
      %v583 = vshll.u32 %v576, 16
      %v585 = vrot.slane %v583, 1
      %v586 = vor.u32 %v581, %v585
      %v588 = vshrl.u32 %v577, 16
      %v590 = vshll.u32 %v577, 16
      %v592 = vrot.slane %v590, 1
      %v593 = vor.u32 %v588, %v592
      %v595 = vshrl.u32 %v578, 16
      %v597 = vshll.u32 %v578, 16
      %v599 = vrot.slane %v597, 1
      %v600 = vor.u32 %v595, %v599
      %v602 = vshrl.u32 %v579, 16
      %v604 = vshll.u32 %v579, 16
      %v606 = vrot.slane %v604, 1
      %v607 = vor.u32 %v602, %v606
      %v612 = vunpack.c.l.b16 %v240
      %v613 = vunpack.c.l.b16 %v241
      %v614 = vunpack.c.l.b16 %v242
      %v615 = vunpack.c.l.b16 %v243
      %v616 = vpack.c.b16 %v612, %v612
      %v617 = vpack.c.b16 %v613, %v613
      %v618 = vpack.c.b16 %v614, %v614
      %v619 = vpack.c.b16 %v615, %v615
      %v621 = vshrl.u32 %v616, 16
      %v623 = vshll.u32 %v616, 16
      %v625 = vrot.slane %v623, 1
      %v626 = vor.u32 %v621, %v625
      %v628 = vshrl.u32 %v617, 16
      %v630 = vshll.u32 %v617, 16
      %v632 = vrot.slane %v630, 1
      %v633 = vor.u32 %v628, %v632
      %v635 = vshrl.u32 %v618, 16
      %v637 = vshll.u32 %v618, 16
      %v639 = vrot.slane %v637, 1
      %v640 = vor.u32 %v635, %v639
      %v642 = vshrl.u32 %v619, 16
      %v644 = vshll.u32 %v619, 16
      %v646 = vrot.slane %v644, 1
      %v647 = vor.u32 %v642, %v646
      %648 = vrot.lane.b32.xlu0 %v626, 64
      %v649 = vpop.permute.xlu0 %648
      %650 = vrot.lane.b32.xlu0 %v633, 64
      %v651 = vpop.permute.xlu0 %650
      %652 = vrot.lane.b32.xlu0 %v640, 64
      %v653 = vpop.permute.xlu0 %652
      %654 = vrot.lane.b32.xlu0 %v647, 64
      %v655 = vpop.permute.xlu0 %654
      %v660 = vunpack.c.l.b16 %v244
      %v661 = vunpack.c.l.b16 %v245
      %v662 = vunpack.c.l.b16 %v246
      %v663 = vunpack.c.l.b16 %v247
      %v664 = vpack.c.b16 %v660, %v660
      %v665 = vpack.c.b16 %v661, %v661
      %v666 = vpack.c.b16 %v662, %v662
      %v667 = vpack.c.b16 %v663, %v663
      %v668 = vrot.slane %v664, 1
      %v669 = vrot.slane %v665, 1
      %v670 = vrot.slane %v666, 1
      %v671 = vrot.slane %v667, 1
      %v676 = vunpack.c.l.b16 %v249
      %v677 = vunpack.c.l.b16 %v250
      %v678 = vunpack.c.l.b16 %v251
      %v679 = vunpack.c.l.b16 %v252
      %v680 = vpack.c.b16 %v676, %v676
      %v681 = vpack.c.b16 %v677, %v677
      %v682 = vpack.c.b16 %v678, %v678
      %v683 = vpack.c.b16 %v679, %v679
      %684 = vrot.lane.b32.xlu0 %v680, 64
      %v685 = vpop.permute.xlu0 %684
      %686 = vrot.lane.b32.xlu0 %v681, 64
      %v687 = vpop.permute.xlu0 %686
      %688 = vrot.lane.b32.xlu0 %v682, 64
      %v689 = vpop.permute.xlu0 %688
      %690 = vrot.lane.b32.xlu0 %v683, 64
      %v691 = vpop.permute.xlu0 %690
      %vm692 = vcmask 523264
      %v695 = vsel %vm692, %v183, %v305
      %v698 = vsel %vm692, %v184, %v307
      %v701 = vsel %vm692, %v185, %v309
      %v704 = vsel %vm692, %v186, %v311
      %v707 = vsel %vm692, %v330, %v393
      %v710 = vsel %vm692, %v337, %v395
      %v713 = vsel %vm692, %v344, %v397
      %v716 = vsel %vm692, %v351, %v399
      %v719 = vsel %vm692, %v412, %v429
      %v722 = vsel %vm692, %v413, %v431
      %v725 = vsel %vm692, %v414, %v433
      %v728 = vsel %vm692, %v415, %v435
      %v731 = vsel %vm692, %v210, %v477
      %v734 = vsel %vm692, %v211, %v479
      %v737 = vsel %vm692, %v212, %v481
      %v740 = vsel %vm692, %v213, %v483
      %v743 = vsel %vm692, %v502, %v541
      %v746 = vsel %vm692, %v509, %v543
      %v749 = vsel %vm692, %v516, %v545
      %v752 = vsel %vm692, %v523, %v547
      %v755 = vsel %vm692, %v227, %v561
      %v758 = vsel %vm692, %v228, %v563
      %v761 = vsel %vm692, %v229, %v565
      %v764 = vsel %vm692, %v230, %v567
      %v767 = vsel %vm692, %v586, %v649
      %v770 = vsel %vm692, %v593, %v651
      %v773 = vsel %vm692, %v600, %v653
      %v776 = vsel %vm692, %v607, %v655
      %v779 = vsel %vm692, %v668, %v685
      %v782 = vsel %vm692, %v669, %v687
      %v785 = vsel %vm692, %v670, %v689
      %v788 = vsel %vm692, %v671, %v691
      %v793 = vunpack.c.l.b16 %v258
      %v794 = vunpack.c.l.b16 %v259
      %v795 = vunpack.c.l.b16 %v260
      %v796 = vunpack.c.l.b16 %v261
      %v797 = vpack.c.b16 %v793, %v793
      %v798 = vpack.c.b16 %v794, %v794
      %v799 = vpack.c.b16 %v795, %v795
      %v800 = vpack.c.b16 %v796, %v796
      %v802 = vshrl.u32 %v797, 16
      %v804 = vshll.u32 %v797, 16
      %v806 = vrot.slane %v804, 1
      %v807 = vor.u32 %v802, %v806
      %v809 = vshrl.u32 %v798, 16
      %v811 = vshll.u32 %v798, 16
      %v813 = vrot.slane %v811, 1
      %v814 = vor.u32 %v809, %v813
      %v816 = vshrl.u32 %v799, 16
      %v818 = vshll.u32 %v799, 16
      %v820 = vrot.slane %v818, 1
      %v821 = vor.u32 %v816, %v820
      %v823 = vshrl.u32 %v800, 16
      %v825 = vshll.u32 %v800, 16
      %v827 = vrot.slane %v825, 1
      %v828 = vor.u32 %v823, %v827
      %829 = vrot.lane.b32.xlu0 %v807, 64
      %v830 = vpop.permute.xlu0 %829
      %831 = vrot.lane.b32.xlu0 %v814, 64
      %v832 = vpop.permute.xlu0 %831
      %833 = vrot.lane.b32.xlu0 %v821, 64
      %v834 = vpop.permute.xlu0 %833
      %835 = vrot.lane.b32.xlu0 %v828, 64
      %v836 = vpop.permute.xlu0 %835
      %v841 = vunpack.c.l.b16 %v262
      %v842 = vunpack.c.l.b16 %v263
      %v843 = vunpack.c.l.b16 %v264
      %v844 = vunpack.c.l.b16 %v265
      %v845 = vpack.c.b16 %v841, %v841
      %v846 = vpack.c.b16 %v842, %v842
      %v847 = vpack.c.b16 %v843, %v843
      %v848 = vpack.c.b16 %v844, %v844
      %v850 = vshrl.u32 %v845, 16
      %v852 = vshll.u32 %v845, 16
      %v854 = vrot.slane %v852, 1
      %v855 = vor.u32 %v850, %v854
      %v857 = vshrl.u32 %v846, 16
      %v859 = vshll.u32 %v846, 16
      %v861 = vrot.slane %v859, 1
      %v862 = vor.u32 %v857, %v861
      %v864 = vshrl.u32 %v847, 16
      %v866 = vshll.u32 %v847, 16
      %v868 = vrot.slane %v866, 1
      %v869 = vor.u32 %v864, %v868
      %v871 = vshrl.u32 %v848, 16
      %v873 = vshll.u32 %v848, 16
      %v875 = vrot.slane %v873, 1
      %v876 = vor.u32 %v871, %v875
      %v881 = vunpack.c.l.b16 %v266
      %v882 = vunpack.c.l.b16 %v267
      %v883 = vunpack.c.l.b16 %v268
      %v884 = vunpack.c.l.b16 %v269
      %v885 = vpack.c.b16 %v881, %v881
      %v886 = vpack.c.b16 %v882, %v882
      %v887 = vpack.c.b16 %v883, %v883
      %v888 = vpack.c.b16 %v884, %v884
      %v889 = vrot.slane %v885, 1
      %v890 = vrot.slane %v886, 1
      %v891 = vrot.slane %v887, 1
      %v892 = vrot.slane %v888, 1
      %893 = vrot.lane.b32.xlu0 %v889, 64
      %v894 = vpop.permute.xlu0 %893
      %895 = vrot.lane.b32.xlu0 %v890, 64
      %v896 = vpop.permute.xlu0 %895
      %897 = vrot.lane.b32.xlu0 %v891, 64
      %v898 = vpop.permute.xlu0 %897
      %899 = vrot.lane.b32.xlu0 %v892, 64
      %v900 = vpop.permute.xlu0 %899
      %v905 = vunpack.c.l.b16 %v276
      %v906 = vunpack.c.l.b16 %v277
      %v907 = vunpack.c.l.b16 %v278
      %v908 = vunpack.c.l.b16 %v279
      %v909 = vpack.c.b16 %v905, %v905
      %v910 = vpack.c.b16 %v906, %v906
      %v911 = vpack.c.b16 %v907, %v907
      %v912 = vpack.c.b16 %v908, %v908
      %913 = vrot.lane.b32.xlu0 %v909, 64
      %v914 = vpop.permute.xlu0 %913
      %915 = vrot.lane.b32.xlu0 %v910, 64
      %v916 = vpop.permute.xlu0 %915
      %917 = vrot.lane.b32.xlu0 %v911, 64
      %v918 = vpop.permute.xlu0 %917
      %919 = vrot.lane.b32.xlu0 %v912, 64
      %v920 = vpop.permute.xlu0 %919
      %v925 = vunpack.c.l.b16 %v280
      %v926 = vunpack.c.l.b16 %v281
      %v927 = vunpack.c.l.b16 %v282
      %v928 = vunpack.c.l.b16 %v283
      %v929 = vpack.c.b16 %v925, %v925
      %v930 = vpack.c.b16 %v926, %v926
      %v931 = vpack.c.b16 %v927, %v927
      %v932 = vpack.c.b16 %v928, %v928
      %v934 = vshrl.u32 %v929, 16
      %v936 = vshll.u32 %v929, 16
      %v938 = vrot.slane %v936, 1
      %v939 = vor.u32 %v934, %v938
      %v941 = vshrl.u32 %v930, 16
      %v943 = vshll.u32 %v930, 16
      %v945 = vrot.slane %v943, 1
      %v946 = vor.u32 %v941, %v945
      %v948 = vshrl.u32 %v931, 16
      %v950 = vshll.u32 %v931, 16
      %v952 = vrot.slane %v950, 1
      %v953 = vor.u32 %v948, %v952
      %v955 = vshrl.u32 %v932, 16
      %v957 = vshll.u32 %v932, 16
      %v959 = vrot.slane %v957, 1
      %v960 = vor.u32 %v955, %v959
      %v965 = vunpack.c.l.b16 %v284
      %v966 = vunpack.c.l.b16 %v285
      %v967 = vunpack.c.l.b16 %v286
      %v968 = vunpack.c.l.b16 %v287
      %v969 = vpack.c.b16 %v965, %v965
      %v970 = vpack.c.b16 %v966, %v966
      %v971 = vpack.c.b16 %v967, %v967
      %v972 = vpack.c.b16 %v968, %v968
      %v974 = vshrl.u32 %v969, 16
      %v976 = vshll.u32 %v969, 16
      %v978 = vrot.slane %v976, 1
      %v979 = vor.u32 %v974, %v978
      %v981 = vshrl.u32 %v970, 16
      %v983 = vshll.u32 %v970, 16
      %v985 = vrot.slane %v983, 1
      %v986 = vor.u32 %v981, %v985
      %v988 = vshrl.u32 %v971, 16
      %v990 = vshll.u32 %v971, 16
      %v992 = vrot.slane %v990, 1
      %v993 = vor.u32 %v988, %v992
      %v995 = vshrl.u32 %v972, 16
      %v997 = vshll.u32 %v972, 16
      %v999 = vrot.slane %v997, 1
      %v1000 = vor.u32 %v995, %v999
      %1001 = vrot.lane.b32.xlu0 %v979, 64
      %v1002 = vpop.permute.xlu0 %1001
      %1003 = vrot.lane.b32.xlu0 %v986, 64
      %v1004 = vpop.permute.xlu0 %1003
      %1005 = vrot.lane.b32.xlu0 %v993, 64
      %v1006 = vpop.permute.xlu0 %1005
      %1007 = vrot.lane.b32.xlu0 %v1000, 64
      %v1008 = vpop.permute.xlu0 %1007
      %v1013 = vunpack.c.l.b16 %v288
      %v1014 = vunpack.c.l.b16 %v289
      %v1015 = vunpack.c.l.b16 %v290
      %v1016 = vunpack.c.l.b16 %v291
      %v1017 = vpack.c.b16 %v1013, %v1013
      %v1018 = vpack.c.b16 %v1014, %v1014
      %v1019 = vpack.c.b16 %v1015, %v1015
      %v1020 = vpack.c.b16 %v1016, %v1016
      %v1021 = vrot.slane %v1017, 1
      %v1022 = vrot.slane %v1018, 1
      %v1023 = vrot.slane %v1019, 1
      %v1024 = vrot.slane %v1020, 1
      %v1027 = vsel %vm692, %v254, %v830
      %v1030 = vsel %vm692, %v255, %v832
      %v1033 = vsel %vm692, %v256, %v834
      %v1036 = vsel %vm692, %v257, %v836
      %v1039 = vsel %vm692, %v855, %v894
      %v1042 = vsel %vm692, %v862, %v896
      %v1045 = vsel %vm692, %v869, %v898
      %v1048 = vsel %vm692, %v876, %v900
      %v1051 = vsel %vm692, %v271, %v914
      %v1054 = vsel %vm692, %v272, %v916
      %v1057 = vsel %vm692, %v273, %v918
      %v1060 = vsel %vm692, %v274, %v920
      %v1063 = vsel %vm692, %v939, %v1002
      %v1066 = vsel %vm692, %v946, %v1004
      %v1069 = vsel %vm692, %v953, %v1006
      %v1072 = vsel %vm692, %v960, %v1008
      %v1121 = vcombine.low %v695, %v707
      %v1122 = vcombine.low %v719, %v731
      %v1124 = vunpack.c.l.s4 1983009808
      %v1125 = vunpack.c.0.s8 %v1124
      %v1126 = vlaneseq
      %v1127 = vshrl.u32 %v1126, 7
      %v1128 = vsub.s32 %v1125, %v1127
      %v1129 = vrot.slane %v1121, %v1128
      %v1131 = vunpack.c.l.s4 1983009808
      %v1132 = vunpack.c.0.s8 %v1131
      %v1133 = vlaneseq
      %v1134 = vshrl.u32 %v1133, 7
      %v1135 = vsub.s32 %v1132, %v1134
      %v1136 = vrot.slane %v1122, %v1135
      %v1137 = vcombine.low %v1129, %v1136
      %v1138 = vcombine.low %v743, %v755
      %v1139 = vcombine.low %v767, %v779
      %v1141 = vunpack.c.l.s4 1983009808
      %v1142 = vunpack.c.0.s8 %v1141
      %v1143 = vlaneseq
      %v1144 = vshrl.u32 %v1143, 7
      %v1145 = vsub.s32 %v1142, %v1144
      %v1146 = vrot.slane %v1138, %v1145
      %v1148 = vunpack.c.l.s4 1983009808
      %v1149 = vunpack.c.0.s8 %v1148
      %v1150 = vlaneseq
      %v1151 = vshrl.u32 %v1150, 7
      %v1152 = vsub.s32 %v1149, %v1151
      %v1153 = vrot.slane %v1139, %v1152
      %v1154 = vcombine.low %v1146, %v1153
      %v1155 = vcombine.low %v1027, %v1039
      %v1156 = vcombine.low %v1051, %v1063
      %v1158 = vunpack.c.l.s4 1983009808
      %v1159 = vunpack.c.0.s8 %v1158
      %v1160 = vlaneseq
      %v1161 = vshrl.u32 %v1160, 7
      %v1162 = vsub.s32 %v1159, %v1161
      %v1163 = vrot.slane %v1155, %v1162
      %v1165 = vunpack.c.l.s4 1983009808
      %v1166 = vunpack.c.0.s8 %v1165
      %v1167 = vlaneseq
      %v1168 = vshrl.u32 %v1167, 7
      %v1169 = vsub.s32 %v1166, %v1168
      %v1170 = vrot.slane %v1156, %v1169
      %v1171 = vcombine.low %v1163, %v1170
      %v1173 = vunpack.c.l.s4 1983009808
      %v1174 = vunpack.c.0.s8 %v1173
      %v1175 = vlaneseq
      %v1176 = vshrl.u32 %v1175, 7
      %v1177 = vsub.s32 %v1174, %v1176
      %v1178 = vrot.slane %v1021, %v1177
      %v1179 = vcombine.low %v698, %v710
      %v1180 = vcombine.low %v722, %v734
      %v1182 = vunpack.c.l.s4 1983009808
      %v1183 = vunpack.c.0.s8 %v1182
      %v1184 = vlaneseq
      %v1185 = vshrl.u32 %v1184, 7
      %v1186 = vsub.s32 %v1183, %v1185
      %v1187 = vrot.slane %v1179, %v1186
      %v1189 = vunpack.c.l.s4 1983009808
      %v1190 = vunpack.c.0.s8 %v1189
      %v1191 = vlaneseq
      %v1192 = vshrl.u32 %v1191, 7
      %v1193 = vsub.s32 %v1190, %v1192
      %v1194 = vrot.slane %v1180, %v1193
      %v1195 = vcombine.low %v1187, %v1194
      %v1196 = vcombine.low %v746, %v758
      %v1197 = vcombine.low %v770, %v782
      %v1199 = vunpack.c.l.s4 1983009808
      %v1200 = vunpack.c.0.s8 %v1199
      %v1201 = vlaneseq
      %v1202 = vshrl.u32 %v1201, 7
      %v1203 = vsub.s32 %v1200, %v1202
      %v1204 = vrot.slane %v1196, %v1203
      %v1206 = vunpack.c.l.s4 1983009808
      %v1207 = vunpack.c.0.s8 %v1206
      %v1208 = vlaneseq
      %v1209 = vshrl.u32 %v1208, 7
      %v1210 = vsub.s32 %v1207, %v1209
      %v1211 = vrot.slane %v1197, %v1210
      %v1212 = vcombine.low %v1204, %v1211
      %v1213 = vcombine.low %v1030, %v1042
      %v1214 = vcombine.low %v1054, %v1066
      %v1216 = vunpack.c.l.s4 1983009808
      %v1217 = vunpack.c.0.s8 %v1216
      %v1218 = vlaneseq
      %v1219 = vshrl.u32 %v1218, 7
      %v1220 = vsub.s32 %v1217, %v1219
      %v1221 = vrot.slane %v1213, %v1220
      %v1223 = vunpack.c.l.s4 1983009808
      %v1224 = vunpack.c.0.s8 %v1223
      %v1225 = vlaneseq
      %v1226 = vshrl.u32 %v1225, 7
      %v1227 = vsub.s32 %v1224, %v1226
      %v1228 = vrot.slane %v1214, %v1227
      %v1229 = vcombine.low %v1221, %v1228
      %v1231 = vunpack.c.l.s4 1983009808
      %v1232 = vunpack.c.0.s8 %v1231
      %v1233 = vlaneseq
      %v1234 = vshrl.u32 %v1233, 7
      %v1235 = vsub.s32 %v1232, %v1234
      %v1236 = vrot.slane %v1022, %v1235
      %v1237 = vcombine.low %v701, %v713
      %v1238 = vcombine.low %v725, %v737
      %v1240 = vunpack.c.l.s4 1983009808
      %v1241 = vunpack.c.0.s8 %v1240
      %v1242 = vlaneseq
      %v1243 = vshrl.u32 %v1242, 7
      %v1244 = vsub.s32 %v1241, %v1243
      %v1245 = vrot.slane %v1237, %v1244
      %v1247 = vunpack.c.l.s4 1983009808
      %v1248 = vunpack.c.0.s8 %v1247
      %v1249 = vlaneseq
      %v1250 = vshrl.u32 %v1249, 7
      %v1251 = vsub.s32 %v1248, %v1250
      %v1252 = vrot.slane %v1238, %v1251
      %v1253 = vcombine.low %v1245, %v1252
      %v1254 = vcombine.low %v749, %v761
      %v1255 = vcombine.low %v773, %v785
      %v1257 = vunpack.c.l.s4 1983009808
      %v1258 = vunpack.c.0.s8 %v1257
      %v1259 = vlaneseq
      %v1260 = vshrl.u32 %v1259, 7
      %v1261 = vsub.s32 %v1258, %v1260
      %v1262 = vrot.slane %v1254, %v1261
      %v1264 = vunpack.c.l.s4 1983009808
      %v1265 = vunpack.c.0.s8 %v1264
      %v1266 = vlaneseq
      %v1267 = vshrl.u32 %v1266, 7
      %v1268 = vsub.s32 %v1265, %v1267
      %v1269 = vrot.slane %v1255, %v1268
      %v1270 = vcombine.low %v1262, %v1269
      %v1271 = vcombine.low %v1033, %v1045
      %v1272 = vcombine.low %v1057, %v1069
      %v1274 = vunpack.c.l.s4 1983009808
      %v1275 = vunpack.c.0.s8 %v1274
      %v1276 = vlaneseq
      %v1277 = vshrl.u32 %v1276, 7
      %v1278 = vsub.s32 %v1275, %v1277
      %v1279 = vrot.slane %v1271, %v1278
      %v1281 = vunpack.c.l.s4 1983009808
      %v1282 = vunpack.c.0.s8 %v1281
      %v1283 = vlaneseq
      %v1284 = vshrl.u32 %v1283, 7
      %v1285 = vsub.s32 %v1282, %v1284
      %v1286 = vrot.slane %v1272, %v1285
      %v1287 = vcombine.low %v1279, %v1286
      %v1289 = vunpack.c.l.s4 1983009808
      %v1290 = vunpack.c.0.s8 %v1289
      %v1291 = vlaneseq
      %v1292 = vshrl.u32 %v1291, 7
      %v1293 = vsub.s32 %v1290, %v1292
      %v1294 = vrot.slane %v1023, %v1293
      %v1295 = vcombine.low %v704, %v716
      %v1296 = vcombine.low %v728, %v740
      %v1298 = vunpack.c.l.s4 1983009808
      %v1299 = vunpack.c.0.s8 %v1298
      %v1300 = vlaneseq
      %v1301 = vshrl.u32 %v1300, 7
      %v1302 = vsub.s32 %v1299, %v1301
      %v1303 = vrot.slane %v1295, %v1302
      %v1305 = vunpack.c.l.s4 1983009808
      %v1306 = vunpack.c.0.s8 %v1305
      %v1307 = vlaneseq
      %v1308 = vshrl.u32 %v1307, 7
      %v1309 = vsub.s32 %v1306, %v1308
      %v1310 = vrot.slane %v1296, %v1309
      %v1311 = vcombine.low %v1303, %v1310
      %v1312 = vcombine.low %v752, %v764
      %v1313 = vcombine.low %v776, %v788
      %v1315 = vunpack.c.l.s4 1983009808
      %v1316 = vunpack.c.0.s8 %v1315
      %v1317 = vlaneseq
      %v1318 = vshrl.u32 %v1317, 7
      %v1319 = vsub.s32 %v1316, %v1318
      %v1320 = vrot.slane %v1312, %v1319
      %v1322 = vunpack.c.l.s4 1983009808
      %v1323 = vunpack.c.0.s8 %v1322
      %v1324 = vlaneseq
      %v1325 = vshrl.u32 %v1324, 7
      %v1326 = vsub.s32 %v1323, %v1325
      %v1327 = vrot.slane %v1313, %v1326
      %v1328 = vcombine.low %v1320, %v1327
      %v1329 = vcombine.low %v1036, %v1048
      %v1330 = vcombine.low %v1060, %v1072
      %v1332 = vunpack.c.l.s4 1983009808
      %v1333 = vunpack.c.0.s8 %v1332
      %v1334 = vlaneseq
      %v1335 = vshrl.u32 %v1334, 7
      %v1336 = vsub.s32 %v1333, %v1335
      %v1337 = vrot.slane %v1329, %v1336
      %v1339 = vunpack.c.l.s4 1983009808
      %v1340 = vunpack.c.0.s8 %v1339
      %v1341 = vlaneseq
      %v1342 = vshrl.u32 %v1341, 7
      %v1343 = vsub.s32 %v1340, %v1342
      %v1344 = vrot.slane %v1330, %v1343
      %v1345 = vcombine.low %v1337, %v1344
      %v1347 = vunpack.c.l.s4 1983009808
      %v1348 = vunpack.c.0.s8 %v1347
      %v1349 = vlaneseq
      %v1350 = vshrl.u32 %v1349, 7
      %v1351 = vsub.s32 %v1348, %v1350
      %v1352 = vrot.slane %v1024, %v1351
      %v1353 = vld [vmem:[%s1] sm:$0xf]
      %v1354 = vld [vmem:[%s1 + $0x4] sm:$0xf]
      %v1355 = vld [vmem:[%s1 + $0x8] sm:$0xf]
      %v1356 = vld [vmem:[%s1 + $0xc] sm:$0xf]
      %v1357 = vld [vmem:[%s1 + $0x10] sm:$0xf]
      %v1358 = vld [vmem:[%s1 + $0x14] sm:$0xf]
      %v1359 = vld [vmem:[%s1 + $0x18] sm:$0xf]
      %v1360 = vld [vmem:[%s1 + $0x1c] sm:$0xf]
      %v1361 = vld [vmem:[%s1 + $0x20] sm:$0xf]
      %v1362 = vld [vmem:[%s1 + $0x24] sm:$0xf]
      %v1363 = vld [vmem:[%s1 + $0x28] sm:$0xf]
      %v1364 = vld [vmem:[%s1 + $0x2c] sm:$0xf]
      %v1365 = vld [vmem:[%s1 + $0x30] sm:$0xf]
      %v1366 = vld [vmem:[%s1 + $0x34] sm:$0xf]
      %v1367 = vld [vmem:[%s1 + $0x38] sm:$0xf]
      %v1368 = vld [vmem:[%s1 + $0x3c] sm:$0xf]
      %v1369 = vld [vmem:[%s1 + $0x40] sm:$0xf]
      %v1370 = vld [vmem:[%s1 + $0x44] sm:$0xf]
      %v1371 = vld [vmem:[%s1 + $0x48] sm:$0xf]
      %v1372 = vld [vmem:[%s1 + $0x4c] sm:$0xf]
      %v1373 = vld [vmem:[%s1 + $0x50] sm:$0xf]
      %v1374 = vld [vmem:[%s1 + $0x54] sm:$0xf]
      %v1375 = vld [vmem:[%s1 + $0x58] sm:$0xf]
      %v1376 = vld [vmem:[%s1 + $0x5c] sm:$0xf]
      %v1377 = vld [vmem:[%s1 + $0x60] sm:$0xf]
      %v1378 = vld [vmem:[%s1 + $0x64] sm:$0xf]
      %v1379 = vld [vmem:[%s1 + $0x68] sm:$0xf]
      %v1380 = vld [vmem:[%s1 + $0x6c] sm:$0xf]
      %v1381 = vld [vmem:[%s1 + $0x70] sm:$0xf]
      %v1382 = vld [vmem:[%s1 + $0x74] sm:$0xf]
      %v1383 = vld [vmem:[%s1 + $0x78] sm:$0xf]
      %v1384 = vld [vmem:[%s1 + $0x7c] sm:$0xf]
      %v1385 = vld [vmem:[%s1 + $0x80] sm:$0xf]
      %v1386 = vld [vmem:[%s1 + $0x84] sm:$0xf]
      %v1387 = vld [vmem:[%s1 + $0x88] sm:$0xf]
      %v1388 = vld [vmem:[%s1 + $0x8c] sm:$0xf]
      %v1389 = vld [vmem:[%s1 + $0x90] sm:$0xf]
      %v1390 = vld [vmem:[%s1 + $0x94] sm:$0xf]
      %v1391 = vld [vmem:[%s1 + $0x98] sm:$0xf]
      %v1392 = vld [vmem:[%s1 + $0x9c] sm:$0xf]
      %v1393 = vld [vmem:[%s1 + $0xa0] sm:$0xf]
      %v1394 = vld [vmem:[%s1 + $0xa4] sm:$0xf]
      %v1395 = vld [vmem:[%s1 + $0xa8] sm:$0xf]
      %v1396 = vld [vmem:[%s1 + $0xac] sm:$0xf]
      %v1397 = vld [vmem:[%s1 + $0xb0] sm:$0xf]
      %v1398 = vld [vmem:[%s1 + $0xb4] sm:$0xf]
      %v1399 = vld [vmem:[%s1 + $0xb8] sm:$0xf]
      %v1400 = vld [vmem:[%s1 + $0xbc] sm:$0xf]
      %v1401 = vld [vmem:[%s1 + $0xc0] sm:$0xf]
      %v1402 = vld [vmem:[%s1 + $0xc4] sm:$0xf]
      %v1403 = vld [vmem:[%s1 + $0xc8] sm:$0xf]
      %v1404 = vld [vmem:[%s1 + $0xcc] sm:$0xf]
      %v1405 = vld [vmem:[%s1 + $0xd0] sm:$0xf]
      %v1406 = vld [vmem:[%s1 + $0xd4] sm:$0xf]
      %v1407 = vld [vmem:[%s1 + $0xd8] sm:$0xf]
      %v1408 = vld [vmem:[%s1 + $0xdc] sm:$0xf]
      %v1409 = vld [vmem:[%s1 + $0xe0] sm:$0xf]
      %v1410 = vld [vmem:[%s1 + $0xe4] sm:$0xf]
      %v1411 = vld [vmem:[%s1 + $0xe8] sm:$0xf]
      %v1412 = vld [vmem:[%s1 + $0xec] sm:$0xf]
      %v1413 = vld [vmem:[%s1 + $0xf0] sm:$0xf]
      %v1414 = vld [vmem:[%s1 + $0xf4] sm:$0xf]
      %v1415 = vld [vmem:[%s1 + $0xf8] sm:$0xf]
      %v1416 = vld [vmem:[%s1 + $0xfc] sm:$0xf]
      %v1417 = vld [vmem:[%s1 + $0x100] sm:$0xf]
      %v1418 = vld [vmem:[%s1 + $0x104] sm:$0xf]
      %v1419 = vld [vmem:[%s1 + $0x108] sm:$0xf]
      %v1420 = vld [vmem:[%s1 + $0x10c] sm:$0xf]
      %v1421 = vld [vmem:[%s1 + $0x110] sm:$0xf]
      %v1422 = vld [vmem:[%s1 + $0x114] sm:$0xf]
      %v1423 = vld [vmem:[%s1 + $0x118] sm:$0xf]
      %v1424 = vld [vmem:[%s1 + $0x11c] sm:$0xf]
      %v1425 = vld [vmem:[%s1 + $0x120] sm:$0xf]
      %v1426 = vld [vmem:[%s1 + $0x124] sm:$0xf]
      %v1427 = vld [vmem:[%s1 + $0x128] sm:$0xf]
      %v1428 = vld [vmem:[%s1 + $0x12c] sm:$0xf]
      %v1429 = vld [vmem:[%s1 + $0x130] sm:$0xf]
      %v1430 = vld [vmem:[%s1 + $0x134] sm:$0xf]
      %v1431 = vld [vmem:[%s1 + $0x138] sm:$0xf]
      %v1432 = vld [vmem:[%s1 + $0x13c] sm:$0xf]
      %v1433 = vld [vmem:[%s1 + $0x140] sm:$0xf]
      %v1434 = vld [vmem:[%s1 + $0x144] sm:$0xf]
      %v1435 = vld [vmem:[%s1 + $0x148] sm:$0xf]
      %v1436 = vld [vmem:[%s1 + $0x14c] sm:$0xf]
      %v1437 = vld [vmem:[%s1 + $0x150] sm:$0xf]
      %v1438 = vld [vmem:[%s1 + $0x154] sm:$0xf]
      %v1439 = vld [vmem:[%s1 + $0x158] sm:$0xf]
      %v1440 = vld [vmem:[%s1 + $0x15c] sm:$0xf]
      %v1441 = vld [vmem:[%s1 + $0x160] sm:$0xf]
      %v1442 = vld [vmem:[%s1 + $0x164] sm:$0xf]
      %v1443 = vld [vmem:[%s1 + $0x168] sm:$0xf]
      %v1444 = vld [vmem:[%s1 + $0x16c] sm:$0xf]
      %v1445 = vld [vmem:[%s1 + $0x170] sm:$0xf]
      %v1446 = vld [vmem:[%s1 + $0x174] sm:$0xf]
      %v1447 = vld [vmem:[%s1 + $0x178] sm:$0xf]
      %v1448 = vld [vmem:[%s1 + $0x17c] sm:$0xf]
      %v1449 = vld [vmem:[%s1 + $0x180] sm:$0xf]
      %v1450 = vld [vmem:[%s1 + $0x184] sm:$0xf]
      %v1451 = vld [vmem:[%s1 + $0x188] sm:$0xf]
      %v1452 = vld [vmem:[%s1 + $0x18c] sm:$0xf]
      %v1453 = vld [vmem:[%s1 + $0x190] sm:$0xf]
      %v1454 = vld [vmem:[%s1 + $0x194] sm:$0xf]
      %v1455 = vld [vmem:[%s1 + $0x198] sm:$0xf]
      %v1456 = vld [vmem:[%s1 + $0x19c] sm:$0xf]
      %v1457 = vld [vmem:[%s1 + $0x1a0] sm:$0xf]
      %v1458 = vld [vmem:[%s1 + $0x1a4] sm:$0xf]
      %v1459 = vld [vmem:[%s1 + $0x1a8] sm:$0xf]
      %v1460 = vld [vmem:[%s1 + $0x1ac] sm:$0xf]
      %v1461 = vld [vmem:[%s1 + $0x1b0] sm:$0xf]
      %v1462 = vld [vmem:[%s1 + $0x1b4] sm:$0xf]
      %v1463 = vld [vmem:[%s1 + $0x1b8] sm:$0xf]
      %v1464 = vld [vmem:[%s1 + $0x1bc] sm:$0xf]
      %v1465 = vld [vmem:[%s1 + $0x1c0] sm:$0xf]
      %v1466 = vld [vmem:[%s1 + $0x1c4] sm:$0xf]
      %v1467 = vld [vmem:[%s1 + $0x1c8] sm:$0xf]
      %v1468 = vld [vmem:[%s1 + $0x1cc] sm:$0xf]
      %v1469 = vld [vmem:[%s1 + $0x1d0] sm:$0xf]
      %v1470 = vld [vmem:[%s1 + $0x1d4] sm:$0xf]
      %v1471 = vld [vmem:[%s1 + $0x1d8] sm:$0xf]
      %v1472 = vld [vmem:[%s1 + $0x1dc] sm:$0xf]
      %v1473 = vld [vmem:[%s1 + $0x1e0] sm:$0xf]
      %v1474 = vld [vmem:[%s1 + $0x1e4] sm:$0xf]
      %v1475 = vld [vmem:[%s1 + $0x1e8] sm:$0xf]
      %v1476 = vld [vmem:[%s1 + $0x1ec] sm:$0xf]
      %v1477 = vld [vmem:[%s1 + $0x1f0] sm:$0xf]
      %v1478 = vld [vmem:[%s1 + $0x1f4] sm:$0xf]
      %v1479 = vld [vmem:[%s1 + $0x1f8] sm:$0xf]
      %v1480 = vld [vmem:[%s1 + $0x1fc] sm:$0xf]
      %v1481 = vld [vmem:[%s1 + $0x200] sm:$0xf]
      %v1482 = vld [vmem:[%s1 + $0x204] sm:$0xf]
      %v1483 = vld [vmem:[%s1 + $0x208] sm:$0xf]
      %v1484 = vld [vmem:[%s1 + $0x20c] sm:$0xf]
      %v1485 = vld [vmem:[%s1 + $0x210] sm:$0xf]
      %v1486 = vld [vmem:[%s1 + $0x214] sm:$0xf]
      %v1487 = vld [vmem:[%s1 + $0x218] sm:$0xf]
      %v1488 = vld [vmem:[%s1 + $0x21c] sm:$0xf]
      %v1489 = vld [vmem:[%s1 + $0x220] sm:$0xf]
      %v1490 = vld [vmem:[%s1 + $0x224] sm:$0xf]
      %v1491 = vld [vmem:[%s1 + $0x228] sm:$0xf]
      %v1492 = vld [vmem:[%s1 + $0x22c] sm:$0xf]
      %v1493 = vld [vmem:[%s1 + $0x230] sm:$0xf]
      %v1494 = vld [vmem:[%s1 + $0x234] sm:$0xf]
      %v1495 = vld [vmem:[%s1 + $0x238] sm:$0xf]
      %v1496 = vld [vmem:[%s1 + $0x23c] sm:$0xf]
      %v1497 = vld [vmem:[%s1 + $0x240] sm:$0xf]
      %v1498 = vld [vmem:[%s1 + $0x244] sm:$0xf]
      %v1499 = vld [vmem:[%s1 + $0x248] sm:$0xf]
      %v1500 = vld [vmem:[%s1 + $0x24c] sm:$0xf]
      %v1501 = vld [vmem:[%s1 + $0x250] sm:$0xf]
      %v1502 = vld [vmem:[%s1 + $0x254] sm:$0xf]
      %v1503 = vld [vmem:[%s1 + $0x258] sm:$0xf]
      %v1504 = vld [vmem:[%s1 + $0x25c] sm:$0xf]
      %v1505 = vld [vmem:[%s1 + $0x260] sm:$0xf]
      %v1506 = vld [vmem:[%s1 + $0x264] sm:$0xf]
      %v1507 = vld [vmem:[%s1 + $0x268] sm:$0xf]
      %v1508 = vld [vmem:[%s1 + $0x26c] sm:$0xf]
      %v1509 = vld [vmem:[%s1 + $0x270] sm:$0xf]
      %v1510 = vld [vmem:[%s1 + $0x274] sm:$0xf]
      %v1511 = vld [vmem:[%s1 + $0x278] sm:$0xf]
      %v1512 = vld [vmem:[%s1 + $0x27c] sm:$0xf]
      %v1513 = vld [vmem:[%s1 + $0x280] sm:$0xf]
      %v1514 = vld [vmem:[%s1 + $0x284] sm:$0xf]
      %v1515 = vld [vmem:[%s1 + $0x288] sm:$0xf]
      %v1516 = vld [vmem:[%s1 + $0x28c] sm:$0xf]
      %v1517 = vld [vmem:[%s1 + $0x290] sm:$0xf]
      %v1518 = vld [vmem:[%s1 + $0x294] sm:$0xf]
      %v1519 = vld [vmem:[%s1 + $0x298] sm:$0xf]
      %v1520 = vld [vmem:[%s1 + $0x29c] sm:$0xf]
      %v1521 = vld [vmem:[%s1 + $0x2a0] sm:$0xf]
      %v1522 = vld [vmem:[%s1 + $0x2a4] sm:$0xf]
      %v1523 = vld [vmem:[%s1 + $0x2a8] sm:$0xf]
      %v1524 = vld [vmem:[%s1 + $0x2ac] sm:$0xf]
      %v1525 = vld [vmem:[%s1 + $0x2b0] sm:$0xf]
      %v1526 = vld [vmem:[%s1 + $0x2b4] sm:$0xf]
      %v1527 = vld [vmem:[%s1 + $0x2b8] sm:$0xf]
      %v1528 = vld [vmem:[%s1 + $0x2bc] sm:$0xf]
      %v1529 = vld [vmem:[%s1 + $0x2c0] sm:$0xf]
      %v1530 = vld [vmem:[%s1 + $0x2c4] sm:$0xf]
      %v1531 = vld [vmem:[%s1 + $0x2c8] sm:$0xf]
      %v1532 = vld [vmem:[%s1 + $0x2cc] sm:$0xf]
      %v1533 = vld [vmem:[%s1 + $0x2d0] sm:$0xf]
      %v1534 = vld [vmem:[%s1 + $0x2d4] sm:$0xf]
      %v1535 = vld [vmem:[%s1 + $0x2d8] sm:$0xf]
      %v1536 = vld [vmem:[%s1 + $0x2dc] sm:$0xf]
      %v1537 = vld [vmem:[%s1 + $0x2e0] sm:$0xf]
      %v1538 = vld [vmem:[%s1 + $0x2e4] sm:$0xf]
      %v1539 = vld [vmem:[%s1 + $0x2e8] sm:$0xf]
      %v1540 = vld [vmem:[%s1 + $0x2ec] sm:$0xf]
      %v1541 = vld [vmem:[%s1 + $0x2f0] sm:$0xf]
      %v1542 = vld [vmem:[%s1 + $0x2f4] sm:$0xf]
      %v1543 = vld [vmem:[%s1 + $0x2f8] sm:$0xf]
      %v1544 = vld [vmem:[%s1 + $0x2fc] sm:$0xf]
      %v1545 = vld [vmem:[%s1 + $0x300] sm:$0xf]
      %v1546 = vld [vmem:[%s1 + $0x304] sm:$0xf]
      %v1547 = vld [vmem:[%s1 + $0x308] sm:$0xf]
      %v1548 = vld [vmem:[%s1 + $0x30c] sm:$0xf]
      %v1549 = vld [vmem:[%s1 + $0x310] sm:$0xf]
      %v1550 = vld [vmem:[%s1 + $0x314] sm:$0xf]
      %v1551 = vld [vmem:[%s1 + $0x318] sm:$0xf]
      %v1552 = vld [vmem:[%s1 + $0x31c] sm:$0xf]
      %v1553 = vcombine.low %v1137, %v1195
      %v1554 = vcombine.high %v1137, %v1195
      %v1555 = vcombine.low %v1253, %v1311
      %v1556 = vcombine.high %v1253, %v1311
      %v1558 = vunpack.c.l.s4 1983009808
      %v1559 = vunpack.c.0.s8 %v1558
      %v1560 = vlaneseq
      %v1561 = vshrl.u32 %v1560, 7
      %v1562 = vsub.s32 %v1559, %v1561
      %v1563 = vrot.slane %v1553, %v1562
      %v1565 = vunpack.c.l.s4 1983009808
      %v1566 = vunpack.c.0.s8 %v1565
      %v1567 = vlaneseq
      %v1568 = vshrl.u32 %v1567, 7
      %v1569 = vsub.s32 %v1566, %v1568
      %v1570 = vrot.slane %v1554, %v1569
      %v1572 = vunpack.c.l.s4 1983009808
      %v1573 = vunpack.c.0.s8 %v1572
      %v1574 = vlaneseq
      %v1575 = vshrl.u32 %v1574, 7
      %v1576 = vsub.s32 %v1573, %v1575
      %v1577 = vrot.slane %v1555, %v1576
      %v1579 = vunpack.c.l.s4 1983009808
      %v1580 = vunpack.c.0.s8 %v1579
      %v1581 = vlaneseq
      %v1582 = vshrl.u32 %v1581, 7
      %v1583 = vsub.s32 %v1580, %v1582
      %v1584 = vrot.slane %v1556, %v1583
      %v1585 = vcombine.low %v1563, %v1577
      %v1586 = vcombine.high %v1563, %v1577
      %v1587 = vcombine.low %v1570, %v1584
      %v1588 = vcombine.high %v1570, %v1584
      %v1589 = vcombine.low %v1154, %v1212
      %v1590 = vcombine.high %v1154, %v1212
      %v1591 = vcombine.low %v1270, %v1328
      %v1592 = vcombine.high %v1270, %v1328
      %v1594 = vunpack.c.l.s4 1983009808
      %v1595 = vunpack.c.0.s8 %v1594
      %v1596 = vlaneseq
      %v1597 = vshrl.u32 %v1596, 7
      %v1598 = vsub.s32 %v1595, %v1597
      %v1599 = vrot.slane %v1589, %v1598
      %v1601 = vunpack.c.l.s4 1983009808
      %v1602 = vunpack.c.0.s8 %v1601
      %v1603 = vlaneseq
      %v1604 = vshrl.u32 %v1603, 7
      %v1605 = vsub.s32 %v1602, %v1604
      %v1606 = vrot.slane %v1590, %v1605
      %v1608 = vunpack.c.l.s4 1983009808
      %v1609 = vunpack.c.0.s8 %v1608
      %v1610 = vlaneseq
      %v1611 = vshrl.u32 %v1610, 7
      %v1612 = vsub.s32 %v1609, %v1611
      %v1613 = vrot.slane %v1591, %v1612
      %v1615 = vunpack.c.l.s4 1983009808
      %v1616 = vunpack.c.0.s8 %v1615
      %v1617 = vlaneseq
      %v1618 = vshrl.u32 %v1617, 7
      %v1619 = vsub.s32 %v1616, %v1618
      %v1620 = vrot.slane %v1592, %v1619
      %v1621 = vcombine.low %v1599, %v1613
      %v1622 = vcombine.high %v1599, %v1613
      %v1623 = vcombine.low %v1606, %v1620
      %v1624 = vcombine.high %v1606, %v1620
      %v1625 = vcombine.low %v1171, %v1229
      %v1626 = vcombine.high %v1171, %v1229
      %v1627 = vcombine.low %v1287, %v1345
      %v1628 = vcombine.high %v1287, %v1345
      %v1630 = vunpack.c.l.s4 1983009808
      %v1631 = vunpack.c.0.s8 %v1630
      %v1632 = vlaneseq
      %v1633 = vshrl.u32 %v1632, 7
      %v1634 = vsub.s32 %v1631, %v1633
      %v1635 = vrot.slane %v1625, %v1634
      %v1637 = vunpack.c.l.s4 1983009808
      %v1638 = vunpack.c.0.s8 %v1637
      %v1639 = vlaneseq
      %v1640 = vshrl.u32 %v1639, 7
      %v1641 = vsub.s32 %v1638, %v1640
      %v1642 = vrot.slane %v1626, %v1641
      %v1644 = vunpack.c.l.s4 1983009808
      %v1645 = vunpack.c.0.s8 %v1644
      %v1646 = vlaneseq
      %v1647 = vshrl.u32 %v1646, 7
      %v1648 = vsub.s32 %v1645, %v1647
      %v1649 = vrot.slane %v1627, %v1648
      %v1651 = vunpack.c.l.s4 1983009808
      %v1652 = vunpack.c.0.s8 %v1651
      %v1653 = vlaneseq
      %v1654 = vshrl.u32 %v1653, 7
      %v1655 = vsub.s32 %v1652, %v1654
      %v1656 = vrot.slane %v1628, %v1655
      %v1657 = vcombine.low %v1635, %v1649
      %v1658 = vcombine.high %v1635, %v1649
      %v1659 = vcombine.low %v1642, %v1656
      %v1660 = vcombine.high %v1642, %v1656
      %v1661 = vcombine.low %v1178, %v1236
      %v1662 = vcombine.low %v1294, %v1352
      %v1664 = vunpack.c.l.s4 1983009808
      %v1665 = vunpack.c.0.s8 %v1664
      %v1666 = vlaneseq
      %v1667 = vshrl.u32 %v1666, 7
      %v1668 = vsub.s32 %v1665, %v1667
      %v1669 = vrot.slane %v1661, %v1668
      %v1671 = vunpack.c.l.s4 1983009808
      %v1672 = vunpack.c.0.s8 %v1671
      %v1673 = vlaneseq
      %v1674 = vshrl.u32 %v1673, 7
      %v1675 = vsub.s32 %v1672, %v1674
      %v1676 = vrot.slane %v1662, %v1675
      %v1677 = vcombine.low %v1669, %v1676
      %v1890 = vunpack.c.l.b16 %v1353
      %v1891 = vunpack.c.l.b16 %v1354
      %v1892 = vunpack.c.l.b16 %v1355
      %v1893 = vunpack.c.l.b16 %v1356
      %v1894 = vunpack.c.l.b16 %v1357
      %v1895 = vunpack.c.l.b16 %v1358
      %v1896 = vunpack.c.l.b16 %v1359
      %v1897 = vunpack.c.l.b16 %v1360
      %v1898 = vunpack.c.l.b16 %v1361
      %v1899 = vunpack.c.l.b16 %v1362
      %v1900 = vunpack.c.l.b16 %v1363
      %v1901 = vunpack.c.l.b16 %v1364
      %v1902 = vunpack.c.l.b16 %v1365
      %v1903 = vunpack.c.l.b16 %v1366
      %v1904 = vunpack.c.l.b16 %v1367
      %v1905 = vunpack.c.l.b16 %v1368
      %v1906 = vunpack.c.l.b16 %v1369
      %v1907 = vunpack.c.l.b16 %v1370
      %v1908 = vunpack.c.l.b16 %v1371
      %v1909 = vunpack.c.l.b16 %v1372
      %v1910 = vunpack.c.l.b16 %v1373
      %v1911 = vunpack.c.l.b16 %v1374
      %v1912 = vunpack.c.l.b16 %v1375
      %v1913 = vunpack.c.l.b16 %v1376
      %v1914 = vunpack.c.l.b16 %v1377
      %v1915 = vunpack.c.l.b16 %v1378
      %v1916 = vunpack.c.l.b16 %v1379
      %v1917 = vunpack.c.l.b16 %v1380
      %v1918 = vunpack.c.l.b16 %v1381
      %v1919 = vunpack.c.l.b16 %v1382
      %v1920 = vunpack.c.l.b16 %v1383
      %v1921 = vunpack.c.l.b16 %v1384
      %v1922 = vunpack.c.l.b16 %v1385
      %v1923 = vunpack.c.l.b16 %v1386
      %v1924 = vunpack.c.l.b16 %v1387
      %v1925 = vunpack.c.l.b16 %v1388
      %v1926 = vunpack.c.l.b16 %v1389
      %v1927 = vunpack.c.l.b16 %v1390
      %v1928 = vunpack.c.l.b16 %v1391
      %v1929 = vunpack.c.l.b16 %v1392
      %v1930 = vunpack.c.l.b16 %v1393
      %v1931 = vunpack.c.l.b16 %v1394
      %v1932 = vunpack.c.l.b16 %v1395
      %v1933 = vunpack.c.l.b16 %v1396
      %v1934 = vunpack.c.l.b16 %v1397
      %v1935 = vunpack.c.l.b16 %v1398
      %v1936 = vunpack.c.l.b16 %v1399
      %v1937 = vunpack.c.l.b16 %v1400
      %v1938 = vunpack.c.l.b16 %v1401
      %v1939 = vunpack.c.l.b16 %v1402
      %v1940 = vunpack.c.l.b16 %v1403
      %v1941 = vunpack.c.l.b16 %v1404
      %v1942 = vunpack.c.l.b16 %v1405
      %v1943 = vunpack.c.l.b16 %v1406
      %v1944 = vunpack.c.l.b16 %v1407
      %v1945 = vunpack.c.l.b16 %v1408
      %v1946 = vunpack.c.l.b16 %v1409
      %v1947 = vunpack.c.l.b16 %v1410
      %v1948 = vunpack.c.l.b16 %v1411
      %v1949 = vunpack.c.l.b16 %v1412
      %v1950 = vunpack.c.l.b16 %v1413
      %v1951 = vunpack.c.l.b16 %v1414
      %v1952 = vunpack.c.l.b16 %v1415
      %v1953 = vunpack.c.l.b16 %v1416
      %v1954 = vunpack.c.l.b16 %v1417
      %v1955 = vunpack.c.l.b16 %v1418
      %v1956 = vunpack.c.l.b16 %v1419
      %v1957 = vunpack.c.l.b16 %v1420
      %v1958 = vunpack.c.l.b16 %v1421
      %v1959 = vunpack.c.l.b16 %v1422
      %v1960 = vunpack.c.l.b16 %v1423
      %v1961 = vunpack.c.l.b16 %v1424
      %v1962 = vunpack.c.l.b16 %v1425
      %v1963 = vunpack.c.l.b16 %v1426
      %v1964 = vunpack.c.l.b16 %v1427
      %v1965 = vunpack.c.l.b16 %v1428
      %v1966 = vunpack.c.l.b16 %v1429
      %v1967 = vunpack.c.l.b16 %v1430
      %v1968 = vunpack.c.l.b16 %v1431
      %v1969 = vunpack.c.l.b16 %v1432
      %v1970 = vunpack.c.l.b16 %v1433
      %v1971 = vunpack.c.l.b16 %v1434
      %v1972 = vunpack.c.l.b16 %v1435
      %v1973 = vunpack.c.l.b16 %v1436
      %v1974 = vunpack.c.l.b16 %v1437
      %v1975 = vunpack.c.l.b16 %v1438
      %v1976 = vunpack.c.l.b16 %v1439
      %v1977 = vunpack.c.l.b16 %v1440
      %v1978 = vunpack.c.l.b16 %v1441
      %v1979 = vunpack.c.l.b16 %v1442
      %v1980 = vunpack.c.l.b16 %v1443
      %v1981 = vunpack.c.l.b16 %v1444
      %v1982 = vunpack.c.l.b16 %v1445
      %v1983 = vunpack.c.l.b16 %v1446
      %v1984 = vunpack.c.l.b16 %v1447
      %v1985 = vunpack.c.l.b16 %v1448
      %v1986 = vunpack.c.l.b16 %v1449
      %v1987 = vunpack.c.l.b16 %v1450
      %v1988 = vunpack.c.l.b16 %v1451
      %v1989 = vunpack.c.l.b16 %v1452
      %v1990 = vunpack.c.l.b16 %v1453
      %v1991 = vunpack.c.l.b16 %v1454
      %v1992 = vunpack.c.l.b16 %v1455
      %v1993 = vunpack.c.l.b16 %v1456
      %v1994 = vunpack.c.l.b16 %v1457
      %v1995 = vunpack.c.l.b16 %v1458
      %v1996 = vunpack.c.l.b16 %v1459
      %v1997 = vunpack.c.l.b16 %v1460
      %v1998 = vunpack.c.l.b16 %v1461
      %v1999 = vunpack.c.l.b16 %v1462
      %v2000 = vunpack.c.l.b16 %v1463
      %v2001 = vunpack.c.l.b16 %v1464
      %v2002 = vunpack.c.l.b16 %v1465
      %v2003 = vunpack.c.l.b16 %v1466
      %v2004 = vunpack.c.l.b16 %v1467
      %v2005 = vunpack.c.l.b16 %v1468
      %v2006 = vunpack.c.l.b16 %v1469
      %v2007 = vunpack.c.l.b16 %v1470
      %v2008 = vunpack.c.l.b16 %v1471
      %v2009 = vunpack.c.l.b16 %v1472
      %v2010 = vunpack.c.l.b16 %v1473
      %v2011 = vunpack.c.l.b16 %v1474
      %v2012 = vunpack.c.l.b16 %v1475
      %v2013 = vunpack.c.l.b16 %v1476
      %v2014 = vunpack.c.l.b16 %v1477
      %v2015 = vunpack.c.l.b16 %v1478
      %v2016 = vunpack.c.l.b16 %v1479
      %v2017 = vunpack.c.l.b16 %v1480
      %v2018 = vunpack.c.l.b16 %v1481
      %v2019 = vunpack.c.l.b16 %v1482
      %v2020 = vunpack.c.l.b16 %v1483
      %v2021 = vunpack.c.l.b16 %v1484
      %v2022 = vunpack.c.l.b16 %v1485
      %v2023 = vunpack.c.l.b16 %v1486
      %v2024 = vunpack.c.l.b16 %v1487
      %v2025 = vunpack.c.l.b16 %v1488
      %v2026 = vunpack.c.l.b16 %v1489
      %v2027 = vunpack.c.l.b16 %v1490
      %v2028 = vunpack.c.l.b16 %v1491
      %v2029 = vunpack.c.l.b16 %v1492
      %v2030 = vunpack.c.l.b16 %v1493
      %v2031 = vunpack.c.l.b16 %v1494
      %v2032 = vunpack.c.l.b16 %v1495
      %v2033 = vunpack.c.l.b16 %v1496
      %v2034 = vunpack.c.l.b16 %v1497
      %v2035 = vunpack.c.l.b16 %v1498
      %v2036 = vunpack.c.l.b16 %v1499
      %v2037 = vunpack.c.l.b16 %v1500
      %v2038 = vunpack.c.l.b16 %v1501
      %v2039 = vunpack.c.l.b16 %v1502
      %v2040 = vunpack.c.l.b16 %v1503
      %v2041 = vunpack.c.l.b16 %v1504
      %v2042 = vunpack.c.l.b16 %v1505
      %v2043 = vunpack.c.l.b16 %v1506
      %v2044 = vunpack.c.l.b16 %v1507
      %v2045 = vunpack.c.l.b16 %v1508
      %v2046 = vunpack.c.l.b16 %v1509
      %v2047 = vunpack.c.l.b16 %v1510
      %v2048 = vunpack.c.l.b16 %v1511
      %v2049 = vunpack.c.l.b16 %v1512
      %v2050 = vunpack.c.l.b16 %v1513
      %v2051 = vunpack.c.l.b16 %v1514
      %v2052 = vunpack.c.l.b16 %v1515
      %v2053 = vunpack.c.l.b16 %v1516
      %v2054 = vunpack.c.l.b16 %v1517
      %v2055 = vunpack.c.l.b16 %v1518
      %v2056 = vunpack.c.l.b16 %v1519
      %v2057 = vunpack.c.l.b16 %v1520
      %v2058 = vunpack.c.l.b16 %v1521
      %v2059 = vunpack.c.l.b16 %v1522
      %v2060 = vunpack.c.l.b16 %v1523
      %v2061 = vunpack.c.l.b16 %v1524
      %v2062 = vunpack.c.l.b16 %v1525
      %v2063 = vunpack.c.l.b16 %v1526
      %v2064 = vunpack.c.l.b16 %v1527
      %v2065 = vunpack.c.l.b16 %v1528
      %v2066 = vunpack.c.l.b16 %v1529
      %v2067 = vunpack.c.l.b16 %v1530
      %v2068 = vunpack.c.l.b16 %v1531
      %v2069 = vunpack.c.l.b16 %v1532
      %v2070 = vunpack.c.l.b16 %v1533
      %v2071 = vunpack.c.l.b16 %v1534
      %v2072 = vunpack.c.l.b16 %v1535
      %v2073 = vunpack.c.l.b16 %v1536
      %v2074 = vunpack.c.l.b16 %v1537
      %v2075 = vunpack.c.l.b16 %v1538
      %v2076 = vunpack.c.l.b16 %v1539
      %v2077 = vunpack.c.l.b16 %v1540
      %v2078 = vunpack.c.l.b16 %v1541
      %v2079 = vunpack.c.l.b16 %v1542
      %v2080 = vunpack.c.l.b16 %v1543
      %v2081 = vunpack.c.l.b16 %v1544
      %v2082 = vunpack.c.l.b16 %v1545
      %v2083 = vunpack.c.l.b16 %v1546
      %v2084 = vunpack.c.l.b16 %v1547
      %v2085 = vunpack.c.l.b16 %v1548
      %v2086 = vunpack.c.l.b16 %v1549
      %v2087 = vunpack.c.l.b16 %v1550
      %v2088 = vunpack.c.l.b16 %v1551
      %v2089 = vunpack.c.l.b16 %v1552
      %v2090 = vpack.c.b16 %v1891, %v1890
      %v2091 = vpack.c.b16 %v1893, %v1892
      %v2092 = vpack.c.b16 %v1895, %v1894
      %v2093 = vpack.c.b16 %v1897, %v1896
      %v2094 = vpack.c.b16 %v1899, %v1898
      %v2095 = vpack.c.b16 %v1901, %v1900
      %v2096 = vpack.c.b16 %v1903, %v1902
      %v2097 = vpack.c.b16 %v1905, %v1904
      %v2098 = vpack.c.b16 %v1907, %v1906
      %v2099 = vpack.c.b16 %v1909, %v1908
      %v2100 = vpack.c.b16 %v1911, %v1910
      %v2101 = vpack.c.b16 %v1913, %v1912
      %v2102 = vpack.c.b16 %v1915, %v1914
      %v2103 = vpack.c.b16 %v1917, %v1916
      %v2104 = vpack.c.b16 %v1919, %v1918
      %v2105 = vpack.c.b16 %v1921, %v1920
      %v2106 = vpack.c.b16 %v1923, %v1922
      %v2107 = vpack.c.b16 %v1925, %v1924
      %v2108 = vpack.c.b16 %v1927, %v1926
      %v2109 = vpack.c.b16 %v1929, %v1928
      %v2110 = vpack.c.b16 %v1931, %v1930
      %v2111 = vpack.c.b16 %v1933, %v1932
      %v2112 = vpack.c.b16 %v1935, %v1934
      %v2113 = vpack.c.b16 %v1937, %v1936
      %v2114 = vpack.c.b16 %v1939, %v1938
      %v2115 = vpack.c.b16 %v1941, %v1940
      %v2116 = vpack.c.b16 %v1943, %v1942
      %v2117 = vpack.c.b16 %v1945, %v1944
      %v2118 = vpack.c.b16 %v1947, %v1946
      %v2119 = vpack.c.b16 %v1949, %v1948
      %v2120 = vpack.c.b16 %v1951, %v1950
      %v2121 = vpack.c.b16 %v1953, %v1952
      %v2122 = vpack.c.b16 %v1955, %v1954
      %v2123 = vpack.c.b16 %v1957, %v1956
      %v2124 = vpack.c.b16 %v1959, %v1958
      %v2125 = vpack.c.b16 %v1961, %v1960
      %v2126 = vpack.c.b16 %v1963, %v1962
      %v2127 = vpack.c.b16 %v1965, %v1964
      %v2128 = vpack.c.b16 %v1967, %v1966
      %v2129 = vpack.c.b16 %v1969, %v1968
      %v2130 = vpack.c.b16 %v1971, %v1970
      %v2131 = vpack.c.b16 %v1973, %v1972
      %v2132 = vpack.c.b16 %v1975, %v1974
      %v2133 = vpack.c.b16 %v1977, %v1976
      %v2134 = vpack.c.b16 %v1979, %v1978
      %v2135 = vpack.c.b16 %v1981, %v1980
      %v2136 = vpack.c.b16 %v1983, %v1982
      %v2137 = vpack.c.b16 %v1985, %v1984
      %v2138 = vpack.c.b16 %v1987, %v1986
      %v2139 = vpack.c.b16 %v1989, %v1988
      %v2140 = vpack.c.b16 %v1991, %v1990
      %v2141 = vpack.c.b16 %v1993, %v1992
      %v2142 = vpack.c.b16 %v1995, %v1994
      %v2143 = vpack.c.b16 %v1997, %v1996
      %v2144 = vpack.c.b16 %v1999, %v1998
      %v2145 = vpack.c.b16 %v2001, %v2000
      %v2146 = vpack.c.b16 %v2003, %v2002
      %v2147 = vpack.c.b16 %v2005, %v2004
      %v2148 = vpack.c.b16 %v2007, %v2006
      %v2149 = vpack.c.b16 %v2009, %v2008
      %v2150 = vpack.c.b16 %v2011, %v2010
      %v2151 = vpack.c.b16 %v2013, %v2012
      %v2152 = vpack.c.b16 %v2015, %v2014
      %v2153 = vpack.c.b16 %v2017, %v2016
      %v2154 = vpack.c.b16 %v2019, %v2018
      %v2155 = vpack.c.b16 %v2021, %v2020
      %v2156 = vpack.c.b16 %v2023, %v2022
      %v2157 = vpack.c.b16 %v2025, %v2024
      %v2158 = vpack.c.b16 %v2027, %v2026
      %v2159 = vpack.c.b16 %v2029, %v2028
      %v2160 = vpack.c.b16 %v2031, %v2030
      %v2161 = vpack.c.b16 %v2033, %v2032
      %v2162 = vpack.c.b16 %v2035, %v2034
      %v2163 = vpack.c.b16 %v2037, %v2036
      %v2164 = vpack.c.b16 %v2039, %v2038
      %v2165 = vpack.c.b16 %v2041, %v2040
      %v2166 = vpack.c.b16 %v2043, %v2042
      %v2167 = vpack.c.b16 %v2045, %v2044
      %v2168 = vpack.c.b16 %v2047, %v2046
      %v2169 = vpack.c.b16 %v2049, %v2048
      %v2170 = vpack.c.b16 %v2051, %v2050
      %v2171 = vpack.c.b16 %v2053, %v2052
      %v2172 = vpack.c.b16 %v2055, %v2054
      %v2173 = vpack.c.b16 %v2057, %v2056
      %v2174 = vpack.c.b16 %v2059, %v2058
      %v2175 = vpack.c.b16 %v2061, %v2060
      %v2176 = vpack.c.b16 %v2063, %v2062
      %v2177 = vpack.c.b16 %v2065, %v2064
      %v2178 = vpack.c.b16 %v2067, %v2066
      %v2179 = vpack.c.b16 %v2069, %v2068
      %v2180 = vpack.c.b16 %v2071, %v2070
      %v2181 = vpack.c.b16 %v2073, %v2072
      %v2182 = vpack.c.b16 %v2075, %v2074
      %v2183 = vpack.c.b16 %v2077, %v2076
      %v2184 = vpack.c.b16 %v2079, %v2078
      %v2185 = vpack.c.b16 %v2081, %v2080
      %v2186 = vpack.c.b16 %v2083, %v2082
      %v2187 = vpack.c.b16 %v2085, %v2084
      %v2188 = vpack.c.b16 %v2087, %v2086
      %v2189 = vpack.c.b16 %v2089, %v2088
      %v2291 = vsel %vm692, %v1677, 0
      %2293 = vmatprep.subr.bf16.mxu0 0
      %2294 = vmatpush1.bf16.msra.mxu0 %v2090
      %2295 = vmatprep.subr.bf16.mxu0 0
      %2296 = vmatpush1.bf16.msra.mxu0 %v2091
      %2297 = vmatprep.subr.bf16.mxu0 0
      %2298 = vmatpush1.bf16.msra.mxu0 %v2092
      %2299 = vmatprep.subr.bf16.mxu0 0
      %2300 = vmatpush1.bf16.msra.mxu0 %v2093
      %2301 = vmatprep.subr.bf16.mxu0 0
      %2302 = vmatpush1.bf16.msra.mxu0 %v2094
      %2303 = vmatprep.subr.bf16.mxu0 0
      %2304 = vmatpush1.bf16.msra.mxu0 %v2095
      %2305 = vmatprep.subr.bf16.mxu0 0
      %2306 = vmatpush1.bf16.msra.mxu0 %v2096
      %2307 = vmatprep.subr.bf16.mxu0 0
      %2308 = vmatpush1.bf16.msra.mxu0 %v2097
      %2309 = vmatprep.subr.bf16.mxu0 0
      %2310 = vmatpush1.bf16.msra.mxu0 %v2098
      %2311 = vmatprep.subr.bf16.mxu0 0
      %2312 = vmatpush1.bf16.msra.mxu0 %v2099
      %2313 = vmatprep.subr.bf16.mxu0 0
      %2314 = vmatpush1.bf16.msra.mxu0 %v2100
      %2315 = vmatprep.subr.bf16.mxu0 0
      %2316 = vmatpush1.bf16.msra.mxu0 %v2101
      %2317 = vmatprep.subr.bf16.mxu0 0
      %2318 = vmatpush1.bf16.msra.mxu0 %v2102
      %2319 = vmatprep.subr.bf16.mxu0 0
      %2320 = vmatpush1.bf16.msra.mxu0 %v2103
      %2321 = vmatprep.subr.bf16.mxu0 0
      %2322 = vmatpush1.bf16.msra.mxu0 %v2104
      %2323 = vmatprep.subr.bf16.mxu0 0
      %2324 = vmatpush1.bf16.msra.mxu0 %v2105
      %2325 = vmatprep.mubr.bf16.mxu0 %v1586
      %2326 = vmatmul.mubr.bf16.gmra.mrb[0].mxu0 %v1585
      %v2327 = vpop.f32.mrb[0].mxu0
      %v2328 = vadd.f32 0.0, %v2327
      %v2329 = vpop.f32.mrb[0].mxu0
      %v2330 = vpop.f32.mrb[0].mxu0
      %v2331 = vadd.f32 0.0, %v2330
      %v2332 = vpop.f32.mrb[0].mxu0
      %2333 = vdwg.mxu0
      %2334 = vmatprep.subr.bf16.mxu0 0
      %2335 = vmatpush1.bf16.msra.mxu0 %v2106
      %2336 = vmatprep.subr.bf16.mxu0 0
      %2337 = vmatpush1.bf16.msra.mxu0 %v2107
      %2338 = vmatprep.subr.bf16.mxu0 0
      %2339 = vmatpush1.bf16.msra.mxu0 %v2108
      %2340 = vmatprep.subr.bf16.mxu0 0
      %2341 = vmatpush1.bf16.msra.mxu0 %v2109
      %2342 = vmatprep.subr.bf16.mxu0 0
      %2343 = vmatpush1.bf16.msra.mxu0 %v2110
      %2344 = vmatprep.subr.bf16.mxu0 0
      %2345 = vmatpush1.bf16.msra.mxu0 %v2111
      %2346 = vmatprep.subr.bf16.mxu0 0
      %2347 = vmatpush1.bf16.msra.mxu0 %v2112
      %2348 = vmatprep.subr.bf16.mxu0 0
      %2349 = vmatpush1.bf16.msra.mxu0 %v2113
      %2350 = vmatprep.subr.bf16.mxu0 0
      %2351 = vmatpush1.bf16.msra.mxu0 %v2114
      %2352 = vmatprep.subr.bf16.mxu0 0
      %2353 = vmatpush1.bf16.msra.mxu0 %v2115
      %2354 = vmatprep.subr.bf16.mxu0 0
      %2355 = vmatpush1.bf16.msra.mxu0 %v2116
      %2356 = vmatprep.subr.bf16.mxu0 0
      %2357 = vmatpush1.bf16.msra.mxu0 %v2117
      %2358 = vmatprep.subr.bf16.mxu0 0
      %2359 = vmatpush1.bf16.msra.mxu0 %v2118
      %2360 = vmatprep.subr.bf16.mxu0 0
      %2361 = vmatpush1.bf16.msra.mxu0 %v2119
      %2362 = vmatprep.subr.bf16.mxu0 0
      %2363 = vmatpush1.bf16.msra.mxu0 %v2120
      %2364 = vmatprep.subr.bf16.mxu0 0
      %2365 = vmatpush1.bf16.msra.mxu0 %v2121
      %2366 = vmatprep.mubr.bf16.mxu0 %v1588
      %2367 = vmatmul.mubr.bf16.gmra.mrb[0].mxu0 %v1587
      %v2368 = vpop.f32.mrb[0].mxu0
      %v2369 = vadd.f32 %v2328, %v2368
      %v2370 = vpop.f32.mrb[0].mxu0
      %v2371 = vpop.f32.mrb[0].mxu0
      %v2372 = vadd.f32 %v2331, %v2371
      %v2373 = vpop.f32.mrb[0].mxu0
      %2374 = vdwg.mxu0
      %2375 = vmatprep.subr.bf16.mxu0 0
      %2376 = vmatpush1.bf16.msra.mxu0 %v2122
      %2377 = vmatprep.subr.bf16.mxu0 0
      %2378 = vmatpush1.bf16.msra.mxu0 %v2123
      %2379 = vmatprep.subr.bf16.mxu0 0
      %2380 = vmatpush1.bf16.msra.mxu0 %v2124
      %2381 = vmatprep.subr.bf16.mxu0 0
      %2382 = vmatpush1.bf16.msra.mxu0 %v2125
      %2383 = vmatprep.subr.bf16.mxu0 0
      %2384 = vmatpush1.bf16.msra.mxu0 %v2126
      %2385 = vmatprep.subr.bf16.mxu0 0
      %2386 = vmatpush1.bf16.msra.mxu0 %v2127
      %2387 = vmatprep.subr.bf16.mxu0 0
      %2388 = vmatpush1.bf16.msra.mxu0 %v2128
      %2389 = vmatprep.subr.bf16.mxu0 0
      %2390 = vmatpush1.bf16.msra.mxu0 %v2129
      %2391 = vmatprep.subr.bf16.mxu0 0
      %2392 = vmatpush1.bf16.msra.mxu0 %v2130
      %2393 = vmatprep.subr.bf16.mxu0 0
      %2394 = vmatpush1.bf16.msra.mxu0 %v2131
      %2395 = vmatprep.subr.bf16.mxu0 0
      %2396 = vmatpush1.bf16.msra.mxu0 %v2132
      %2397 = vmatprep.subr.bf16.mxu0 0
      %2398 = vmatpush1.bf16.msra.mxu0 %v2133
      %2399 = vmatprep.subr.bf16.mxu0 0
      %2400 = vmatpush1.bf16.msra.mxu0 %v2134
      %2401 = vmatprep.subr.bf16.mxu0 0
      %2402 = vmatpush1.bf16.msra.mxu0 %v2135
      %2403 = vmatprep.subr.bf16.mxu0 0
      %2404 = vmatpush1.bf16.msra.mxu0 %v2136
      %2405 = vmatprep.subr.bf16.mxu0 0
      %2406 = vmatpush1.bf16.msra.mxu0 %v2137
      %2407 = vmatprep.mubr.bf16.mxu0 %v1622
      %2408 = vmatmul.mubr.bf16.gmra.mrb[0].mxu0 %v1621
      %v2409 = vpop.f32.mrb[0].mxu0
      %v2410 = vadd.f32 %v2369, %v2409
      %v2411 = vpop.f32.mrb[0].mxu0
      %v2412 = vpop.f32.mrb[0].mxu0
      %v2413 = vadd.f32 %v2372, %v2412
      %v2414 = vpop.f32.mrb[0].mxu0
      %2415 = vdwg.mxu0
      %2416 = vmatprep.subr.bf16.mxu0 0
      %2417 = vmatpush1.bf16.msra.mxu0 %v2138
      %2418 = vmatprep.subr.bf16.mxu0 0
      %2419 = vmatpush1.bf16.msra.mxu0 %v2139
      %2420 = vmatprep.subr.bf16.mxu0 0
      %2421 = vmatpush1.bf16.msra.mxu0 %v2140
      %2422 = vmatprep.subr.bf16.mxu0 0
      %2423 = vmatpush1.bf16.msra.mxu0 %v2141
      %2424 = vmatprep.subr.bf16.mxu0 0
      %2425 = vmatpush1.bf16.msra.mxu0 %v2142
      %2426 = vmatprep.subr.bf16.mxu0 0
      %2427 = vmatpush1.bf16.msra.mxu0 %v2143
      %2428 = vmatprep.subr.bf16.mxu0 0
      %2429 = vmatpush1.bf16.msra.mxu0 %v2144
      %2430 = vmatprep.subr.bf16.mxu0 0
      %2431 = vmatpush1.bf16.msra.mxu0 %v2145
      %2432 = vmatprep.subr.bf16.mxu0 0
      %2433 = vmatpush1.bf16.msra.mxu0 %v2146
      %2434 = vmatprep.subr.bf16.mxu0 0
      %2435 = vmatpush1.bf16.msra.mxu0 %v2147
      %2436 = vmatprep.subr.bf16.mxu0 0
      %2437 = vmatpush1.bf16.msra.mxu0 %v2148
      %2438 = vmatprep.subr.bf16.mxu0 0
      %2439 = vmatpush1.bf16.msra.mxu0 %v2149
      %2440 = vmatprep.subr.bf16.mxu0 0
      %2441 = vmatpush1.bf16.msra.mxu0 %v2150
      %2442 = vmatprep.subr.bf16.mxu0 0
      %2443 = vmatpush1.bf16.msra.mxu0 %v2151
      %2444 = vmatprep.subr.bf16.mxu0 0
      %2445 = vmatpush1.bf16.msra.mxu0 %v2152
      %2446 = vmatprep.subr.bf16.mxu0 0
      %2447 = vmatpush1.bf16.msra.mxu0 %v2153
      %2448 = vmatprep.mubr.bf16.mxu0 %v1624
      %2449 = vmatmul.mubr.bf16.gmra.mrb[0].mxu0 %v1623
      %v2450 = vpop.f32.mrb[0].mxu0
      %v2451 = vadd.f32 %v2410, %v2450
      %v2452 = vpop.f32.mrb[0].mxu0
      %v2453 = vpop.f32.mrb[0].mxu0
      %v2454 = vadd.f32 %v2413, %v2453
      %v2455 = vpop.f32.mrb[0].mxu0
      %2456 = vdwg.mxu0
      %2457 = vmatprep.subr.bf16.mxu0 0
      %2458 = vmatpush1.bf16.msra.mxu0 %v2154
      %2459 = vmatprep.subr.bf16.mxu0 0
      %2460 = vmatpush1.bf16.msra.mxu0 %v2155
      %2461 = vmatprep.subr.bf16.mxu0 0
      %2462 = vmatpush1.bf16.msra.mxu0 %v2156
      %2463 = vmatprep.subr.bf16.mxu0 0
      %2464 = vmatpush1.bf16.msra.mxu0 %v2157
      %2465 = vmatprep.subr.bf16.mxu0 0
      %2466 = vmatpush1.bf16.msra.mxu0 %v2158
      %2467 = vmatprep.subr.bf16.mxu0 0
      %2468 = vmatpush1.bf16.msra.mxu0 %v2159
      %2469 = vmatprep.subr.bf16.mxu0 0
      %2470 = vmatpush1.bf16.msra.mxu0 %v2160
      %2471 = vmatprep.subr.bf16.mxu0 0
      %2472 = vmatpush1.bf16.msra.mxu0 %v2161
      %2473 = vmatprep.subr.bf16.mxu0 0
      %2474 = vmatpush1.bf16.msra.mxu0 %v2162
      %2475 = vmatprep.subr.bf16.mxu0 0
      %2476 = vmatpush1.bf16.msra.mxu0 %v2163
      %2477 = vmatprep.subr.bf16.mxu0 0
      %2478 = vmatpush1.bf16.msra.mxu0 %v2164
      %2479 = vmatprep.subr.bf16.mxu0 0
      %2480 = vmatpush1.bf16.msra.mxu0 %v2165
      %2481 = vmatprep.subr.bf16.mxu0 0
      %2482 = vmatpush1.bf16.msra.mxu0 %v2166
      %2483 = vmatprep.subr.bf16.mxu0 0
      %2484 = vmatpush1.bf16.msra.mxu0 %v2167
      %2485 = vmatprep.subr.bf16.mxu0 0
      %2486 = vmatpush1.bf16.msra.mxu0 %v2168
      %2487 = vmatprep.subr.bf16.mxu0 0
      %2488 = vmatpush1.bf16.msra.mxu0 %v2169
      %2489 = vmatprep.mubr.bf16.mxu0 %v1658
      %2490 = vmatmul.mubr.bf16.gmra.mrb[0].mxu0 %v1657
      %v2491 = vpop.f32.mrb[0].mxu0
      %v2492 = vadd.f32 %v2451, %v2491
      %v2493 = vpop.f32.mrb[0].mxu0
      %v2494 = vpop.f32.mrb[0].mxu0
      %v2495 = vadd.f32 %v2454, %v2494
      %v2496 = vpop.f32.mrb[0].mxu0
      %2497 = vdwg.mxu0
      %2498 = vmatprep.subr.bf16.mxu0 0
      %2499 = vmatpush1.bf16.msra.mxu0 %v2170
      %2500 = vmatprep.subr.bf16.mxu0 0
      %2501 = vmatpush1.bf16.msra.mxu0 %v2171
      %2502 = vmatprep.subr.bf16.mxu0 0
      %2503 = vmatpush1.bf16.msra.mxu0 %v2172
      %2504 = vmatprep.subr.bf16.mxu0 0
      %2505 = vmatpush1.bf16.msra.mxu0 %v2173
      %2506 = vmatprep.subr.bf16.mxu0 0
      %2507 = vmatpush1.bf16.msra.mxu0 %v2174
      %2508 = vmatprep.subr.bf16.mxu0 0
      %2509 = vmatpush1.bf16.msra.mxu0 %v2175
      %2510 = vmatprep.subr.bf16.mxu0 0
      %2511 = vmatpush1.bf16.msra.mxu0 %v2176
      %2512 = vmatprep.subr.bf16.mxu0 0
      %2513 = vmatpush1.bf16.msra.mxu0 %v2177
      %2514 = vmatprep.subr.bf16.mxu0 0
      %2515 = vmatpush1.bf16.msra.mxu0 %v2178
      %2516 = vmatprep.subr.bf16.mxu0 0
      %2517 = vmatpush1.bf16.msra.mxu0 %v2179
      %2518 = vmatprep.subr.bf16.mxu0 0
      %2519 = vmatpush1.bf16.msra.mxu0 %v2180
      %2520 = vmatprep.subr.bf16.mxu0 0
      %2521 = vmatpush1.bf16.msra.mxu0 %v2181
      %2522 = vmatprep.subr.bf16.mxu0 0
      %2523 = vmatpush1.bf16.msra.mxu0 %v2182
      %2524 = vmatprep.subr.bf16.mxu0 0
      %2525 = vmatpush1.bf16.msra.mxu0 %v2183
      %2526 = vmatprep.subr.bf16.mxu0 0
      %2527 = vmatpush1.bf16.msra.mxu0 %v2184
      %2528 = vmatprep.subr.bf16.mxu0 0
      %2529 = vmatpush1.bf16.msra.mxu0 %v2185
      %2530 = vmatprep.mubr.bf16.mxu0 %v1660
      %2531 = vmatmul.mubr.bf16.gmra.mrb[0].mxu0 %v1659
      %v2532 = vpop.f32.mrb[0].mxu0
      %v2533 = vadd.f32 %v2492, %v2532
      %v2534 = vpop.f32.mrb[0].mxu0
      %v2535 = vpop.f32.mrb[0].mxu0
      %v2536 = vadd.f32 %v2495, %v2535
      %v2537 = vpop.f32.mrb[0].mxu0
      %2538 = vdwg.mxu0
      %2539 = vmatprep.subr.bf16.mxu0 0
      %2540 = vmatpush1.bf16.msra.mxu0 %v2186
      %2541 = vmatprep.subr.bf16.mxu0 0
      %2542 = vmatpush1.bf16.msra.mxu0 %v2187
      %2543 = vmatprep.subr.bf16.mxu0 0
      %2544 = vmatpush1.bf16.msra.mxu0 %v2188
      %2545 = vmatprep.subr.bf16.mxu0 0
      %2546 = vmatpush1.bf16.msra.mxu0 %v2189
      %2547 = vmatprep.subr.bf16.mxu0 0
      %2548 = vmatpush1.bf16.msra.mxu0 0
      %2549 = vmatprep.subr.bf16.mxu0 0
      %2550 = vmatpush1.bf16.msra.mxu0 0
      %2551 = vmatprep.subr.bf16.mxu0 0
      %2552 = vmatpush1.bf16.msra.mxu0 0
      %2553 = vmatprep.subr.bf16.mxu0 0
      %2554 = vmatpush1.bf16.msra.mxu0 0
      %2555 = vmatprep.subr.bf16.mxu0 0
      %2556 = vmatpush1.bf16.msra.mxu0 0
      %2557 = vmatprep.subr.bf16.mxu0 0
      %2558 = vmatpush1.bf16.msra.mxu0 0
      %2559 = vmatprep.subr.bf16.mxu0 0
      %2560 = vmatpush1.bf16.msra.mxu0 0
      %2561 = vmatprep.subr.bf16.mxu0 0
      %2562 = vmatpush1.bf16.msra.mxu0 0
      %2563 = vmatprep.subr.bf16.mxu0 0
      %2564 = vmatpush1.bf16.msra.mxu0 0
      %2565 = vmatprep.subr.bf16.mxu0 0
      %2566 = vmatpush1.bf16.msra.mxu0 0
      %2567 = vmatprep.subr.bf16.mxu0 0
      %2568 = vmatpush1.bf16.msra.mxu0 0
      %2569 = vmatprep.subr.bf16.mxu0 0
      %2570 = vmatpush1.bf16.msra.mxu0 0
      %2571 = vmatprep.mubr.bf16.mxu0 0
      %2572 = vmatmul.mubr.bf16.gmra.mrb[0].mxu0 %v2291
      %v2573 = vpop.f32.mrb[0].mxu0
      %v2574 = vadd.f32 %v2533, %v2573
      %v2575 = vpop.f32.mrb[0].mxu0
      %v2576 = vpop.f32.mrb[0].mxu0
      %v2577 = vadd.f32 %v2536, %v2576
      %v2578 = vpop.f32.mrb[0].mxu0
      %2579 = vdwg.mxu0
      %v2580 = vpack.c.bf16 %v2577, %v2574
      %v2582 = vunpack.c.l.b16 %v2580
      %v2583 = vunpack.c.h.b16 %v2580
      %v2584 = vpack.c.b16 %v2582, %v2582
      %v2585 = vpack.c.b16 %v2583, %v2583
      %vm2588 = vcmask 519168
      %2589 = vst.msk [vmem:[%s177] sm:$0xf] %vm2588, %v2584
      %2590 = vst.msk [vmem:[%s177 + $0x4] sm:$0xf] %vm2588, %v2585
      %v2591 = vsel %vm692, %v2574, 0.0
      %v2592 = vsel %vm692, %v2577, 0.0
      %v2593 = vadd.f32 %v2591, %v2592
      %v2594 = vrot.slane %v2593, 4
      %v2595 = vadd.f32 %v2593, %v2594
      %v2596 = vrot.slane %v2595, 2
      %v2597 = vadd.f32 %v2595, %v2596
      %v2598 = vrot.slane %v2597, 1
      %v2599 = vadd.f32 %v2597, %v2598
      %v2600 = vmul.f32 %v2574, %v2574
      %v2601 = vmul.f32 %v2577, %v2577
      %v2602 = vsel %vm692, %v2600, 0.0
      %v2603 = vsel %vm692, %v2601, 0.0
      %v2604 = vadd.f32 %v2602, %v2603
      %v2605 = vrot.slane %v2604, 4
      %v2606 = vadd.f32 %v2604, %v2605
      %v2607 = vrot.slane %v2606, 2
      %v2608 = vadd.f32 %v2606, %v2607
      %v2609 = vrot.slane %v2608, 1
      %v2610 = vadd.f32 %v2608, %v2609
      %vm2611 = vcmask 1040384
      %v2612 = vsel %vm2611, %v2599, %v2610
      %vm2613 = vcmask 517120
      %2614 = vst.msk [vmem:[%s181] sm:$0x3] %vm2613, %v2612
      %p2615 = scmp.lt.s32.totalorder %s15, 1
      %s2616 = scalar_select %p2615, %s15, 1
      %s2617 = smul.addr %s2616, 2
      %s2618 = smul.addr %s2617, 4
      %s2619 = scalar_lea.vmem %s2, %s2618
      %p2620 = scmp.lt.s32.totalorder %s15, 1
      %s2621 = scalar_select %p2620, %s15, 1
      %s2622 = smul.addr %s2621, 2
      %s2623 = scalar_lea.vmem %s3, %s2622
      // Predicated region
      $region29: #{basic_block_forward.9} parent=27 // pred_check
        %p2624 = pneg %p80
      $region30: #{basic_block_forward.9} parent=27 // pred_check_branch
        %2626 = sbr.rel (%p2624) target = $region32
      $region31: #{basic_block_forward.9} parent=27 // pred_region
        _
      $region32: #{basic_block_forward.9} parent=27 // pred_fallthru
        _
      // Predicated region
      $region33: #{basic_block_forward.9} parent=27 // pred_check
        %p2627 = pneg %p106
      $region34: #{basic_block_forward.9} parent=27 // pred_check_branch
        %2629 = sbr.rel (%p2627) target = $region36
      $region35: #{basic_block_forward.9} parent=27 // pred_region
        _
      $region36: #{basic_block_forward.9} parent=27 // pred_fallthru
        _
    $region28: #{basic_block_forward.9} parent=5 // pred_fallthru
      _
    %p2630 = scmp.le.s32.totalorder 2, %s10
    // Predicated region
    $region37: #{basic_block_forward.9} parent=5 // pred_check
      %p2631 = pneg %p2630
    $region38: #{basic_block_forward.9} parent=5 // pred_check_branch
      %2633 = sbr.rel (%p2631) target = $region40
    $region39: #{basic_block_forward.9} parent=5 // pred_region
      %s2634 = ssub.s32 %s10, 2
      // Predicated region
      $region41: #{basic_block_forward.9} parent=39 // pred_check
        %p2635 = pneg %p86
      $region42: #{basic_block_forward.9} parent=39 // pred_check_branch
        %2637 = sbr.rel (%p2635) target = $region44
      $region43: #{basic_block_forward.9} parent=39 // pred_region
        %p2638 = scmp.lt.s32.totalorder %s16, 1
        %s2639 = scalar_select %p2638, %s16, 1
        %s2640 = smul.addr %s2639, 2
        %s2641 = smul.addr %s2640, 4
        %s2642 = scalar_lea.vmem %s2, %s2641
      $region44: #{basic_block_forward.9} parent=39 // pred_fallthru
        _
      // Predicated region
      $region45: #{basic_block_forward.9} parent=39 // pred_check
        %p2643 = pneg %p112
      $region46: #{basic_block_forward.9} parent=39 // pred_check_branch
        %2645 = sbr.rel (%p2643) target = $region48
      $region47: #{basic_block_forward.9} parent=39 // pred_region
        %p2646 = scmp.lt.s32.totalorder %s16, 1
        %s2647 = scalar_select %p2646, %s16, 1
        %s2648 = smul.addr %s2647, 2
        %s2649 = scalar_lea.vmem %s3, %s2648
      $region48: #{basic_block_forward.9} parent=39 // pred_fallthru
        _
    $region40: #{basic_block_forward.9} parent=5 // pred_fallthru
      _
  $region6: #{basic_block_forward.9} parent=0 // loop_footer
    %s14 = sadd.s32 1, %s10
  $region7: #{basic_block_forward.9} parent=0 // loop_footer_branch
    %9 = sbr.rel target = $region3
  $region8: #{basic_block_forward.9} parent=0 // loop_exit
    _

</llo_original>
